<compile_context>
chip_gen: v6e
topology: v6e:2x2x1
jax: 0.10.0
libtpu: 0.0.40
codegen_flags: <defaults>
</compile_context>

<pallas_src>
import functools

import jax
import jax.numpy as jnp
import numpy as np
from jax.experimental import pallas as pl
from jax.experimental.pallas import tpu as pltpu

EPS = 1e-5


# --------------------------------------------------------------------------
# Fused kernel: the whole op in a single grid step.
# --------------------------------------------------------------------------
def ss_fused_kernel(x_ref, mask_ref, rw_ref, rb_ref, wbig_ref, bias_ref, o_ref,
                    *, shifts, n, T, C2, HW):
    prec = jax.lax.Precision.HIGHEST
    f32 = jnp.float32
    M = n * C2

    # ---- background channels pass straight through (in-VMEM copy; removes the
    #      wrapper concat and its extra HBM round trip).
    for nb in range(n):
        for t in range(T):
            o_ref[nb, t, C2:, :] = x_ref[nb, t, C2:, :]

    # ---- SpatialReinforcement conv rows for ALL batches, computed ONCE.
    # Temporal sums per batch (the 1/T mean scale is folded into rw), stacked
    # along sublanes so the 9 im2col taps (roll + boundary mask) are built once
    # for all batches.
    sums = []
    for nb in range(n):
        acc = x_ref[nb, 0, 0:C2, :]
        for t in range(1, T):
            acc = acc + x_ref[nb, t, 0:C2, :]
        sums.append(acc)                                   # (C2, HW)
    xm = jnp.concatenate(sums, axis=0)                     # (M, HW)

    taps = []
    for k in range(9):
        sh = shifts[k]
        if sh == 0:                       # centre tap: no roll, mask is all-ones
            taps.append(xm)
        else:
            taps.append(pltpu.roll(xm, shift=sh, axis=1) * mask_ref[k:k + 1])

    rw = rw_ref[...]                                       # (C2, 9*C2), /T folded
    rb = rb_ref[...]                                       # (C2, 1)
    convs = []
    for nb in range(n):
        patches = jnp.concatenate(
            [tp[nb * C2:(nb + 1) * C2] for tp in taps], axis=0)   # (9*C2, HW)
        convs.append(jnp.dot(rw, patches, precision=prec,
                             preferred_element_type=f32) + rb)    # (C2, HW)
    conv_rows = jnp.concatenate(convs, axis=0)             # (M, HW)

    # ---- temporal depthwise conv + BN + SR subtraction + 1x1x1 fusion conv,
    #      collapsed into ONE banded matmul per batch element:
    #      out_flat = W_big @ [x_flat ; conv_rows] + bias.
    wbig = wbig_ref[...]                                   # (T*C2, T*C2 + M)
    bias = jnp.broadcast_to(bias_ref[...], (T * C2, HW))   # hoisted broadcast
    for nb in range(n):
        off = (nb * C2 * T) % M        # repeat().view() batch rotation (0 here)
        cr = conv_rows if off == 0 else pltpu.roll(conv_rows,
                                                   shift=(M - off) % M, axis=0)
        rhs = jnp.concatenate(
            [x_ref[nb, t, 0:C2, :] for t in range(T)] + [cr], axis=0)  # (T*C2+M, HW)
        out = jnp.dot(wbig, rhs, precision=prec,
                      preferred_element_type=f32) + bias   # (T*C2, HW)
        for t in range(T):
            o_ref[nb, t, 0:C2, :] = out[t * C2:(t + 1) * C2, :]


# --------------------------------------------------------------------------
# Parameter folding (wrapper-side, constant-folded under jit).
# --------------------------------------------------------------------------
def _fold_params(p, n, T, C2, H, W):
    HW = H * W
    M = n * C2
    TC = T * C2

    # BN folded into the depthwise temporal conv.
    s = p["bn_gamma"] / jnp.sqrt(p["bn_var"] + EPS)
    b_sh = p["bn_beta"] - p["bn_mean"] * s
    tw = p["temporal_w"].reshape(C2, 3)
    w0f = s * tw[:, 0]
    w1f = s * tw[:, 1]
    w2f = s * tw[:, 2]
    tbf = s * p["temporal_b"] + b_sh                        # (C2,)

    # 1x1x1 fusion conv split into its temporal / spatial halves and folded.
    fw = p["fusion_w"].reshape(C2, 2 * C2)
    fwt, fws = fw[:, :C2], fw[:, C2:]
    a0 = fwt * w0f[None, :]
    a1 = fwt * w1f[None, :] + fws
    a2 = fwt * w2f[None, :]
    bias = fwt @ tbf[:, None] + p["fusion_b"][:, None]      # (C2, 1)
    bias_big = jnp.tile(bias, (T, 1))                       # (T*C2, 1)

    # repeat((T,1,1,1,1)).view(n,C2,T,h,w) scramble as SR-subtraction columns,
    # pre-multiplied by the spatial half of the fusion weights.
    sel = np.zeros((T, C2, M), np.float32)
    for t in range(T):
        for cp in range(C2):
            sel[t, cp, (cp * T + t) % M] += 1.0
    g = jnp.einsum("oc,tcm->tom", fws, jnp.asarray(sel))    # (T, C2, M)

    # Banded fused weight: block-tridiagonal temporal band + (-G) SR columns.
    zero = jnp.zeros((C2, C2), jnp.float32)
    band_rows = []
    for t in range(T):
        blocks = []
        for tp in range(T):
            if tp == t:
                blocks.append(a1)
            elif tp == t - 1:
                blocks.append(a0)
            elif tp == t + 1:
                blocks.append(a2)
            else:
                blocks.append(zero)
        blocks.append(-g[t])                                # (C2, M)
        band_rows.append(jnp.concatenate(blocks, axis=1))   # (C2, TC + M)
    wbig = jnp.concatenate(band_rows, axis=0)               # (TC, TC + M)

    # 3x3 reinforcement conv as im2col; 1/T temporal-mean scale folded in.
    rw_r = jnp.transpose(p["reinf_w"], (0, 2, 3, 1)).reshape(C2, 9 * C2) / T
    rb = p["reinf_b"][:, None]                              # (C2, 1)

    # Per-tap lane shifts + image-boundary masks on the flattened H*W axis.
    hh = np.arange(HW) // W
    ww = np.arange(HW) % W
    masks = np.zeros((9, HW), np.float32)
    shifts = []
    for a in range(3):
        for b in range(3):
            dh, dw = a - 1, b - 1
            ok = (hh + dh >= 0) & (hh + dh < H) & (ww + dw >= 0) & (ww + dw < W)
            masks[a * 3 + b] = ok.astype(np.float32)
            shifts.append((-(dh * W + dw)) % HW)

    arrays = dict(mask9=jnp.asarray(masks), rw=rw_r, rb=rb,
                  wbig=wbig, bias=bias_big)
    return arrays, tuple(shifts)


def _const_spec(a):
    nd = a.ndim
    return pl.BlockSpec(a.shape, lambda i, _nd=nd: (0,) * _nd)


# --------------------------------------------------------------------------
# SS forward (Pallas) and pure-JAX reference
# --------------------------------------------------------------------------
def ss_forward(x, p, n_segment=8, n_div=8):
    nt, c, H, W = x.shape
    T = n_segment
    n = nt // T
    fold = c // n_div
    C2 = 2 * fold
    HW = H * W

    fp, shifts = _fold_params(p, n, T, C2, H, W)
    x_r = x.reshape(n, T, c, HW)               # free view of the NCHW input

    kernel = functools.partial(ss_fused_kernel, shifts=shifts,
                               n=n, T=T, C2=C2, HW=HW)

    grid_spec = pltpu.PrefetchScalarGridSpec(
        num_scalar_prefetch=0,
        grid=(1,),
        in_specs=[pl.BlockSpec((n, T, c, HW), lambda i: (0, 0, 0, 0)),
                  _const_spec(fp["mask9"]), _const_spec(fp["rw"]),
                  _const_spec(fp["rb"]), _const_spec(fp["wbig"]),
                  _const_spec(fp["bias"])],
        out_specs=pl.BlockSpec((n, T, c, HW), lambda i: (0, 0, 0, 0)))

    out = pl.pallas_call(
        kernel,
        out_shape=jax.ShapeDtypeStruct((n, T, c, HW), jnp.float32),
        grid_spec=grid_spec,
        compiler_params=pltpu.CompilerParams(
            dimension_semantics=("arbitrary",)),
    )(x_r, fp["mask9"], fp["rw"], fp["rb"], fp["wbig"], fp["bias"])

    return out.reshape(nt, c, H, W)


def ss_reference(x, p, n_segment=8, n_div=8):
    nt, c, H, W = x.shape
    T = n_segment
    n = nt // T
    fold = c // n_div
    C2 = 2 * fold

    xr = jnp.transpose(x.reshape(n, T, c, H, W), (0, 2, 1, 3, 4))
    fg = xr[:, :C2]
    bg = xr[:, C2:]

    tw = p["temporal_w"].reshape(C2, 3)
    xp = jnp.pad(fg, ((0, 0), (0, 0), (1, 1), (0, 0), (0, 0)))
    te = (tw[:, 0][None, :, None, None, None] * xp[:, :, 0:T]
          + tw[:, 1][None, :, None, None, None] * xp[:, :, 1:T + 1]
          + tw[:, 2][None, :, None, None, None] * xp[:, :, 2:T + 2]
          + p["temporal_b"][None, :, None, None, None])
    scale = p["bn_gamma"] / jnp.sqrt(p["bn_var"] + EPS)
    shift = p["bn_beta"] - p["bn_mean"] * scale
    te = te * scale[None, :, None, None, None] + shift[None, :, None, None, None]

    xm = fg.mean(axis=2)
    conv = jax.lax.conv_general_dilated(
        xm, p["reinf_w"], window_strides=(1, 1), padding=((1, 1), (1, 1)),
        dimension_numbers=("NCHW", "OIHW", "NCHW"))
    conv = conv + p["reinf_b"][None, :, None, None]
    mrep = jnp.tile(conv, (T, 1, 1, 1, 1)).reshape(n, C2, T, H, W)
    se = fg - mrep

    cat = jnp.concatenate([te, se], axis=1)
    fw = p["fusion_w"].reshape(C2, 2 * C2)
    fo = jnp.einsum("oc,ncthw->nothw", fw, cat) + p["fusion_b"][None, :, None, None, None]

    out = jnp.concatenate([fo, bg], axis=1)
    return jnp.transpose(out, (0, 2, 1, 3, 4)).reshape(nt, c, H, W)


if __name__ == "__main__":
    in_channels = 32
    n_segment = 8
    n_div = 8
    n_batch = 2
    H = W = 16
    nt = n_batch * n_segment
    fold = in_channels // n_div
    C2 = 2 * fold

    key = jax.random.PRNGKey(0)
    ks = jax.random.split(key, 12)
    x = jax.random.normal(ks[0], (nt, in_channels, H, W), jnp.float32)

    params = {
        "temporal_w": 0.2 * jax.random.normal(ks[1], (C2, 1, 3, 1, 1), jnp.float32),
        "temporal_b": 0.1 * jax.random.normal(ks[2], (C2,), jnp.float32),
        "bn_gamma": jax.random.uniform(ks[3], (C2,), jnp.float32, 0.5, 1.5),
        "bn_beta": 0.1 * jax.random.normal(ks[4], (C2,), jnp.float32),
        "bn_mean": 0.1 * jax.random.normal(ks[5], (C2,), jnp.float32),
        "bn_var": jax.random.uniform(ks[6], (C2,), jnp.float32, 0.5, 1.5),
        "reinf_w": 0.1 * jax.random.normal(ks[7], (C2, C2, 3, 3), jnp.float32),
        "reinf_b": 0.1 * jax.random.normal(ks[8], (C2,), jnp.float32),
        "fusion_w": 0.1 * jax.random.normal(ks[9], (C2, 2 * C2, 1, 1, 1), jnp.float32),
        "fusion_b": 0.1 * jax.random.normal(ks[10], (C2,), jnp.float32),
    }

    fwd = jax.jit(functools.partial(ss_forward, n_segment=n_segment, n_div=n_div))
    out = jax.block_until_ready(fwd(x, params))

    ref = jax.block_until_ready(
        ss_reference(x, params, n_segment=n_segment, n_div=n_div))

    if not np.allclose(np.asarray(out), np.asarray(ref), rtol=2e-4, atol=2e-4):
        max_err = float(np.max(np.abs(np.asarray(out) - np.asarray(ref))))
        raise AssertionError(f"Pallas output mismatch vs reference, max err = {max_err}")

    print("KERNEL_OK")
</pallas_src>

<mosaic_0001>
module attributes {stable_mosaic.version = 11 : i64} {
  func.func @ss_fused_kernel(%arg0: i32, %arg1: memref<2x8x32x256xf32, #tpu.memory_space<vmem>>, %arg2: memref<9x256xf32, #tpu.memory_space<vmem>>, %arg3: memref<8x72xf32, #tpu.memory_space<vmem>>, %arg4: memref<8x1xf32, #tpu.memory_space<vmem>>, %arg5: memref<64x80xf32, #tpu.memory_space<vmem>>, %arg6: memref<64x1xf32, #tpu.memory_space<vmem>>, %arg7: memref<2x8x32x256xf32, #tpu.memory_space<vmem>>) attributes {dimension_semantics = [#tpu.dimension_semantics<arbitrary>], iteration_bounds = array<i64: 1>, scalar_prefetch = 0 : i64, scratch_operands = 0 : i64, tpu.core_type = #tpu.core_type<tc>, window_params = [{pipeline_mode = #tpu.pipeline_mode<synchronous>, transform_indices = @transform_0, window_bounds = array<i64: 2, 8, 32, 256>}, {pipeline_mode = #tpu.pipeline_mode<synchronous>, transform_indices = @transform_1, window_bounds = array<i64: 9, 256>}, {pipeline_mode = #tpu.pipeline_mode<synchronous>, transform_indices = @transform_2, window_bounds = array<i64: 8, 72>}, {pipeline_mode = #tpu.pipeline_mode<synchronous>, transform_indices = @transform_3, window_bounds = array<i64: 8, 1>}, {pipeline_mode = #tpu.pipeline_mode<synchronous>, transform_indices = @transform_4, window_bounds = array<i64: 64, 80>}, {pipeline_mode = #tpu.pipeline_mode<synchronous>, transform_indices = @transform_5, window_bounds = array<i64: 64, 1>}, {pipeline_mode = #tpu.pipeline_mode<synchronous>, transform_indices = @transform_6, window_bounds = array<i64: 2, 8, 32, 256>}]} {
    %c0 = arith.constant 0 : index
    %c0_0 = arith.constant 0 : index
    %c8 = arith.constant 8 : index
    %c0_1 = arith.constant 0 : index
    %0 = vector.load %arg1[%c0, %c0_0, %c8, %c0_1] : memref<2x8x32x256xf32, #tpu.memory_space<vmem>>, vector<1x1x24x256xf32>
    %1 = vector.shape_cast %0 : vector<1x1x24x256xf32> to vector<24x256xf32>
    %c0_2 = arith.constant 0 : index
    %c0_3 = arith.constant 0 : index
    %c8_4 = arith.constant 8 : index
    %c0_5 = arith.constant 0 : index
    %2 = vector.load %arg7[%c0_2, %c0_3, %c8_4, %c0_5] : memref<2x8x32x256xf32, #tpu.memory_space<vmem>>, vector<1x1x24x256xf32>
    %3 = vector.shape_cast %2 : vector<1x1x24x256xf32> to vector<24x256xf32>
    %4 = vector.shape_cast %1 : vector<24x256xf32> to vector<1x1x24x256xf32>
    tpu.vector_store %arg7[%c0_2, %c0_3, %c8_4, %c0_5], %4 {strides = array<i32>} : memref<2x8x32x256xf32, #tpu.memory_space<vmem>>, vector<1x1x24x256xf32>,
    %c0_6 = arith.constant 0 : index
    %c1 = arith.constant 1 : index
    %c8_7 = arith.constant 8 : index
    %c0_8 = arith.constant 0 : index
    %5 = vector.load %arg1[%c0_6, %c1, %c8_7, %c0_8] : memref<2x8x32x256xf32, #tpu.memory_space<vmem>>, vector<1x1x24x256xf32>
    %6 = vector.shape_cast %5 : vector<1x1x24x256xf32> to vector<24x256xf32>
    %c0_9 = arith.constant 0 : index
    %c1_10 = arith.constant 1 : index
    %c8_11 = arith.constant 8 : index
    %c0_12 = arith.constant 0 : index
    %7 = vector.load %arg7[%c0_9, %c1_10, %c8_11, %c0_12] : memref<2x8x32x256xf32, #tpu.memory_space<vmem>>, vector<1x1x24x256xf32>
    %8 = vector.shape_cast %7 : vector<1x1x24x256xf32> to vector<24x256xf32>
    %9 = vector.shape_cast %6 : vector<24x256xf32> to vector<1x1x24x256xf32>
    tpu.vector_store %arg7[%c0_9, %c1_10, %c8_11, %c0_12], %9 {strides = array<i32>} : memref<2x8x32x256xf32, #tpu.memory_space<vmem>>, vector<1x1x24x256xf32>,
    %c0_13 = arith.constant 0 : index
    %c2 = arith.constant 2 : index
    %c8_14 = arith.constant 8 : index
    %c0_15 = arith.constant 0 : index
    %10 = vector.load %arg1[%c0_13, %c2, %c8_14, %c0_15] : memref<2x8x32x256xf32, #tpu.memory_space<vmem>>, vector<1x1x24x256xf32>
    %11 = vector.shape_cast %10 : vector<1x1x24x256xf32> to vector<24x256xf32>
    %c0_16 = arith.constant 0 : index
    %c2_17 = arith.constant 2 : index
    %c8_18 = arith.constant 8 : index
    %c0_19 = arith.constant 0 : index
    %12 = vector.load %arg7[%c0_16, %c2_17, %c8_18, %c0_19] : memref<2x8x32x256xf32, #tpu.memory_space<vmem>>, vector<1x1x24x256xf32>
    %13 = vector.shape_cast %12 : vector<1x1x24x256xf32> to vector<24x256xf32>
    %14 = vector.shape_cast %11 : vector<24x256xf32> to vector<1x1x24x256xf32>
    tpu.vector_store %arg7[%c0_16, %c2_17, %c8_18, %c0_19], %14 {strides = array<i32>} : memref<2x8x32x256xf32, #tpu.memory_space<vmem>>, vector<1x1x24x256xf32>,
    %c0_20 = arith.constant 0 : index
    %c3 = arith.constant 3 : index
    %c8_21 = arith.constant 8 : index
    %c0_22 = arith.constant 0 : index
    %15 = vector.load %arg1[%c0_20, %c3, %c8_21, %c0_22] : memref<2x8x32x256xf32, #tpu.memory_space<vmem>>, vector<1x1x24x256xf32>
    %16 = vector.shape_cast %15 : vector<1x1x24x256xf32> to vector<24x256xf32>
    %c0_23 = arith.constant 0 : index
    %c3_24 = arith.constant 3 : index
    %c8_25 = arith.constant 8 : index
    %c0_26 = arith.constant 0 : index
    %17 = vector.load %arg7[%c0_23, %c3_24, %c8_25, %c0_26] : memref<2x8x32x256xf32, #tpu.memory_space<vmem>>, vector<1x1x24x256xf32>
    %18 = vector.shape_cast %17 : vector<1x1x24x256xf32> to vector<24x256xf32>
    %19 = vector.shape_cast %16 : vector<24x256xf32> to vector<1x1x24x256xf32>
    tpu.vector_store %arg7[%c0_23, %c3_24, %c8_25, %c0_26], %19 {strides = array<i32>} : memref<2x8x32x256xf32, #tpu.memory_space<vmem>>, vector<1x1x24x256xf32>,
    %c0_27 = arith.constant 0 : index
    %c4 = arith.constant 4 : index
    %c8_28 = arith.constant 8 : index
    %c0_29 = arith.constant 0 : index
    %20 = vector.load %arg1[%c0_27, %c4, %c8_28, %c0_29] : memref<2x8x32x256xf32, #tpu.memory_space<vmem>>, vector<1x1x24x256xf32>
    %21 = vector.shape_cast %20 : vector<1x1x24x256xf32> to vector<24x256xf32>
    %c0_30 = arith.constant 0 : index
    %c4_31 = arith.constant 4 : index
    %c8_32 = arith.constant 8 : index
    %c0_33 = arith.constant 0 : index
    %22 = vector.load %arg7[%c0_30, %c4_31, %c8_32, %c0_33] : memref<2x8x32x256xf32, #tpu.memory_space<vmem>>, vector<1x1x24x256xf32>
    %23 = vector.shape_cast %22 : vector<1x1x24x256xf32> to vector<24x256xf32>
    %24 = vector.shape_cast %21 : vector<24x256xf32> to vector<1x1x24x256xf32>
    tpu.vector_store %arg7[%c0_30, %c4_31, %c8_32, %c0_33], %24 {strides = array<i32>} : memref<2x8x32x256xf32, #tpu.memory_space<vmem>>, vector<1x1x24x256xf32>,
    %c0_34 = arith.constant 0 : index
    %c5 = arith.constant 5 : index
    %c8_35 = arith.constant 8 : index
    %c0_36 = arith.constant 0 : index
    %25 = vector.load %arg1[%c0_34, %c5, %c8_35, %c0_36] : memref<2x8x32x256xf32, #tpu.memory_space<vmem>>, vector<1x1x24x256xf32>
    %26 = vector.shape_cast %25 : vector<1x1x24x256xf32> to vector<24x256xf32>
    %c0_37 = arith.constant 0 : index
    %c5_38 = arith.constant 5 : index
    %c8_39 = arith.constant 8 : index
    %c0_40 = arith.constant 0 : index
    %27 = vector.load %arg7[%c0_37, %c5_38, %c8_39, %c0_40] : memref<2x8x32x256xf32, #tpu.memory_space<vmem>>, vector<1x1x24x256xf32>
    %28 = vector.shape_cast %27 : vector<1x1x24x256xf32> to vector<24x256xf32>
    %29 = vector.shape_cast %26 : vector<24x256xf32> to vector<1x1x24x256xf32>
    tpu.vector_store %arg7[%c0_37, %c5_38, %c8_39, %c0_40], %29 {strides = array<i32>} : memref<2x8x32x256xf32, #tpu.memory_space<vmem>>, vector<1x1x24x256xf32>,
    %c0_41 = arith.constant 0 : index
    %c6 = arith.constant 6 : index
    %c8_42 = arith.constant 8 : index
    %c0_43 = arith.constant 0 : index
    %30 = vector.load %arg1[%c0_41, %c6, %c8_42, %c0_43] : memref<2x8x32x256xf32, #tpu.memory_space<vmem>>, vector<1x1x24x256xf32>
    %31 = vector.shape_cast %30 : vector<1x1x24x256xf32> to vector<24x256xf32>
    %c0_44 = arith.constant 0 : index
    %c6_45 = arith.constant 6 : index
    %c8_46 = arith.constant 8 : index
    %c0_47 = arith.constant 0 : index
    %32 = vector.load %arg7[%c0_44, %c6_45, %c8_46, %c0_47] : memref<2x8x32x256xf32, #tpu.memory_space<vmem>>, vector<1x1x24x256xf32>
    %33 = vector.shape_cast %32 : vector<1x1x24x256xf32> to vector<24x256xf32>
    %34 = vector.shape_cast %31 : vector<24x256xf32> to vector<1x1x24x256xf32>
    tpu.vector_store %arg7[%c0_44, %c6_45, %c8_46, %c0_47], %34 {strides = array<i32>} : memref<2x8x32x256xf32, #tpu.memory_space<vmem>>, vector<1x1x24x256xf32>,
    %c0_48 = arith.constant 0 : index
    %c7 = arith.constant 7 : index
    %c8_49 = arith.constant 8 : index
    %c0_50 = arith.constant 0 : index
    %35 = vector.load %arg1[%c0_48, %c7, %c8_49, %c0_50] : memref<2x8x32x256xf32, #tpu.memory_space<vmem>>, vector<1x1x24x256xf32>
    %36 = vector.shape_cast %35 : vector<1x1x24x256xf32> to vector<24x256xf32>
    %c0_51 = arith.constant 0 : index
    %c7_52 = arith.constant 7 : index
    %c8_53 = arith.constant 8 : index
    %c0_54 = arith.constant 0 : index
    %37 = vector.load %arg7[%c0_51, %c7_52, %c8_53, %c0_54] : memref<2x8x32x256xf32, #tpu.memory_space<vmem>>, vector<1x1x24x256xf32>
    %38 = vector.shape_cast %37 : vector<1x1x24x256xf32> to vector<24x256xf32>
    %39 = vector.shape_cast %36 : vector<24x256xf32> to vector<1x1x24x256xf32>
    tpu.vector_store %arg7[%c0_51, %c7_52, %c8_53, %c0_54], %39 {strides = array<i32>} : memref<2x8x32x256xf32, #tpu.memory_space<vmem>>, vector<1x1x24x256xf32>,
    %c1_55 = arith.constant 1 : index
    %c0_56 = arith.constant 0 : index
    %c8_57 = arith.constant 8 : index
    %c0_58 = arith.constant 0 : index
    %40 = vector.load %arg1[%c1_55, %c0_56, %c8_57, %c0_58] : memref<2x8x32x256xf32, #tpu.memory_space<vmem>>, vector<1x1x24x256xf32>
    %41 = vector.shape_cast %40 : vector<1x1x24x256xf32> to vector<24x256xf32>
    %c1_59 = arith.constant 1 : index
    %c0_60 = arith.constant 0 : index
    %c8_61 = arith.constant 8 : index
    %c0_62 = arith.constant 0 : index
    %42 = vector.load %arg7[%c1_59, %c0_60, %c8_61, %c0_62] : memref<2x8x32x256xf32, #tpu.memory_space<vmem>>, vector<1x1x24x256xf32>
    %43 = vector.shape_cast %42 : vector<1x1x24x256xf32> to vector<24x256xf32>
    %44 = vector.shape_cast %41 : vector<24x256xf32> to vector<1x1x24x256xf32>
    tpu.vector_store %arg7[%c1_59, %c0_60, %c8_61, %c0_62], %44 {strides = array<i32>} : memref<2x8x32x256xf32, #tpu.memory_space<vmem>>, vector<1x1x24x256xf32>,
    %c1_63 = arith.constant 1 : index
    %c1_64 = arith.constant 1 : index
    %c8_65 = arith.constant 8 : index
    %c0_66 = arith.constant 0 : index
    %45 = vector.load %arg1[%c1_63, %c1_64, %c8_65, %c0_66] : memref<2x8x32x256xf32, #tpu.memory_space<vmem>>, vector<1x1x24x256xf32>
    %46 = vector.shape_cast %45 : vector<1x1x24x256xf32> to vector<24x256xf32>
    %c1_67 = arith.constant 1 : index
    %c1_68 = arith.constant 1 : index
    %c8_69 = arith.constant 8 : index
    %c0_70 = arith.constant 0 : index
    %47 = vector.load %arg7[%c1_67, %c1_68, %c8_69, %c0_70] : memref<2x8x32x256xf32, #tpu.memory_space<vmem>>, vector<1x1x24x256xf32>
    %48 = vector.shape_cast %47 : vector<1x1x24x256xf32> to vector<24x256xf32>
    %49 = vector.shape_cast %46 : vector<24x256xf32> to vector<1x1x24x256xf32>
    tpu.vector_store %arg7[%c1_67, %c1_68, %c8_69, %c0_70], %49 {strides = array<i32>} : memref<2x8x32x256xf32, #tpu.memory_space<vmem>>, vector<1x1x24x256xf32>,
    %c1_71 = arith.constant 1 : index
    %c2_72 = arith.constant 2 : index
    %c8_73 = arith.constant 8 : index
    %c0_74 = arith.constant 0 : index
    %50 = vector.load %arg1[%c1_71, %c2_72, %c8_73, %c0_74] : memref<2x8x32x256xf32, #tpu.memory_space<vmem>>, vector<1x1x24x256xf32>
    %51 = vector.shape_cast %50 : vector<1x1x24x256xf32> to vector<24x256xf32>
    %c1_75 = arith.constant 1 : index
    %c2_76 = arith.constant 2 : index
    %c8_77 = arith.constant 8 : index
    %c0_78 = arith.constant 0 : index
    %52 = vector.load %arg7[%c1_75, %c2_76, %c8_77, %c0_78] : memref<2x8x32x256xf32, #tpu.memory_space<vmem>>, vector<1x1x24x256xf32>
    %53 = vector.shape_cast %52 : vector<1x1x24x256xf32> to vector<24x256xf32>
    %54 = vector.shape_cast %51 : vector<24x256xf32> to vector<1x1x24x256xf32>
    tpu.vector_store %arg7[%c1_75, %c2_76, %c8_77, %c0_78], %54 {strides = array<i32>} : memref<2x8x32x256xf32, #tpu.memory_space<vmem>>, vector<1x1x24x256xf32>,
    %c1_79 = arith.constant 1 : index
    %c3_80 = arith.constant 3 : index
    %c8_81 = arith.constant 8 : index
    %c0_82 = arith.constant 0 : index
    %55 = vector.load %arg1[%c1_79, %c3_80, %c8_81, %c0_82] : memref<2x8x32x256xf32, #tpu.memory_space<vmem>>, vector<1x1x24x256xf32>
    %56 = vector.shape_cast %55 : vector<1x1x24x256xf32> to vector<24x256xf32>
    %c1_83 = arith.constant 1 : index
    %c3_84 = arith.constant 3 : index
    %c8_85 = arith.constant 8 : index
    %c0_86 = arith.constant 0 : index
    %57 = vector.load %arg7[%c1_83, %c3_84, %c8_85, %c0_86] : memref<2x8x32x256xf32, #tpu.memory_space<vmem>>, vector<1x1x24x256xf32>
    %58 = vector.shape_cast %57 : vector<1x1x24x256xf32> to vector<24x256xf32>
    %59 = vector.shape_cast %56 : vector<24x256xf32> to vector<1x1x24x256xf32>
    tpu.vector_store %arg7[%c1_83, %c3_84, %c8_85, %c0_86], %59 {strides = array<i32>} : memref<2x8x32x256xf32, #tpu.memory_space<vmem>>, vector<1x1x24x256xf32>,
    %c1_87 = arith.constant 1 : index
    %c4_88 = arith.constant 4 : index
    %c8_89 = arith.constant 8 : index
    %c0_90 = arith.constant 0 : index
    %60 = vector.load %arg1[%c1_87, %c4_88, %c8_89, %c0_90] : memref<2x8x32x256xf32, #tpu.memory_space<vmem>>, vector<1x1x24x256xf32>
    %61 = vector.shape_cast %60 : vector<1x1x24x256xf32> to vector<24x256xf32>
    %c1_91 = arith.constant 1 : index
    %c4_92 = arith.constant 4 : index
    %c8_93 = arith.constant 8 : index
    %c0_94 = arith.constant 0 : index
    %62 = vector.load %arg7[%c1_91, %c4_92, %c8_93, %c0_94] : memref<2x8x32x256xf32, #tpu.memory_space<vmem>>, vector<1x1x24x256xf32>
    %63 = vector.shape_cast %62 : vector<1x1x24x256xf32> to vector<24x256xf32>
    %64 = vector.shape_cast %61 : vector<24x256xf32> to vector<1x1x24x256xf32>
    tpu.vector_store %arg7[%c1_91, %c4_92, %c8_93, %c0_94], %64 {strides = array<i32>} : memref<2x8x32x256xf32, #tpu.memory_space<vmem>>, vector<1x1x24x256xf32>,
    %c1_95 = arith.constant 1 : index
    %c5_96 = arith.constant 5 : index
    %c8_97 = arith.constant 8 : index
    %c0_98 = arith.constant 0 : index
    %65 = vector.load %arg1[%c1_95, %c5_96, %c8_97, %c0_98] : memref<2x8x32x256xf32, #tpu.memory_space<vmem>>, vector<1x1x24x256xf32>
    %66 = vector.shape_cast %65 : vector<1x1x24x256xf32> to vector<24x256xf32>
    %c1_99 = arith.constant 1 : index
    %c5_100 = arith.constant 5 : index
    %c8_101 = arith.constant 8 : index
    %c0_102 = arith.constant 0 : index
    %67 = vector.load %arg7[%c1_99, %c5_100, %c8_101, %c0_102] : memref<2x8x32x256xf32, #tpu.memory_space<vmem>>, vector<1x1x24x256xf32>
    %68 = vector.shape_cast %67 : vector<1x1x24x256xf32> to vector<24x256xf32>
    %69 = vector.shape_cast %66 : vector<24x256xf32> to vector<1x1x24x256xf32>
    tpu.vector_store %arg7[%c1_99, %c5_100, %c8_101, %c0_102], %69 {strides = array<i32>} : memref<2x8x32x256xf32, #tpu.memory_space<vmem>>, vector<1x1x24x256xf32>,
    %c1_103 = arith.constant 1 : index
    %c6_104 = arith.constant 6 : index
    %c8_105 = arith.constant 8 : index
    %c0_106 = arith.constant 0 : index
    %70 = vector.load %arg1[%c1_103, %c6_104, %c8_105, %c0_106] : memref<2x8x32x256xf32, #tpu.memory_space<vmem>>, vector<1x1x24x256xf32>
    %71 = vector.shape_cast %70 : vector<1x1x24x256xf32> to vector<24x256xf32>
    %c1_107 = arith.constant 1 : index
    %c6_108 = arith.constant 6 : index
    %c8_109 = arith.constant 8 : index
    %c0_110 = arith.constant 0 : index
    %72 = vector.load %arg7[%c1_107, %c6_108, %c8_109, %c0_110] : memref<2x8x32x256xf32, #tpu.memory_space<vmem>>, vector<1x1x24x256xf32>
    %73 = vector.shape_cast %72 : vector<1x1x24x256xf32> to vector<24x256xf32>
    %74 = vector.shape_cast %71 : vector<24x256xf32> to vector<1x1x24x256xf32>
    tpu.vector_store %arg7[%c1_107, %c6_108, %c8_109, %c0_110], %74 {strides = array<i32>} : memref<2x8x32x256xf32, #tpu.memory_space<vmem>>, vector<1x1x24x256xf32>,
    %c1_111 = arith.constant 1 : index
    %c7_112 = arith.constant 7 : index
    %c8_113 = arith.constant 8 : index
    %c0_114 = arith.constant 0 : index
    %75 = vector.load %arg1[%c1_111, %c7_112, %c8_113, %c0_114] : memref<2x8x32x256xf32, #tpu.memory_space<vmem>>, vector<1x1x24x256xf32>
    %76 = vector.shape_cast %75 : vector<1x1x24x256xf32> to vector<24x256xf32>
    %c1_115 = arith.constant 1 : index
    %c7_116 = arith.constant 7 : index
    %c8_117 = arith.constant 8 : index
    %c0_118 = arith.constant 0 : index
    %77 = vector.load %arg7[%c1_115, %c7_116, %c8_117, %c0_118] : memref<2x8x32x256xf32, #tpu.memory_space<vmem>>, vector<1x1x24x256xf32>
    %78 = vector.shape_cast %77 : vector<1x1x24x256xf32> to vector<24x256xf32>
    %79 = vector.shape_cast %76 : vector<24x256xf32> to vector<1x1x24x256xf32>
    tpu.vector_store %arg7[%c1_115, %c7_116, %c8_117, %c0_118], %79 {strides = array<i32>} : memref<2x8x32x256xf32, #tpu.memory_space<vmem>>, vector<1x1x24x256xf32>,
    %c0_119 = arith.constant 0 : index
    %c0_120 = arith.constant 0 : index
    %c0_121 = arith.constant 0 : index
    %c0_122 = arith.constant 0 : index
    %80 = vector.load %arg1[%c0_119, %c0_120, %c0_121, %c0_122] : memref<2x8x32x256xf32, #tpu.memory_space<vmem>>, vector<1x1x8x256xf32>
    %81 = vector.shape_cast %80 : vector<1x1x8x256xf32> to vector<8x256xf32>
    %c0_123 = arith.constant 0 : index
    %c1_124 = arith.constant 1 : index
    %c0_125 = arith.constant 0 : index
    %c0_126 = arith.constant 0 : index
    %82 = vector.load %arg1[%c0_123, %c1_124, %c0_125, %c0_126] : memref<2x8x32x256xf32, #tpu.memory_space<vmem>>, vector<1x1x8x256xf32>
    %83 = vector.shape_cast %82 : vector<1x1x8x256xf32> to vector<8x256xf32>
    %84 = arith.addf %81, %83 : vector<8x256xf32>
    %c0_127 = arith.constant 0 : index
    %c2_128 = arith.constant 2 : index
    %c0_129 = arith.constant 0 : index
    %c0_130 = arith.constant 0 : index
    %85 = vector.load %arg1[%c0_127, %c2_128, %c0_129, %c0_130] : memref<2x8x32x256xf32, #tpu.memory_space<vmem>>, vector<1x1x8x256xf32>
    %86 = vector.shape_cast %85 : vector<1x1x8x256xf32> to vector<8x256xf32>
    %87 = arith.addf %84, %86 : vector<8x256xf32>
    %c0_131 = arith.constant 0 : index
    %c3_132 = arith.constant 3 : index
    %c0_133 = arith.constant 0 : index
    %c0_134 = arith.constant 0 : index
    %88 = vector.load %arg1[%c0_131, %c3_132, %c0_133, %c0_134] : memref<2x8x32x256xf32, #tpu.memory_space<vmem>>, vector<1x1x8x256xf32>
    %89 = vector.shape_cast %88 : vector<1x1x8x256xf32> to vector<8x256xf32>
    %90 = arith.addf %87, %89 : vector<8x256xf32>
    %c0_135 = arith.constant 0 : index
    %c4_136 = arith.constant 4 : index
    %c0_137 = arith.constant 0 : index
    %c0_138 = arith.constant 0 : index
    %91 = vector.load %arg1[%c0_135, %c4_136, %c0_137, %c0_138] : memref<2x8x32x256xf32, #tpu.memory_space<vmem>>, vector<1x1x8x256xf32>
    %92 = vector.shape_cast %91 : vector<1x1x8x256xf32> to vector<8x256xf32>
    %93 = arith.addf %90, %92 : vector<8x256xf32>
    %c0_139 = arith.constant 0 : index
    %c5_140 = arith.constant 5 : index
    %c0_141 = arith.constant 0 : index
    %c0_142 = arith.constant 0 : index
    %94 = vector.load %arg1[%c0_139, %c5_140, %c0_141, %c0_142] : memref<2x8x32x256xf32, #tpu.memory_space<vmem>>, vector<1x1x8x256xf32>
    %95 = vector.shape_cast %94 : vector<1x1x8x256xf32> to vector<8x256xf32>
    %96 = arith.addf %93, %95 : vector<8x256xf32>
    %c0_143 = arith.constant 0 : index
    %c6_144 = arith.constant 6 : index
    %c0_145 = arith.constant 0 : index
    %c0_146 = arith.constant 0 : index
    %97 = vector.load %arg1[%c0_143, %c6_144, %c0_145, %c0_146] : memref<2x8x32x256xf32, #tpu.memory_space<vmem>>, vector<1x1x8x256xf32>
    %98 = vector.shape_cast %97 : vector<1x1x8x256xf32> to vector<8x256xf32>
    %99 = arith.addf %96, %98 : vector<8x256xf32>
    %c0_147 = arith.constant 0 : index
    %c7_148 = arith.constant 7 : index
    %c0_149 = arith.constant 0 : index
    %c0_150 = arith.constant 0 : index
    %100 = vector.load %arg1[%c0_147, %c7_148, %c0_149, %c0_150] : memref<2x8x32x256xf32, #tpu.memory_space<vmem>>, vector<1x1x8x256xf32>
    %101 = vector.shape_cast %100 : vector<1x1x8x256xf32> to vector<8x256xf32>
    %102 = arith.addf %99, %101 : vector<8x256xf32>
    %c1_151 = arith.constant 1 : index
    %c0_152 = arith.constant 0 : index
    %c0_153 = arith.constant 0 : index
    %c0_154 = arith.constant 0 : index
    %103 = vector.load %arg1[%c1_151, %c0_152, %c0_153, %c0_154] : memref<2x8x32x256xf32, #tpu.memory_space<vmem>>, vector<1x1x8x256xf32>
    %104 = vector.shape_cast %103 : vector<1x1x8x256xf32> to vector<8x256xf32>
    %c1_155 = arith.constant 1 : index
    %c1_156 = arith.constant 1 : index
    %c0_157 = arith.constant 0 : index
    %c0_158 = arith.constant 0 : index
    %105 = vector.load %arg1[%c1_155, %c1_156, %c0_157, %c0_158] : memref<2x8x32x256xf32, #tpu.memory_space<vmem>>, vector<1x1x8x256xf32>
    %106 = vector.shape_cast %105 : vector<1x1x8x256xf32> to vector<8x256xf32>
    %107 = arith.addf %104, %106 : vector<8x256xf32>
    %c1_159 = arith.constant 1 : index
    %c2_160 = arith.constant 2 : index
    %c0_161 = arith.constant 0 : index
    %c0_162 = arith.constant 0 : index
    %108 = vector.load %arg1[%c1_159, %c2_160, %c0_161, %c0_162] : memref<2x8x32x256xf32, #tpu.memory_space<vmem>>, vector<1x1x8x256xf32>
    %109 = vector.shape_cast %108 : vector<1x1x8x256xf32> to vector<8x256xf32>
    %110 = arith.addf %107, %109 : vector<8x256xf32>
    %c1_163 = arith.constant 1 : index
    %c3_164 = arith.constant 3 : index
    %c0_165 = arith.constant 0 : index
    %c0_166 = arith.constant 0 : index
    %111 = vector.load %arg1[%c1_163, %c3_164, %c0_165, %c0_166] : memref<2x8x32x256xf32, #tpu.memory_space<vmem>>, vector<1x1x8x256xf32>
    %112 = vector.shape_cast %111 : vector<1x1x8x256xf32> to vector<8x256xf32>
    %113 = arith.addf %110, %112 : vector<8x256xf32>
    %c1_167 = arith.constant 1 : index
    %c4_168 = arith.constant 4 : index
    %c0_169 = arith.constant 0 : index
    %c0_170 = arith.constant 0 : index
    %114 = vector.load %arg1[%c1_167, %c4_168, %c0_169, %c0_170] : memref<2x8x32x256xf32, #tpu.memory_space<vmem>>, vector<1x1x8x256xf32>
    %115 = vector.shape_cast %114 : vector<1x1x8x256xf32> to vector<8x256xf32>
    %116 = arith.addf %113, %115 : vector<8x256xf32>
    %c1_171 = arith.constant 1 : index
    %c5_172 = arith.constant 5 : index
    %c0_173 = arith.constant 0 : index
    %c0_174 = arith.constant 0 : index
    %117 = vector.load %arg1[%c1_171, %c5_172, %c0_173, %c0_174] : memref<2x8x32x256xf32, #tpu.memory_space<vmem>>, vector<1x1x8x256xf32>
    %118 = vector.shape_cast %117 : vector<1x1x8x256xf32> to vector<8x256xf32>
    %119 = arith.addf %116, %118 : vector<8x256xf32>
    %c1_175 = arith.constant 1 : index
    %c6_176 = arith.constant 6 : index
    %c0_177 = arith.constant 0 : index
    %c0_178 = arith.constant 0 : index
    %120 = vector.load %arg1[%c1_175, %c6_176, %c0_177, %c0_178] : memref<2x8x32x256xf32, #tpu.memory_space<vmem>>, vector<1x1x8x256xf32>
    %121 = vector.shape_cast %120 : vector<1x1x8x256xf32> to vector<8x256xf32>
    %122 = arith.addf %119, %121 : vector<8x256xf32>
    %c1_179 = arith.constant 1 : index
    %c7_180 = arith.constant 7 : index
    %c0_181 = arith.constant 0 : index
    %c0_182 = arith.constant 0 : index
    %123 = vector.load %arg1[%c1_179, %c7_180, %c0_181, %c0_182] : memref<2x8x32x256xf32, #tpu.memory_space<vmem>>, vector<1x1x8x256xf32>
    %124 = vector.shape_cast %123 : vector<1x1x8x256xf32> to vector<8x256xf32>
    %125 = arith.addf %122, %124 : vector<8x256xf32>
    %126 = tpu.concatenate %102, %125 in 0 : vector<8x256xf32>, vector<8x256xf32> -> vector<16x256xf32>
    %c17_i32 = arith.constant 17 : i32
    %127 = tpu.dynamic_rotate %126 by %c17_i32 dim 1 : vector<16x256xf32>, i32 -> vector<16x256xf32>
    %c0_183 = arith.constant 0 : index
    %c0_184 = arith.constant 0 : index
    %128 = vector.load %arg2[%c0_183, %c0_184] : memref<9x256xf32, #tpu.memory_space<vmem>>, vector<1x256xf32>
    %129 = vector.broadcast %128 : vector<1x256xf32> to vector<16x256xf32>
    %130 = arith.mulf %127, %129 : vector<16x256xf32>
    %c16_i32 = arith.constant 16 : i32
    %131 = tpu.dynamic_rotate %126 by %c16_i32 dim 1 : vector<16x256xf32>, i32 -> vector<16x256xf32>
    %c1_185 = arith.constant 1 : index
    %c0_186 = arith.constant 0 : index
    %132 = vector.load %arg2[%c1_185, %c0_186] : memref<9x256xf32, #tpu.memory_space<vmem>>, vector<1x256xf32>
    %133 = vector.broadcast %132 : vector<1x256xf32> to vector<16x256xf32>
    %134 = arith.mulf %131, %133 : vector<16x256xf32>
    %c15_i32 = arith.constant 15 : i32
    %135 = tpu.dynamic_rotate %126 by %c15_i32 dim 1 : vector<16x256xf32>, i32 -> vector<16x256xf32>
    %c2_187 = arith.constant 2 : index
    %c0_188 = arith.constant 0 : index
    %136 = vector.load %arg2[%c2_187, %c0_188] : memref<9x256xf32, #tpu.memory_space<vmem>>, vector<1x256xf32>
    %137 = vector.broadcast %136 : vector<1x256xf32> to vector<16x256xf32>
    %138 = arith.mulf %135, %137 : vector<16x256xf32>
    %c1_i32 = arith.constant 1 : i32
    %139 = tpu.dynamic_rotate %126 by %c1_i32 dim 1 : vector<16x256xf32>, i32 -> vector<16x256xf32>
    %c3_189 = arith.constant 3 : index
    %c0_190 = arith.constant 0 : index
    %140 = vector.load %arg2[%c3_189, %c0_190] : memref<9x256xf32, #tpu.memory_space<vmem>>, vector<1x256xf32>
    %141 = vector.broadcast %140 : vector<1x256xf32> to vector<16x256xf32>
    %142 = arith.mulf %139, %141 : vector<16x256xf32>
    %c255_i32 = arith.constant 255 : i32
    %143 = tpu.dynamic_rotate %126 by %c255_i32 dim 1 : vector<16x256xf32>, i32 -> vector<16x256xf32>
    %c5_191 = arith.constant 5 : index
    %c0_192 = arith.constant 0 : index
    %144 = vector.load %arg2[%c5_191, %c0_192] : memref<9x256xf32, #tpu.memory_space<vmem>>, vector<1x256xf32>
    %145 = vector.broadcast %144 : vector<1x256xf32> to vector<16x256xf32>
    %146 = arith.mulf %143, %145 : vector<16x256xf32>
    %c241_i32 = arith.constant 241 : i32
    %147 = tpu.dynamic_rotate %126 by %c241_i32 dim 1 : vector<16x256xf32>, i32 -> vector<16x256xf32>
    %c6_193 = arith.constant 6 : index
    %c0_194 = arith.constant 0 : index
    %148 = vector.load %arg2[%c6_193, %c0_194] : memref<9x256xf32, #tpu.memory_space<vmem>>, vector<1x256xf32>
    %149 = vector.broadcast %148 : vector<1x256xf32> to vector<16x256xf32>
    %150 = arith.mulf %147, %149 : vector<16x256xf32>
    %c240_i32 = arith.constant 240 : i32
    %151 = tpu.dynamic_rotate %126 by %c240_i32 dim 1 : vector<16x256xf32>, i32 -> vector<16x256xf32>
    %c7_195 = arith.constant 7 : index
    %c0_196 = arith.constant 0 : index
    %152 = vector.load %arg2[%c7_195, %c0_196] : memref<9x256xf32, #tpu.memory_space<vmem>>, vector<1x256xf32>
    %153 = vector.broadcast %152 : vector<1x256xf32> to vector<16x256xf32>
    %154 = arith.mulf %151, %153 : vector<16x256xf32>
    %c239_i32 = arith.constant 239 : i32
    %155 = tpu.dynamic_rotate %126 by %c239_i32 dim 1 : vector<16x256xf32>, i32 -> vector<16x256xf32>
    %c8_197 = arith.constant 8 : index
    %c0_198 = arith.constant 0 : index
    %156 = vector.load %arg2[%c8_197, %c0_198] : memref<9x256xf32, #tpu.memory_space<vmem>>, vector<1x256xf32>
    %157 = vector.broadcast %156 : vector<1x256xf32> to vector<16x256xf32>
    %158 = arith.mulf %155, %157 : vector<16x256xf32>
    %c0_199 = arith.constant 0 : index
    %c0_200 = arith.constant 0 : index
    %159 = vector.load %arg3[%c0_199, %c0_200] : memref<8x72xf32, #tpu.memory_space<vmem>>, vector<8x72xf32>
    %c0_201 = arith.constant 0 : index
    %c0_202 = arith.constant 0 : index
    %160 = vector.load %arg4[%c0_201, %c0_202] : memref<8x1xf32, #tpu.memory_space<vmem>>, vector<8x1xf32>
    %161 = vector.extract_strided_slice %130 {offsets = [0, 0], sizes = [8, 256], strides = [1, 1]} : vector<16x256xf32> to vector<8x256xf32>
    %162 = vector.extract_strided_slice %134 {offsets = [0, 0], sizes = [8, 256], strides = [1, 1]} : vector<16x256xf32> to vector<8x256xf32>
    %163 = vector.extract_strided_slice %138 {offsets = [0, 0], sizes = [8, 256], strides = [1, 1]} : vector<16x256xf32> to vector<8x256xf32>
    %164 = vector.extract_strided_slice %142 {offsets = [0, 0], sizes = [8, 256], strides = [1, 1]} : vector<16x256xf32> to vector<8x256xf32>
    %165 = vector.extract_strided_slice %126 {offsets = [0, 0], sizes = [8, 256], strides = [1, 1]} : vector<16x256xf32> to vector<8x256xf32>
    %166 = vector.extract_strided_slice %146 {offsets = [0, 0], sizes = [8, 256], strides = [1, 1]} : vector<16x256xf32> to vector<8x256xf32>
    %167 = vector.extract_strided_slice %150 {offsets = [0, 0], sizes = [8, 256], strides = [1, 1]} : vector<16x256xf32> to vector<8x256xf32>
    %168 = vector.extract_strided_slice %154 {offsets = [0, 0], sizes = [8, 256], strides = [1, 1]} : vector<16x256xf32> to vector<8x256xf32>
    %169 = vector.extract_strided_slice %158 {offsets = [0, 0], sizes = [8, 256], strides = [1, 1]} : vector<16x256xf32> to vector<8x256xf32>
    %170 = tpu.concatenate %161, %162, %163, %164, %165, %166, %167, %168, %169 in 0 : vector<8x256xf32>, vector<8x256xf32>, vector<8x256xf32>, vector<8x256xf32>, vector<8x256xf32>, vector<8x256xf32>, vector<8x256xf32>, vector<8x256xf32>, vector<8x256xf32> -> vector<72x256xf32>
    %cst = arith.constant dense<0.000000e+00> : vector<8x256xf32>
    %171 = tpu.matmul %159, %170, %cst {dimension_numbers = #tpu.dot_dimension_numbers<[1], [0], [0], [1], [0, 0, 1, 1], [], []>, precision = #tpu.contract_precision<fp32>} : vector<8x72xf32>, vector<72x256xf32>, vector<8x256xf32> -> vector<8x256xf32>
    %172 = vector.broadcast %160 : vector<8x1xf32> to vector<8x256xf32>
    %173 = arith.addf %171, %172 : vector<8x256xf32>
    %174 = vector.extract_strided_slice %130 {offsets = [8, 0], sizes = [8, 256], strides = [1, 1]} : vector<16x256xf32> to vector<8x256xf32>
    %175 = vector.extract_strided_slice %134 {offsets = [8, 0], sizes = [8, 256], strides = [1, 1]} : vector<16x256xf32> to vector<8x256xf32>
    %176 = vector.extract_strided_slice %138 {offsets = [8, 0], sizes = [8, 256], strides = [1, 1]} : vector<16x256xf32> to vector<8x256xf32>
    %177 = vector.extract_strided_slice %142 {offsets = [8, 0], sizes = [8, 256], strides = [1, 1]} : vector<16x256xf32> to vector<8x256xf32>
    %178 = vector.extract_strided_slice %126 {offsets = [8, 0], sizes = [8, 256], strides = [1, 1]} : vector<16x256xf32> to vector<8x256xf32>
    %179 = vector.extract_strided_slice %146 {offsets = [8, 0], sizes = [8, 256], strides = [1, 1]} : vector<16x256xf32> to vector<8x256xf32>
    %180 = vector.extract_strided_slice %150 {offsets = [8, 0], sizes = [8, 256], strides = [1, 1]} : vector<16x256xf32> to vector<8x256xf32>
    %181 = vector.extract_strided_slice %154 {offsets = [8, 0], sizes = [8, 256], strides = [1, 1]} : vector<16x256xf32> to vector<8x256xf32>
    %182 = vector.extract_strided_slice %158 {offsets = [8, 0], sizes = [8, 256], strides = [1, 1]} : vector<16x256xf32> to vector<8x256xf32>
    %183 = tpu.concatenate %174, %175, %176, %177, %178, %179, %180, %181, %182 in 0 : vector<8x256xf32>, vector<8x256xf32>, vector<8x256xf32>, vector<8x256xf32>, vector<8x256xf32>, vector<8x256xf32>, vector<8x256xf32>, vector<8x256xf32>, vector<8x256xf32> -> vector<72x256xf32>
    %cst_203 = arith.constant dense<0.000000e+00> : vector<8x256xf32>
    %184 = tpu.matmul %159, %183, %cst_203 {dimension_numbers = #tpu.dot_dimension_numbers<[1], [0], [0], [1], [0, 0, 1, 1], [], []>, precision = #tpu.contract_precision<fp32>} : vector<8x72xf32>, vector<72x256xf32>, vector<8x256xf32> -> vector<8x256xf32>
    %185 = vector.broadcast %160 : vector<8x1xf32> to vector<8x256xf32>
    %186 = arith.addf %184, %185 : vector<8x256xf32>
    %187 = tpu.concatenate %173, %186 in 0 : vector<8x256xf32>, vector<8x256xf32> -> vector<16x256xf32>
    %c0_204 = arith.constant 0 : index
    %c0_205 = arith.constant 0 : index
    %188 = vector.load %arg5[%c0_204, %c0_205] : memref<64x80xf32, #tpu.memory_space<vmem>>, vector<64x80xf32>
    %c0_206 = arith.constant 0 : index
    %c0_207 = arith.constant 0 : index
    %189 = vector.load %arg6[%c0_206, %c0_207] : memref<64x1xf32, #tpu.memory_space<vmem>>, vector<64x1xf32>
    %190 = vector.shape_cast %189 : vector<64x1xf32> to vector<64x1xf32>
    %191 = vector.broadcast %190 : vector<64x1xf32> to vector<64x256xf32>
    %c0_208 = arith.constant 0 : index
    %c0_209 = arith.constant 0 : index
    %c0_210 = arith.constant 0 : index
    %c0_211 = arith.constant 0 : index
    %192 = vector.load %arg1[%c0_208, %c0_209, %c0_210, %c0_211] : memref<2x8x32x256xf32, #tpu.memory_space<vmem>>, vector<1x1x8x256xf32>
    %193 = vector.shape_cast %192 : vector<1x1x8x256xf32> to vector<8x256xf32>
    %c0_212 = arith.constant 0 : index
    %c1_213 = arith.constant 1 : index
    %c0_214 = arith.constant 0 : index
    %c0_215 = arith.constant 0 : index
    %194 = vector.load %arg1[%c0_212, %c1_213, %c0_214, %c0_215] : memref<2x8x32x256xf32, #tpu.memory_space<vmem>>, vector<1x1x8x256xf32>
    %195 = vector.shape_cast %194 : vector<1x1x8x256xf32> to vector<8x256xf32>
    %c0_216 = arith.constant 0 : index
    %c2_217 = arith.constant 2 : index
    %c0_218 = arith.constant 0 : index
    %c0_219 = arith.constant 0 : index
    %196 = vector.load %arg1[%c0_216, %c2_217, %c0_218, %c0_219] : memref<2x8x32x256xf32, #tpu.memory_space<vmem>>, vector<1x1x8x256xf32>
    %197 = vector.shape_cast %196 : vector<1x1x8x256xf32> to vector<8x256xf32>
    %c0_220 = arith.constant 0 : index
    %c3_221 = arith.constant 3 : index
    %c0_222 = arith.constant 0 : index
    %c0_223 = arith.constant 0 : index
    %198 = vector.load %arg1[%c0_220, %c3_221, %c0_222, %c0_223] : memref<2x8x32x256xf32, #tpu.memory_space<vmem>>, vector<1x1x8x256xf32>
    %199 = vector.shape_cast %198 : vector<1x1x8x256xf32> to vector<8x256xf32>
    %c0_224 = arith.constant 0 : index
    %c4_225 = arith.constant 4 : index
    %c0_226 = arith.constant 0 : index
    %c0_227 = arith.constant 0 : index
    %200 = vector.load %arg1[%c0_224, %c4_225, %c0_226, %c0_227] : memref<2x8x32x256xf32, #tpu.memory_space<vmem>>, vector<1x1x8x256xf32>
    %201 = vector.shape_cast %200 : vector<1x1x8x256xf32> to vector<8x256xf32>
    %c0_228 = arith.constant 0 : index
    %c5_229 = arith.constant 5 : index
    %c0_230 = arith.constant 0 : index
    %c0_231 = arith.constant 0 : index
    %202 = vector.load %arg1[%c0_228, %c5_229, %c0_230, %c0_231] : memref<2x8x32x256xf32, #tpu.memory_space<vmem>>, vector<1x1x8x256xf32>
    %203 = vector.shape_cast %202 : vector<1x1x8x256xf32> to vector<8x256xf32>
    %c0_232 = arith.constant 0 : index
    %c6_233 = arith.constant 6 : index
    %c0_234 = arith.constant 0 : index
    %c0_235 = arith.constant 0 : index
    %204 = vector.load %arg1[%c0_232, %c6_233, %c0_234, %c0_235] : memref<2x8x32x256xf32, #tpu.memory_space<vmem>>, vector<1x1x8x256xf32>
    %205 = vector.shape_cast %204 : vector<1x1x8x256xf32> to vector<8x256xf32>
    %c0_236 = arith.constant 0 : index
    %c7_237 = arith.constant 7 : index
    %c0_238 = arith.constant 0 : index
    %c0_239 = arith.constant 0 : index
    %206 = vector.load %arg1[%c0_236, %c7_237, %c0_238, %c0_239] : memref<2x8x32x256xf32, #tpu.memory_space<vmem>>, vector<1x1x8x256xf32>
    %207 = vector.shape_cast %206 : vector<1x1x8x256xf32> to vector<8x256xf32>
    %208 = tpu.concatenate %193, %195, %197, %199, %201, %203, %205, %207, %187 in 0 : vector<8x256xf32>, vector<8x256xf32>, vector<8x256xf32>, vector<8x256xf32>, vector<8x256xf32>, vector<8x256xf32>, vector<8x256xf32>, vector<8x256xf32>, vector<16x256xf32> -> vector<80x256xf32>
    %cst_240 = arith.constant dense<0.000000e+00> : vector<64x256xf32>
    %209 = tpu.matmul %188, %208, %cst_240 {dimension_numbers = #tpu.dot_dimension_numbers<[1], [0], [0], [1], [0, 0, 1, 1], [], []>, precision = #tpu.contract_precision<fp32>} : vector<64x80xf32>, vector<80x256xf32>, vector<64x256xf32> -> vector<64x256xf32>
    %210 = arith.addf %209, %191 : vector<64x256xf32>
    %211 = vector.extract_strided_slice %210 {offsets = [0, 0], sizes = [8, 256], strides = [1, 1]} : vector<64x256xf32> to vector<8x256xf32>
    %c0_241 = arith.constant 0 : index
    %c0_242 = arith.constant 0 : index
    %c0_243 = arith.constant 0 : index
    %c0_244 = arith.constant 0 : index
    %212 = vector.load %arg7[%c0_241, %c0_242, %c0_243, %c0_244] : memref<2x8x32x256xf32, #tpu.memory_space<vmem>>, vector<1x1x8x256xf32>
    %213 = vector.shape_cast %212 : vector<1x1x8x256xf32> to vector<8x256xf32>
    %214 = vector.shape_cast %211 : vector<8x256xf32> to vector<1x1x8x256xf32>
    tpu.vector_store %arg7[%c0_241, %c0_242, %c0_243, %c0_244], %214 {strides = array<i32>} : memref<2x8x32x256xf32, #tpu.memory_space<vmem>>, vector<1x1x8x256xf32>,
    %215 = vector.extract_strided_slice %210 {offsets = [8, 0], sizes = [8, 256], strides = [1, 1]} : vector<64x256xf32> to vector<8x256xf32>
    %c0_245 = arith.constant 0 : index
    %c1_246 = arith.constant 1 : index
    %c0_247 = arith.constant 0 : index
    %c0_248 = arith.constant 0 : index
    %216 = vector.load %arg7[%c0_245, %c1_246, %c0_247, %c0_248] : memref<2x8x32x256xf32, #tpu.memory_space<vmem>>, vector<1x1x8x256xf32>
    %217 = vector.shape_cast %216 : vector<1x1x8x256xf32> to vector<8x256xf32>
    %218 = vector.shape_cast %215 : vector<8x256xf32> to vector<1x1x8x256xf32>
    tpu.vector_store %arg7[%c0_245, %c1_246, %c0_247, %c0_248], %218 {strides = array<i32>} : memref<2x8x32x256xf32, #tpu.memory_space<vmem>>, vector<1x1x8x256xf32>,
    %219 = vector.extract_strided_slice %210 {offsets = [16, 0], sizes = [8, 256], strides = [1, 1]} : vector<64x256xf32> to vector<8x256xf32>
    %c0_249 = arith.constant 0 : index
    %c2_250 = arith.constant 2 : index
    %c0_251 = arith.constant 0 : index
    %c0_252 = arith.constant 0 : index
    %220 = vector.load %arg7[%c0_249, %c2_250, %c0_251, %c0_252] : memref<2x8x32x256xf32, #tpu.memory_space<vmem>>, vector<1x1x8x256xf32>
    %221 = vector.shape_cast %220 : vector<1x1x8x256xf32> to vector<8x256xf32>
    %222 = vector.shape_cast %219 : vector<8x256xf32> to vector<1x1x8x256xf32>
    tpu.vector_store %arg7[%c0_249, %c2_250, %c0_251, %c0_252], %222 {strides = array<i32>} : memref<2x8x32x256xf32, #tpu.memory_space<vmem>>, vector<1x1x8x256xf32>,
    %223 = vector.extract_strided_slice %210 {offsets = [24, 0], sizes = [8, 256], strides = [1, 1]} : vector<64x256xf32> to vector<8x256xf32>
    %c0_253 = arith.constant 0 : index
    %c3_254 = arith.constant 3 : index
    %c0_255 = arith.constant 0 : index
    %c0_256 = arith.constant 0 : index
    %224 = vector.load %arg7[%c0_253, %c3_254, %c0_255, %c0_256] : memref<2x8x32x256xf32, #tpu.memory_space<vmem>>, vector<1x1x8x256xf32>
    %225 = vector.shape_cast %224 : vector<1x1x8x256xf32> to vector<8x256xf32>
    %226 = vector.shape_cast %223 : vector<8x256xf32> to vector<1x1x8x256xf32>
    tpu.vector_store %arg7[%c0_253, %c3_254, %c0_255, %c0_256], %226 {strides = array<i32>} : memref<2x8x32x256xf32, #tpu.memory_space<vmem>>, vector<1x1x8x256xf32>,
    %227 = vector.extract_strided_slice %210 {offsets = [32, 0], sizes = [8, 256], strides = [1, 1]} : vector<64x256xf32> to vector<8x256xf32>
    %c0_257 = arith.constant 0 : index
    %c4_258 = arith.constant 4 : index
    %c0_259 = arith.constant 0 : index
    %c0_260 = arith.constant 0 : index
    %228 = vector.load %arg7[%c0_257, %c4_258, %c0_259, %c0_260] : memref<2x8x32x256xf32, #tpu.memory_space<vmem>>, vector<1x1x8x256xf32>
    %229 = vector.shape_cast %228 : vector<1x1x8x256xf32> to vector<8x256xf32>
    %230 = vector.shape_cast %227 : vector<8x256xf32> to vector<1x1x8x256xf32>
    tpu.vector_store %arg7[%c0_257, %c4_258, %c0_259, %c0_260], %230 {strides = array<i32>} : memref<2x8x32x256xf32, #tpu.memory_space<vmem>>, vector<1x1x8x256xf32>,
    %231 = vector.extract_strided_slice %210 {offsets = [40, 0], sizes = [8, 256], strides = [1, 1]} : vector<64x256xf32> to vector<8x256xf32>
    %c0_261 = arith.constant 0 : index
    %c5_262 = arith.constant 5 : index
    %c0_263 = arith.constant 0 : index
    %c0_264 = arith.constant 0 : index
    %232 = vector.load %arg7[%c0_261, %c5_262, %c0_263, %c0_264] : memref<2x8x32x256xf32, #tpu.memory_space<vmem>>, vector<1x1x8x256xf32>
    %233 = vector.shape_cast %232 : vector<1x1x8x256xf32> to vector<8x256xf32>
    %234 = vector.shape_cast %231 : vector<8x256xf32> to vector<1x1x8x256xf32>
    tpu.vector_store %arg7[%c0_261, %c5_262, %c0_263, %c0_264], %234 {strides = array<i32>} : memref<2x8x32x256xf32, #tpu.memory_space<vmem>>, vector<1x1x8x256xf32>,
    %235 = vector.extract_strided_slice %210 {offsets = [48, 0], sizes = [8, 256], strides = [1, 1]} : vector<64x256xf32> to vector<8x256xf32>
    %c0_265 = arith.constant 0 : index
    %c6_266 = arith.constant 6 : index
    %c0_267 = arith.constant 0 : index
    %c0_268 = arith.constant 0 : index
    %236 = vector.load %arg7[%c0_265, %c6_266, %c0_267, %c0_268] : memref<2x8x32x256xf32, #tpu.memory_space<vmem>>, vector<1x1x8x256xf32>
    %237 = vector.shape_cast %236 : vector<1x1x8x256xf32> to vector<8x256xf32>
    %238 = vector.shape_cast %235 : vector<8x256xf32> to vector<1x1x8x256xf32>
    tpu.vector_store %arg7[%c0_265, %c6_266, %c0_267, %c0_268], %238 {strides = array<i32>} : memref<2x8x32x256xf32, #tpu.memory_space<vmem>>, vector<1x1x8x256xf32>,
    %239 = vector.extract_strided_slice %210 {offsets = [56, 0], sizes = [8, 256], strides = [1, 1]} : vector<64x256xf32> to vector<8x256xf32>
    %c0_269 = arith.constant 0 : index
    %c7_270 = arith.constant 7 : index
    %c0_271 = arith.constant 0 : index
    %c0_272 = arith.constant 0 : index
    %240 = vector.load %arg7[%c0_269, %c7_270, %c0_271, %c0_272] : memref<2x8x32x256xf32, #tpu.memory_space<vmem>>, vector<1x1x8x256xf32>
    %241 = vector.shape_cast %240 : vector<1x1x8x256xf32> to vector<8x256xf32>
    %242 = vector.shape_cast %239 : vector<8x256xf32> to vector<1x1x8x256xf32>
    tpu.vector_store %arg7[%c0_269, %c7_270, %c0_271, %c0_272], %242 {strides = array<i32>} : memref<2x8x32x256xf32, #tpu.memory_space<vmem>>, vector<1x1x8x256xf32>,
    %c1_273 = arith.constant 1 : index
    %c0_274 = arith.constant 0 : index
    %c0_275 = arith.constant 0 : index
    %c0_276 = arith.constant 0 : index
    %243 = vector.load %arg1[%c1_273, %c0_274, %c0_275, %c0_276] : memref<2x8x32x256xf32, #tpu.memory_space<vmem>>, vector<1x1x8x256xf32>
    %244 = vector.shape_cast %243 : vector<1x1x8x256xf32> to vector<8x256xf32>
    %c1_277 = arith.constant 1 : index
    %c1_278 = arith.constant 1 : index
    %c0_279 = arith.constant 0 : index
    %c0_280 = arith.constant 0 : index
    %245 = vector.load %arg1[%c1_277, %c1_278, %c0_279, %c0_280] : memref<2x8x32x256xf32, #tpu.memory_space<vmem>>, vector<1x1x8x256xf32>
    %246 = vector.shape_cast %245 : vector<1x1x8x256xf32> to vector<8x256xf32>
    %c1_281 = arith.constant 1 : index
    %c2_282 = arith.constant 2 : index
    %c0_283 = arith.constant 0 : index
    %c0_284 = arith.constant 0 : index
    %247 = vector.load %arg1[%c1_281, %c2_282, %c0_283, %c0_284] : memref<2x8x32x256xf32, #tpu.memory_space<vmem>>, vector<1x1x8x256xf32>
    %248 = vector.shape_cast %247 : vector<1x1x8x256xf32> to vector<8x256xf32>
    %c1_285 = arith.constant 1 : index
    %c3_286 = arith.constant 3 : index
    %c0_287 = arith.constant 0 : index
    %c0_288 = arith.constant 0 : index
    %249 = vector.load %arg1[%c1_285, %c3_286, %c0_287, %c0_288] : memref<2x8x32x256xf32, #tpu.memory_space<vmem>>, vector<1x1x8x256xf32>
    %250 = vector.shape_cast %249 : vector<1x1x8x256xf32> to vector<8x256xf32>
    %c1_289 = arith.constant 1 : index
    %c4_290 = arith.constant 4 : index
    %c0_291 = arith.constant 0 : index
    %c0_292 = arith.constant 0 : index
    %251 = vector.load %arg1[%c1_289, %c4_290, %c0_291, %c0_292] : memref<2x8x32x256xf32, #tpu.memory_space<vmem>>, vector<1x1x8x256xf32>
    %252 = vector.shape_cast %251 : vector<1x1x8x256xf32> to vector<8x256xf32>
    %c1_293 = arith.constant 1 : index
    %c5_294 = arith.constant 5 : index
    %c0_295 = arith.constant 0 : index
    %c0_296 = arith.constant 0 : index
    %253 = vector.load %arg1[%c1_293, %c5_294, %c0_295, %c0_296] : memref<2x8x32x256xf32, #tpu.memory_space<vmem>>, vector<1x1x8x256xf32>
    %254 = vector.shape_cast %253 : vector<1x1x8x256xf32> to vector<8x256xf32>
    %c1_297 = arith.constant 1 : index
    %c6_298 = arith.constant 6 : index
    %c0_299 = arith.constant 0 : index
    %c0_300 = arith.constant 0 : index
    %255 = vector.load %arg1[%c1_297, %c6_298, %c0_299, %c0_300] : memref<2x8x32x256xf32, #tpu.memory_space<vmem>>, vector<1x1x8x256xf32>
    %256 = vector.shape_cast %255 : vector<1x1x8x256xf32> to vector<8x256xf32>
    %c1_301 = arith.constant 1 : index
    %c7_302 = arith.constant 7 : index
    %c0_303 = arith.constant 0 : index
    %c0_304 = arith.constant 0 : index
    %257 = vector.load %arg1[%c1_301, %c7_302, %c0_303, %c0_304] : memref<2x8x32x256xf32, #tpu.memory_space<vmem>>, vector<1x1x8x256xf32>
    %258 = vector.shape_cast %257 : vector<1x1x8x256xf32> to vector<8x256xf32>
    %259 = tpu.concatenate %244, %246, %248, %250, %252, %254, %256, %258, %187 in 0 : vector<8x256xf32>, vector<8x256xf32>, vector<8x256xf32>, vector<8x256xf32>, vector<8x256xf32>, vector<8x256xf32>, vector<8x256xf32>, vector<8x256xf32>, vector<16x256xf32> -> vector<80x256xf32>
    %cst_305 = arith.constant dense<0.000000e+00> : vector<64x256xf32>
    %260 = tpu.matmul %188, %259, %cst_305 {dimension_numbers = #tpu.dot_dimension_numbers<[1], [0], [0], [1], [0, 0, 1, 1], [], []>, precision = #tpu.contract_precision<fp32>} : vector<64x80xf32>, vector<80x256xf32>, vector<64x256xf32> -> vector<64x256xf32>
    %261 = arith.addf %260, %191 : vector<64x256xf32>
    %262 = vector.extract_strided_slice %261 {offsets = [0, 0], sizes = [8, 256], strides = [1, 1]} : vector<64x256xf32> to vector<8x256xf32>
    %c1_306 = arith.constant 1 : index
    %c0_307 = arith.constant 0 : index
    %c0_308 = arith.constant 0 : index
    %c0_309 = arith.constant 0 : index
    %263 = vector.load %arg7[%c1_306, %c0_307, %c0_308, %c0_309] : memref<2x8x32x256xf32, #tpu.memory_space<vmem>>, vector<1x1x8x256xf32>
    %264 = vector.shape_cast %263 : vector<1x1x8x256xf32> to vector<8x256xf32>
    %265 = vector.shape_cast %262 : vector<8x256xf32> to vector<1x1x8x256xf32>
    tpu.vector_store %arg7[%c1_306, %c0_307, %c0_308, %c0_309], %265 {strides = array<i32>} : memref<2x8x32x256xf32, #tpu.memory_space<vmem>>, vector<1x1x8x256xf32>,
    %266 = vector.extract_strided_slice %261 {offsets = [8, 0], sizes = [8, 256], strides = [1, 1]} : vector<64x256xf32> to vector<8x256xf32>
    %c1_310 = arith.constant 1 : index
    %c1_311 = arith.constant 1 : index
    %c0_312 = arith.constant 0 : index
    %c0_313 = arith.constant 0 : index
    %267 = vector.load %arg7[%c1_310, %c1_311, %c0_312, %c0_313] : memref<2x8x32x256xf32, #tpu.memory_space<vmem>>, vector<1x1x8x256xf32>
    %268 = vector.shape_cast %267 : vector<1x1x8x256xf32> to vector<8x256xf32>
    %269 = vector.shape_cast %266 : vector<8x256xf32> to vector<1x1x8x256xf32>
    tpu.vector_store %arg7[%c1_310, %c1_311, %c0_312, %c0_313], %269 {strides = array<i32>} : memref<2x8x32x256xf32, #tpu.memory_space<vmem>>, vector<1x1x8x256xf32>,
    %270 = vector.extract_strided_slice %261 {offsets = [16, 0], sizes = [8, 256], strides = [1, 1]} : vector<64x256xf32> to vector<8x256xf32>
    %c1_314 = arith.constant 1 : index
    %c2_315 = arith.constant 2 : index
    %c0_316 = arith.constant 0 : index
    %c0_317 = arith.constant 0 : index
    %271 = vector.load %arg7[%c1_314, %c2_315, %c0_316, %c0_317] : memref<2x8x32x256xf32, #tpu.memory_space<vmem>>, vector<1x1x8x256xf32>
    %272 = vector.shape_cast %271 : vector<1x1x8x256xf32> to vector<8x256xf32>
    %273 = vector.shape_cast %270 : vector<8x256xf32> to vector<1x1x8x256xf32>
    tpu.vector_store %arg7[%c1_314, %c2_315, %c0_316, %c0_317], %273 {strides = array<i32>} : memref<2x8x32x256xf32, #tpu.memory_space<vmem>>, vector<1x1x8x256xf32>,
    %274 = vector.extract_strided_slice %261 {offsets = [24, 0], sizes = [8, 256], strides = [1, 1]} : vector<64x256xf32> to vector<8x256xf32>
    %c1_318 = arith.constant 1 : index
    %c3_319 = arith.constant 3 : index
    %c0_320 = arith.constant 0 : index
    %c0_321 = arith.constant 0 : index
    %275 = vector.load %arg7[%c1_318, %c3_319, %c0_320, %c0_321] : memref<2x8x32x256xf32, #tpu.memory_space<vmem>>, vector<1x1x8x256xf32>
    %276 = vector.shape_cast %275 : vector<1x1x8x256xf32> to vector<8x256xf32>
    %277 = vector.shape_cast %274 : vector<8x256xf32> to vector<1x1x8x256xf32>
    tpu.vector_store %arg7[%c1_318, %c3_319, %c0_320, %c0_321], %277 {strides = array<i32>} : memref<2x8x32x256xf32, #tpu.memory_space<vmem>>, vector<1x1x8x256xf32>,
    %278 = vector.extract_strided_slice %261 {offsets = [32, 0], sizes = [8, 256], strides = [1, 1]} : vector<64x256xf32> to vector<8x256xf32>
    %c1_322 = arith.constant 1 : index
    %c4_323 = arith.constant 4 : index
    %c0_324 = arith.constant 0 : index
    %c0_325 = arith.constant 0 : index
    %279 = vector.load %arg7[%c1_322, %c4_323, %c0_324, %c0_325] : memref<2x8x32x256xf32, #tpu.memory_space<vmem>>, vector<1x1x8x256xf32>
    %280 = vector.shape_cast %279 : vector<1x1x8x256xf32> to vector<8x256xf32>
    %281 = vector.shape_cast %278 : vector<8x256xf32> to vector<1x1x8x256xf32>
    tpu.vector_store %arg7[%c1_322, %c4_323, %c0_324, %c0_325], %281 {strides = array<i32>} : memref<2x8x32x256xf32, #tpu.memory_space<vmem>>, vector<1x1x8x256xf32>,
    %282 = vector.extract_strided_slice %261 {offsets = [40, 0], sizes = [8, 256], strides = [1, 1]} : vector<64x256xf32> to vector<8x256xf32>
    %c1_326 = arith.constant 1 : index
    %c5_327 = arith.constant 5 : index
    %c0_328 = arith.constant 0 : index
    %c0_329 = arith.constant 0 : index
    %283 = vector.load %arg7[%c1_326, %c5_327, %c0_328, %c0_329] : memref<2x8x32x256xf32, #tpu.memory_space<vmem>>, vector<1x1x8x256xf32>
    %284 = vector.shape_cast %283 : vector<1x1x8x256xf32> to vector<8x256xf32>
    %285 = vector.shape_cast %282 : vector<8x256xf32> to vector<1x1x8x256xf32>
    tpu.vector_store %arg7[%c1_326, %c5_327, %c0_328, %c0_329], %285 {strides = array<i32>} : memref<2x8x32x256xf32, #tpu.memory_space<vmem>>, vector<1x1x8x256xf32>,
    %286 = vector.extract_strided_slice %261 {offsets = [48, 0], sizes = [8, 256], strides = [1, 1]} : vector<64x256xf32> to vector<8x256xf32>
    %c1_330 = arith.constant 1 : index
    %c6_331 = arith.constant 6 : index
    %c0_332 = arith.constant 0 : index
    %c0_333 = arith.constant 0 : index
    %287 = vector.load %arg7[%c1_330, %c6_331, %c0_332, %c0_333] : memref<2x8x32x256xf32, #tpu.memory_space<vmem>>, vector<1x1x8x256xf32>
    %288 = vector.shape_cast %287 : vector<1x1x8x256xf32> to vector<8x256xf32>
    %289 = vector.shape_cast %286 : vector<8x256xf32> to vector<1x1x8x256xf32>
    tpu.vector_store %arg7[%c1_330, %c6_331, %c0_332, %c0_333], %289 {strides = array<i32>} : memref<2x8x32x256xf32, #tpu.memory_space<vmem>>, vector<1x1x8x256xf32>,
    %290 = vector.extract_strided_slice %261 {offsets = [56, 0], sizes = [8, 256], strides = [1, 1]} : vector<64x256xf32> to vector<8x256xf32>
    %c1_334 = arith.constant 1 : index
    %c7_335 = arith.constant 7 : index
    %c0_336 = arith.constant 0 : index
    %c0_337 = arith.constant 0 : index
    %291 = vector.load %arg7[%c1_334, %c7_335, %c0_336, %c0_337] : memref<2x8x32x256xf32, #tpu.memory_space<vmem>>, vector<1x1x8x256xf32>
    %292 = vector.shape_cast %291 : vector<1x1x8x256xf32> to vector<8x256xf32>
    %293 = vector.shape_cast %290 : vector<8x256xf32> to vector<1x1x8x256xf32>
    tpu.vector_store %arg7[%c1_334, %c7_335, %c0_336, %c0_337], %293 {strides = array<i32>} : memref<2x8x32x256xf32, #tpu.memory_space<vmem>>, vector<1x1x8x256xf32>,
    return
  }
  func.func @transform_0(%arg0: i32) -> (i32, i32, i32, i32) {
    %c0_i32 = arith.constant 0 : i32
    %c0_i32_0 = arith.constant 0 : i32
    %c0_i32_1 = arith.constant 0 : i32
    %c0_i32_2 = arith.constant 0 : i32
    %c0_i32_3 = arith.constant 0 : i32
    return %c0_i32, %c0_i32_0, %c0_i32_1, %c0_i32_2 : i32, i32, i32, i32
  }
  func.func @transform_1(%arg0: i32) -> (i32, i32) {
    %c0_i32 = arith.constant 0 : i32
    %c0_i32_0 = arith.constant 0 : i32
    %c0_i32_1 = arith.constant 0 : i32
    return %c0_i32, %c0_i32_0 : i32, i32
  }
  func.func @transform_2(%arg0: i32) -> (i32, i32) {
    %c0_i32 = arith.constant 0 : i32
    %c0_i32_0 = arith.constant 0 : i32
    %c0_i32_1 = arith.constant 0 : i32
    return %c0_i32, %c0_i32_0 : i32, i32
  }
  func.func @transform_3(%arg0: i32) -> (i32, i32) {
    %c0_i32 = arith.constant 0 : i32
    %c0_i32_0 = arith.constant 0 : i32
    %c0_i32_1 = arith.constant 0 : i32
    return %c0_i32, %c0_i32_0 : i32, i32
  }
  func.func @transform_4(%arg0: i32) -> (i32, i32) {
    %c0_i32 = arith.constant 0 : i32
    %c0_i32_0 = arith.constant 0 : i32
    %c0_i32_1 = arith.constant 0 : i32
    return %c0_i32, %c0_i32_0 : i32, i32
  }
  func.func @transform_5(%arg0: i32) -> (i32, i32) {
    %c0_i32 = arith.constant 0 : i32
    %c0_i32_0 = arith.constant 0 : i32
    %c0_i32_1 = arith.constant 0 : i32
    return %c0_i32, %c0_i32_0 : i32, i32
  }
  func.func @transform_6(%arg0: i32) -> (i32, i32, i32, i32) {
    %c0_i32 = arith.constant 0 : i32
    %c0_i32_0 = arith.constant 0 : i32
    %c0_i32_1 = arith.constant 0 : i32
    %c0_i32_2 = arith.constant 0 : i32
    %c0_i32_3 = arith.constant 0 : i32
    return %c0_i32, %c0_i32_0, %c0_i32_1, %c0_i32_2 : i32, i32, i32, i32
  }
}

</mosaic_0001>

<llo_original>
// kernel: ss_forward.1
$region0: #{ss_forward.1}
  #allocation0 [shape = 'u32[]', space=smem, size = 0x4, offset = 0x4, fixed_abs, tag = 'smem constant byte address 0x4 - core index']
  #allocation1 [shape = 'u32[144,128]{1,0:T(1,128)}', space=vmem, size = 0x12000, scoped, tag = 'internal scratch']
  %s0 = inlined_call_operand.vmem [shape: f32[2,8,32,256], index: 0, kind: input, shape index: {}]
  %s1 = inlined_call_operand.vmem [shape: f32[9,256], index: 1, kind: input, shape index: {}]
  %s2 = inlined_call_operand.vmem [shape: f32[8,72], index: 2, kind: input, shape index: {}]
  %s3 = inlined_call_operand.vmem [shape: f32[8,1], index: 3, kind: input, shape index: {}]
  %s4 = inlined_call_operand.vmem [shape: f32[64,80], index: 4, kind: input, shape index: {}]
  %s5 = inlined_call_operand.vmem [shape: f32[64,1], index: 5, kind: input, shape index: {}]
  %s6 = inlined_call_operand.vmem [shape: f32[2,8,32,256], index: 6, kind: output, shape index: {}]
  %s7 = sld [smem:[#allocation0]]
  $region34: #{ss_forward.1} parent=0
    _
  %s9 = ssub.s32 1, %s7
  %s10 = scalar_select 0, %s9, %s7
  // Predicated region
  $region2: #{ss_forward.1} parent=0 // pred_check
    _
  $region3: #{ss_forward.1} parent=0 // pred_check_branch
    %12 = sbr.rel (0) target = $region5
  $region4: #{ss_forward.1} parent=0 // pred_region
    _
  $region5: #{ss_forward.1} parent=0 // pred_fallthru
    _
  // Predicated region
  $region6: #{ss_forward.1} parent=0 // pred_check
    _
  $region7: #{ss_forward.1} parent=0 // pred_check_branch
    %14 = sbr.rel (0) target = $region9
  $region8: #{ss_forward.1} parent=0 // pred_region
    _
  $region9: #{ss_forward.1} parent=0 // pred_fallthru
    _
  // Predicated region
  $region10: #{ss_forward.1} parent=0 // pred_check
    _
  $region11: #{ss_forward.1} parent=0 // pred_check_branch
    %16 = sbr.rel (0) target = $region13
  $region12: #{ss_forward.1} parent=0 // pred_region
    _
  $region13: #{ss_forward.1} parent=0 // pred_fallthru
    _
  // Predicated region
  $region14: #{ss_forward.1} parent=0 // pred_check
    _
  $region15: #{ss_forward.1} parent=0 // pred_check_branch
    %18 = sbr.rel (0) target = $region17
  $region16: #{ss_forward.1} parent=0 // pred_region
    _
  $region17: #{ss_forward.1} parent=0 // pred_fallthru
    _
  // Predicated region
  $region18: #{ss_forward.1} parent=0 // pred_check
    _
  $region19: #{ss_forward.1} parent=0 // pred_check_branch
    %20 = sbr.rel (0) target = $region21
  $region20: #{ss_forward.1} parent=0 // pred_region
    _
  $region21: #{ss_forward.1} parent=0 // pred_fallthru
    _
  // Predicated region
  $region22: #{ss_forward.1} parent=0 // pred_check
    _
  $region23: #{ss_forward.1} parent=0 // pred_check_branch
    %22 = sbr.rel (0) target = $region25
  $region24: #{ss_forward.1} parent=0 // pred_region
    _
  $region25: #{ss_forward.1} parent=0 // pred_fallthru
    _
  %v23 = vld [vmem:[%s0 + $0x10] sm:$0xff]
  %v24 = vld [vmem:[%s0 + $0x18] sm:$0xff]
  %v25 = vld [vmem:[%s0 + $0x20] sm:$0xff]
  %v26 = vld [vmem:[%s0 + $0x28] sm:$0xff]
  %v27 = vld [vmem:[%s0 + $0x30] sm:$0xff]
  %v28 = vld [vmem:[%s0 + $0x38] sm:$0xff]
  %29 = vst [vmem:[%s6 + $0x10] sm:$0xff] %v23
  %30 = vst [vmem:[%s6 + $0x18] sm:$0xff] %v24
  %31 = vst [vmem:[%s6 + $0x20] sm:$0xff] %v25
  %32 = vst [vmem:[%s6 + $0x28] sm:$0xff] %v26
  %33 = vst [vmem:[%s6 + $0x30] sm:$0xff] %v27
  %34 = vst [vmem:[%s6 + $0x38] sm:$0xff] %v28
  %s35 = scalar_lea.vmem %s0, 64
  %v36 = vld [vmem:[%s35 + $0x10] sm:$0xff]
  %v37 = vld [vmem:[%s35 + $0x18] sm:$0xff]
  %v38 = vld [vmem:[%s35 + $0x20] sm:$0xff]
  %v39 = vld [vmem:[%s35 + $0x28] sm:$0xff]
  %v40 = vld [vmem:[%s35 + $0x30] sm:$0xff]
  %v41 = vld [vmem:[%s35 + $0x38] sm:$0xff]
  %s42 = scalar_lea.vmem %s6, 64
  %43 = vst [vmem:[%s42 + $0x10] sm:$0xff] %v36
  %44 = vst [vmem:[%s42 + $0x18] sm:$0xff] %v37
  %45 = vst [vmem:[%s42 + $0x20] sm:$0xff] %v38
  %46 = vst [vmem:[%s42 + $0x28] sm:$0xff] %v39
  %47 = vst [vmem:[%s42 + $0x30] sm:$0xff] %v40
  %48 = vst [vmem:[%s42 + $0x38] sm:$0xff] %v41
  %s49 = scalar_lea.vmem %s0, 128
  %v50 = vld [vmem:[%s49 + $0x10] sm:$0xff]
  %v51 = vld [vmem:[%s49 + $0x18] sm:$0xff]
  %v52 = vld [vmem:[%s49 + $0x20] sm:$0xff]
  %v53 = vld [vmem:[%s49 + $0x28] sm:$0xff]
  %v54 = vld [vmem:[%s49 + $0x30] sm:$0xff]
  %v55 = vld [vmem:[%s49 + $0x38] sm:$0xff]
  %s56 = scalar_lea.vmem %s6, 128
  %57 = vst [vmem:[%s56 + $0x10] sm:$0xff] %v50
  %58 = vst [vmem:[%s56 + $0x18] sm:$0xff] %v51
  %59 = vst [vmem:[%s56 + $0x20] sm:$0xff] %v52
  %60 = vst [vmem:[%s56 + $0x28] sm:$0xff] %v53
  %61 = vst [vmem:[%s56 + $0x30] sm:$0xff] %v54
  %62 = vst [vmem:[%s56 + $0x38] sm:$0xff] %v55
  %s63 = scalar_lea.vmem %s0, 192
  %v64 = vld [vmem:[%s63 + $0x10] sm:$0xff]
  %v65 = vld [vmem:[%s63 + $0x18] sm:$0xff]
  %v66 = vld [vmem:[%s63 + $0x20] sm:$0xff]
  %v67 = vld [vmem:[%s63 + $0x28] sm:$0xff]
  %v68 = vld [vmem:[%s63 + $0x30] sm:$0xff]
  %v69 = vld [vmem:[%s63 + $0x38] sm:$0xff]
  %s70 = scalar_lea.vmem %s6, 192
  %71 = vst [vmem:[%s70 + $0x10] sm:$0xff] %v64
  %72 = vst [vmem:[%s70 + $0x18] sm:$0xff] %v65
  %73 = vst [vmem:[%s70 + $0x20] sm:$0xff] %v66
  %74 = vst [vmem:[%s70 + $0x28] sm:$0xff] %v67
  %75 = vst [vmem:[%s70 + $0x30] sm:$0xff] %v68
  %76 = vst [vmem:[%s70 + $0x38] sm:$0xff] %v69
  %s77 = scalar_lea.vmem %s0, 256
  %v78 = vld [vmem:[%s77 + $0x10] sm:$0xff]
  %v79 = vld [vmem:[%s77 + $0x18] sm:$0xff]
  %v80 = vld [vmem:[%s77 + $0x20] sm:$0xff]
  %v81 = vld [vmem:[%s77 + $0x28] sm:$0xff]
  %v82 = vld [vmem:[%s77 + $0x30] sm:$0xff]
  %v83 = vld [vmem:[%s77 + $0x38] sm:$0xff]
  %s84 = scalar_lea.vmem %s6, 256
  %85 = vst [vmem:[%s84 + $0x10] sm:$0xff] %v78
  %86 = vst [vmem:[%s84 + $0x18] sm:$0xff] %v79
  %87 = vst [vmem:[%s84 + $0x20] sm:$0xff] %v80
  %88 = vst [vmem:[%s84 + $0x28] sm:$0xff] %v81
  %89 = vst [vmem:[%s84 + $0x30] sm:$0xff] %v82
  %90 = vst [vmem:[%s84 + $0x38] sm:$0xff] %v83
  %s91 = scalar_lea.vmem %s0, 320
  %v92 = vld [vmem:[%s91 + $0x10] sm:$0xff]
  %v93 = vld [vmem:[%s91 + $0x18] sm:$0xff]
  %v94 = vld [vmem:[%s91 + $0x20] sm:$0xff]
  %v95 = vld [vmem:[%s91 + $0x28] sm:$0xff]
  %v96 = vld [vmem:[%s91 + $0x30] sm:$0xff]
  %v97 = vld [vmem:[%s91 + $0x38] sm:$0xff]
  %s98 = scalar_lea.vmem %s6, 320
  %99 = vst [vmem:[%s98 + $0x10] sm:$0xff] %v92
  %100 = vst [vmem:[%s98 + $0x18] sm:$0xff] %v93
  %101 = vst [vmem:[%s98 + $0x20] sm:$0xff] %v94
  %102 = vst [vmem:[%s98 + $0x28] sm:$0xff] %v95
  %103 = vst [vmem:[%s98 + $0x30] sm:$0xff] %v96
  %104 = vst [vmem:[%s98 + $0x38] sm:$0xff] %v97
  %s105 = scalar_lea.vmem %s0, 384
  %v106 = vld [vmem:[%s105 + $0x10] sm:$0xff]
  %v107 = vld [vmem:[%s105 + $0x18] sm:$0xff]
  %v108 = vld [vmem:[%s105 + $0x20] sm:$0xff]
  %v109 = vld [vmem:[%s105 + $0x28] sm:$0xff]
  %v110 = vld [vmem:[%s105 + $0x30] sm:$0xff]
  %v111 = vld [vmem:[%s105 + $0x38] sm:$0xff]
  %s112 = scalar_lea.vmem %s6, 384
  %113 = vst [vmem:[%s112 + $0x10] sm:$0xff] %v106
  %114 = vst [vmem:[%s112 + $0x18] sm:$0xff] %v107
  %115 = vst [vmem:[%s112 + $0x20] sm:$0xff] %v108
  %116 = vst [vmem:[%s112 + $0x28] sm:$0xff] %v109
  %117 = vst [vmem:[%s112 + $0x30] sm:$0xff] %v110
  %118 = vst [vmem:[%s112 + $0x38] sm:$0xff] %v111
  %s119 = scalar_lea.vmem %s0, 448
  %v120 = vld [vmem:[%s119 + $0x10] sm:$0xff]
  %v121 = vld [vmem:[%s119 + $0x18] sm:$0xff]
  %v122 = vld [vmem:[%s119 + $0x20] sm:$0xff]
  %v123 = vld [vmem:[%s119 + $0x28] sm:$0xff]
  %v124 = vld [vmem:[%s119 + $0x30] sm:$0xff]
  %v125 = vld [vmem:[%s119 + $0x38] sm:$0xff]
  %s126 = scalar_lea.vmem %s6, 448
  %127 = vst [vmem:[%s126 + $0x10] sm:$0xff] %v120
  %128 = vst [vmem:[%s126 + $0x18] sm:$0xff] %v121
  %129 = vst [vmem:[%s126 + $0x20] sm:$0xff] %v122
  %130 = vst [vmem:[%s126 + $0x28] sm:$0xff] %v123
  %131 = vst [vmem:[%s126 + $0x30] sm:$0xff] %v124
  %132 = vst [vmem:[%s126 + $0x38] sm:$0xff] %v125
  %s133 = scalar_lea.vmem %s0, 512
  %v134 = vld [vmem:[%s133 + $0x10] sm:$0xff]
  %v135 = vld [vmem:[%s133 + $0x18] sm:$0xff]
  %v136 = vld [vmem:[%s133 + $0x20] sm:$0xff]
  %v137 = vld [vmem:[%s133 + $0x28] sm:$0xff]
  %v138 = vld [vmem:[%s133 + $0x30] sm:$0xff]
  %v139 = vld [vmem:[%s133 + $0x38] sm:$0xff]
  %s140 = scalar_lea.vmem %s6, 512
  %141 = vst [vmem:[%s140 + $0x10] sm:$0xff] %v134
  %142 = vst [vmem:[%s140 + $0x18] sm:$0xff] %v135
  %143 = vst [vmem:[%s140 + $0x20] sm:$0xff] %v136
  %144 = vst [vmem:[%s140 + $0x28] sm:$0xff] %v137
  %145 = vst [vmem:[%s140 + $0x30] sm:$0xff] %v138
  %146 = vst [vmem:[%s140 + $0x38] sm:$0xff] %v139
  %s147 = scalar_lea.vmem %s0, 576
  %v148 = vld [vmem:[%s147 + $0x10] sm:$0xff]
  %v149 = vld [vmem:[%s147 + $0x18] sm:$0xff]
  %v150 = vld [vmem:[%s147 + $0x20] sm:$0xff]
  %v151 = vld [vmem:[%s147 + $0x28] sm:$0xff]
  %v152 = vld [vmem:[%s147 + $0x30] sm:$0xff]
  %v153 = vld [vmem:[%s147 + $0x38] sm:$0xff]
  %s154 = scalar_lea.vmem %s6, 576
  %155 = vst [vmem:[%s154 + $0x10] sm:$0xff] %v148
  %156 = vst [vmem:[%s154 + $0x18] sm:$0xff] %v149
  %157 = vst [vmem:[%s154 + $0x20] sm:$0xff] %v150
  %158 = vst [vmem:[%s154 + $0x28] sm:$0xff] %v151
  %159 = vst [vmem:[%s154 + $0x30] sm:$0xff] %v152
  %160 = vst [vmem:[%s154 + $0x38] sm:$0xff] %v153
  %s161 = scalar_lea.vmem %s0, 640
  %v162 = vld [vmem:[%s161 + $0x10] sm:$0xff]
  %v163 = vld [vmem:[%s161 + $0x18] sm:$0xff]
  %v164 = vld [vmem:[%s161 + $0x20] sm:$0xff]
  %v165 = vld [vmem:[%s161 + $0x28] sm:$0xff]
  %v166 = vld [vmem:[%s161 + $0x30] sm:$0xff]
  %v167 = vld [vmem:[%s161 + $0x38] sm:$0xff]
  %s168 = scalar_lea.vmem %s6, 640
  %169 = vst [vmem:[%s168 + $0x10] sm:$0xff] %v162
  %170 = vst [vmem:[%s168 + $0x18] sm:$0xff] %v163
  %171 = vst [vmem:[%s168 + $0x20] sm:$0xff] %v164
  %172 = vst [vmem:[%s168 + $0x28] sm:$0xff] %v165
  %173 = vst [vmem:[%s168 + $0x30] sm:$0xff] %v166
  %174 = vst [vmem:[%s168 + $0x38] sm:$0xff] %v167
  %s175 = scalar_lea.vmem %s0, 704
  %v176 = vld [vmem:[%s175 + $0x10] sm:$0xff]
  %v177 = vld [vmem:[%s175 + $0x18] sm:$0xff]
  %v178 = vld [vmem:[%s175 + $0x20] sm:$0xff]
  %v179 = vld [vmem:[%s175 + $0x28] sm:$0xff]
  %v180 = vld [vmem:[%s175 + $0x30] sm:$0xff]
  %v181 = vld [vmem:[%s175 + $0x38] sm:$0xff]
  %s182 = scalar_lea.vmem %s6, 704
  %183 = vst [vmem:[%s182 + $0x10] sm:$0xff] %v176
  %184 = vst [vmem:[%s182 + $0x18] sm:$0xff] %v177
  %185 = vst [vmem:[%s182 + $0x20] sm:$0xff] %v178
  %186 = vst [vmem:[%s182 + $0x28] sm:$0xff] %v179
  %187 = vst [vmem:[%s182 + $0x30] sm:$0xff] %v180
  %188 = vst [vmem:[%s182 + $0x38] sm:$0xff] %v181
  %s189 = scalar_lea.vmem %s0, 768
  %v190 = vld [vmem:[%s189 + $0x10] sm:$0xff]
  %v191 = vld [vmem:[%s189 + $0x18] sm:$0xff]
  %v192 = vld [vmem:[%s189 + $0x20] sm:$0xff]
  %v193 = vld [vmem:[%s189 + $0x28] sm:$0xff]
  %v194 = vld [vmem:[%s189 + $0x30] sm:$0xff]
  %v195 = vld [vmem:[%s189 + $0x38] sm:$0xff]
  %s196 = scalar_lea.vmem %s6, 768
  %197 = vst [vmem:[%s196 + $0x10] sm:$0xff] %v190
  %198 = vst [vmem:[%s196 + $0x18] sm:$0xff] %v191
  %199 = vst [vmem:[%s196 + $0x20] sm:$0xff] %v192
  %200 = vst [vmem:[%s196 + $0x28] sm:$0xff] %v193
  %201 = vst [vmem:[%s196 + $0x30] sm:$0xff] %v194
  %202 = vst [vmem:[%s196 + $0x38] sm:$0xff] %v195
  %s203 = scalar_lea.vmem %s0, 832
  %v204 = vld [vmem:[%s203 + $0x10] sm:$0xff]
  %v205 = vld [vmem:[%s203 + $0x18] sm:$0xff]
  %v206 = vld [vmem:[%s203 + $0x20] sm:$0xff]
  %v207 = vld [vmem:[%s203 + $0x28] sm:$0xff]
  %v208 = vld [vmem:[%s203 + $0x30] sm:$0xff]
  %v209 = vld [vmem:[%s203 + $0x38] sm:$0xff]
  %s210 = scalar_lea.vmem %s6, 832
  %211 = vst [vmem:[%s210 + $0x10] sm:$0xff] %v204
  %212 = vst [vmem:[%s210 + $0x18] sm:$0xff] %v205
  %213 = vst [vmem:[%s210 + $0x20] sm:$0xff] %v206
  %214 = vst [vmem:[%s210 + $0x28] sm:$0xff] %v207
  %215 = vst [vmem:[%s210 + $0x30] sm:$0xff] %v208
  %216 = vst [vmem:[%s210 + $0x38] sm:$0xff] %v209
  %s217 = scalar_lea.vmem %s0, 896
  %v218 = vld [vmem:[%s217 + $0x10] sm:$0xff]
  %v219 = vld [vmem:[%s217 + $0x18] sm:$0xff]
  %v220 = vld [vmem:[%s217 + $0x20] sm:$0xff]
  %v221 = vld [vmem:[%s217 + $0x28] sm:$0xff]
  %v222 = vld [vmem:[%s217 + $0x30] sm:$0xff]
  %v223 = vld [vmem:[%s217 + $0x38] sm:$0xff]
  %s224 = scalar_lea.vmem %s6, 896
  %225 = vst [vmem:[%s224 + $0x10] sm:$0xff] %v218
  %226 = vst [vmem:[%s224 + $0x18] sm:$0xff] %v219
  %227 = vst [vmem:[%s224 + $0x20] sm:$0xff] %v220
  %228 = vst [vmem:[%s224 + $0x28] sm:$0xff] %v221
  %229 = vst [vmem:[%s224 + $0x30] sm:$0xff] %v222
  %230 = vst [vmem:[%s224 + $0x38] sm:$0xff] %v223
  %s231 = scalar_lea.vmem %s0, 960
  %v232 = vld [vmem:[%s231 + $0x10] sm:$0xff]
  %v233 = vld [vmem:[%s231 + $0x18] sm:$0xff]
  %v234 = vld [vmem:[%s231 + $0x20] sm:$0xff]
  %v235 = vld [vmem:[%s231 + $0x28] sm:$0xff]
  %v236 = vld [vmem:[%s231 + $0x30] sm:$0xff]
  %v237 = vld [vmem:[%s231 + $0x38] sm:$0xff]
  %s238 = scalar_lea.vmem %s6, 960
  %239 = vst [vmem:[%s238 + $0x10] sm:$0xff] %v232
  %240 = vst [vmem:[%s238 + $0x18] sm:$0xff] %v233
  %241 = vst [vmem:[%s238 + $0x20] sm:$0xff] %v234
  %242 = vst [vmem:[%s238 + $0x28] sm:$0xff] %v235
  %243 = vst [vmem:[%s238 + $0x30] sm:$0xff] %v236
  %244 = vst [vmem:[%s238 + $0x38] sm:$0xff] %v237
  %v245 = vld [vmem:[%s0] sm:$0xff]
  %v246 = vld [vmem:[%s0 + $0x8] sm:$0xff]
  %v247 = vld [vmem:[%s35] sm:$0xff]
  %v248 = vld [vmem:[%s35 + $0x8] sm:$0xff]
  %v249 = vadd.f32 %v245, %v247
  %v250 = vadd.f32 %v246, %v248
  %v251 = vld [vmem:[%s49] sm:$0xff]
  %v252 = vld [vmem:[%s49 + $0x8] sm:$0xff]
  %v253 = vadd.f32 %v249, %v251
  %v254 = vadd.f32 %v250, %v252
  %v255 = vld [vmem:[%s63] sm:$0xff]
  %v256 = vld [vmem:[%s63 + $0x8] sm:$0xff]
  %v257 = vadd.f32 %v253, %v255
  %v258 = vadd.f32 %v254, %v256
  %v259 = vld [vmem:[%s77] sm:$0xff]
  %v260 = vld [vmem:[%s77 + $0x8] sm:$0xff]
  %v261 = vadd.f32 %v257, %v259
  %v262 = vadd.f32 %v258, %v260
  %v263 = vld [vmem:[%s91] sm:$0xff]
  %v264 = vld [vmem:[%s91 + $0x8] sm:$0xff]
  %v265 = vadd.f32 %v261, %v263
  %v266 = vadd.f32 %v262, %v264
  %v267 = vld [vmem:[%s105] sm:$0xff]
  %v268 = vld [vmem:[%s105 + $0x8] sm:$0xff]
  %v269 = vadd.f32 %v265, %v267
  %v270 = vadd.f32 %v266, %v268
  %v271 = vld [vmem:[%s119] sm:$0xff]
  %v272 = vld [vmem:[%s119 + $0x8] sm:$0xff]
  %v273 = vadd.f32 %v269, %v271
  %v274 = vadd.f32 %v270, %v272
  %v275 = vld [vmem:[%s133] sm:$0xff]
  %v276 = vld [vmem:[%s133 + $0x8] sm:$0xff]
  %v277 = vld [vmem:[%s147] sm:$0xff]
  %v278 = vld [vmem:[%s147 + $0x8] sm:$0xff]
  %v279 = vadd.f32 %v275, %v277
  %v280 = vadd.f32 %v276, %v278
  %v281 = vld [vmem:[%s161] sm:$0xff]
  %v282 = vld [vmem:[%s161 + $0x8] sm:$0xff]
  %v283 = vadd.f32 %v279, %v281
  %v284 = vadd.f32 %v280, %v282
  %v285 = vld [vmem:[%s175] sm:$0xff]
  %v286 = vld [vmem:[%s175 + $0x8] sm:$0xff]
  %v287 = vadd.f32 %v283, %v285
  %v288 = vadd.f32 %v284, %v286
  %v289 = vld [vmem:[%s189] sm:$0xff]
  %v290 = vld [vmem:[%s189 + $0x8] sm:$0xff]
  %v291 = vadd.f32 %v287, %v289
  %v292 = vadd.f32 %v288, %v290
  %v293 = vld [vmem:[%s203] sm:$0xff]
  %v294 = vld [vmem:[%s203 + $0x8] sm:$0xff]
  %v295 = vadd.f32 %v291, %v293
  %v296 = vadd.f32 %v292, %v294
  %v297 = vld [vmem:[%s217] sm:$0xff]
  %v298 = vld [vmem:[%s217 + $0x8] sm:$0xff]
  %v299 = vadd.f32 %v295, %v297
  %v300 = vadd.f32 %v296, %v298
  %v301 = vld [vmem:[%s231] sm:$0xff]
  %v302 = vld [vmem:[%s231 + $0x8] sm:$0xff]
  %v303 = vadd.f32 %v299, %v301
  %v304 = vadd.f32 %v300, %v302
  %305 = vrot.lane.b32.xlu0 %v273, 17
  %v306 = vpop.permute.xlu0 %305
  %307 = vrot.lane.b32.xlu0 %v303, 17
  %v308 = vpop.permute.xlu0 %307
  %309 = vrot.lane.b32.xlu0 %v274, 17
  %v310 = vpop.permute.xlu0 %309
  %311 = vrot.lane.b32.xlu0 %v304, 17
  %v312 = vpop.permute.xlu0 %311
  %v313 = vlaneseq
  %v314 = vand.u32 %v313, 127
  %vm315 = vcmp.lt.s32.totalorder %v314, 17
  %v316 = vsel %vm315, %v306, %v310
  %v317 = vsel %vm315, %v308, %v312
  %v318 = vsel %vm315, %v310, %v306
  %v319 = vsel %vm315, %v312, %v308
  %v320 = vld [vmem:[%s1] ss:$8 sm:$0x3]
  %v322 = vlaneseq
  %v323 = vshrl.u32 %v322, 7
  %v324 = vsub.s32 0, %v323
  %v325 = vrot.slane %v320, %v324
  %v326 = vlaneseq
  %v327 = vshrl.u32 %v326, 7
  %v328 = vsub.s32 1, %v327
  %v329 = vrot.slane %v320, %v328
  %v332 = vmul.f32 %v318, %v325
  %v333 = vmul.f32 %v316, %v329
  %v334 = vmul.f32 %v319, %v325
  %v335 = vmul.f32 %v317, %v329
  %336 = vrot.lane.b32.xlu0 %v273, 16
  %v337 = vpop.permute.xlu0 %336
  %338 = vrot.lane.b32.xlu0 %v303, 16
  %v339 = vpop.permute.xlu0 %338
  %340 = vrot.lane.b32.xlu0 %v274, 16
  %v341 = vpop.permute.xlu0 %340
  %342 = vrot.lane.b32.xlu0 %v304, 16
  %v343 = vpop.permute.xlu0 %342
  %vm344 = vcmp.lt.s32.totalorder %v314, 16
  %v345 = vsel %vm344, %v337, %v341
  %v346 = vsel %vm344, %v339, %v343
  %v347 = vsel %vm344, %v341, %v337
  %v348 = vsel %vm344, %v343, %v339
  %s349 = scalar_lea.vmem %s1, 1
  %v350 = vld [vmem:[%s349] ss:$8 sm:$0x3]
  %v352 = vlaneseq
  %v353 = vshrl.u32 %v352, 7
  %v354 = vsub.s32 0, %v353
  %v355 = vrot.slane %v350, %v354
  %v356 = vlaneseq
  %v357 = vshrl.u32 %v356, 7
  %v358 = vsub.s32 1, %v357
  %v359 = vrot.slane %v350, %v358
  %v362 = vmul.f32 %v347, %v355
  %v363 = vmul.f32 %v345, %v359
  %v364 = vmul.f32 %v348, %v355
  %v365 = vmul.f32 %v346, %v359
  %366 = vrot.lane.b32.xlu0 %v273, 15
  %v367 = vpop.permute.xlu0 %366
  %368 = vrot.lane.b32.xlu0 %v303, 15
  %v369 = vpop.permute.xlu0 %368
  %370 = vrot.lane.b32.xlu0 %v274, 15
  %v371 = vpop.permute.xlu0 %370
  %372 = vrot.lane.b32.xlu0 %v304, 15
  %v373 = vpop.permute.xlu0 %372
  %vm374 = vcmp.lt.s32.totalorder %v314, 15
  %v375 = vsel %vm374, %v367, %v371
  %v376 = vsel %vm374, %v369, %v373
  %v377 = vsel %vm374, %v371, %v367
  %v378 = vsel %vm374, %v373, %v369
  %s379 = scalar_lea.vmem %s1, 2
  %v380 = vld [vmem:[%s379] ss:$8 sm:$0x3]
  %v382 = vlaneseq
  %v383 = vshrl.u32 %v382, 7
  %v384 = vsub.s32 0, %v383
  %v385 = vrot.slane %v380, %v384
  %v386 = vlaneseq
  %v387 = vshrl.u32 %v386, 7
  %v388 = vsub.s32 1, %v387
  %v389 = vrot.slane %v380, %v388
  %v392 = vmul.f32 %v377, %v385
  %v393 = vmul.f32 %v375, %v389
  %v394 = vmul.f32 %v378, %v385
  %v395 = vmul.f32 %v376, %v389
  %396 = vrot.lane.b32.xlu0 %v273, 1
  %v397 = vpop.permute.xlu0 %396
  %398 = vrot.lane.b32.xlu0 %v303, 1
  %v399 = vpop.permute.xlu0 %398
  %400 = vrot.lane.b32.xlu0 %v274, 1
  %v401 = vpop.permute.xlu0 %400
  %402 = vrot.lane.b32.xlu0 %v304, 1
  %v403 = vpop.permute.xlu0 %402
  %vm404 = vcmp.lt.s32.totalorder %v314, 1
  %v405 = vsel %vm404, %v397, %v401
  %v406 = vsel %vm404, %v399, %v403
  %v407 = vsel %vm404, %v401, %v397
  %v408 = vsel %vm404, %v403, %v399
  %s409 = scalar_lea.vmem %s1, 3
  %v410 = vld [vmem:[%s409] ss:$8 sm:$0x3]
  %v412 = vlaneseq
  %v413 = vshrl.u32 %v412, 7
  %v414 = vsub.s32 0, %v413
  %v415 = vrot.slane %v410, %v414
  %v416 = vlaneseq
  %v417 = vshrl.u32 %v416, 7
  %v418 = vsub.s32 1, %v417
  %v419 = vrot.slane %v410, %v418
  %v422 = vmul.f32 %v407, %v415
  %v423 = vmul.f32 %v405, %v419
  %v424 = vmul.f32 %v408, %v415
  %v425 = vmul.f32 %v406, %v419
  %426 = vrot.lane.b32.xlu0 %v273, 127
  %v427 = vpop.permute.xlu0 %426
  %428 = vrot.lane.b32.xlu0 %v303, 127
  %v429 = vpop.permute.xlu0 %428
  %430 = vrot.lane.b32.xlu0 %v274, 127
  %v431 = vpop.permute.xlu0 %430
  %432 = vrot.lane.b32.xlu0 %v304, 127
  %v433 = vpop.permute.xlu0 %432
  %vm434 = vcmp.lt.s32.totalorder %v314, 127
  %v435 = vsel %vm434, %v427, %v431
  %v436 = vsel %vm434, %v429, %v433
  %v437 = vsel %vm434, %v431, %v427
  %v438 = vsel %vm434, %v433, %v429
  %s439 = scalar_lea.vmem %s1, 5
  %v440 = vld [vmem:[%s439] ss:$8 sm:$0x3]
  %v442 = vlaneseq
  %v443 = vshrl.u32 %v442, 7
  %v444 = vsub.s32 0, %v443
  %v445 = vrot.slane %v440, %v444
  %v446 = vlaneseq
  %v447 = vshrl.u32 %v446, 7
  %v448 = vsub.s32 1, %v447
  %v449 = vrot.slane %v440, %v448
  %v452 = vmul.f32 %v435, %v445
  %v453 = vmul.f32 %v437, %v449
  %v454 = vmul.f32 %v436, %v445
  %v455 = vmul.f32 %v438, %v449
  %456 = vrot.lane.b32.xlu0 %v273, 113
  %v457 = vpop.permute.xlu0 %456
  %458 = vrot.lane.b32.xlu0 %v303, 113
  %v459 = vpop.permute.xlu0 %458
  %460 = vrot.lane.b32.xlu0 %v274, 113
  %v461 = vpop.permute.xlu0 %460
  %462 = vrot.lane.b32.xlu0 %v304, 113
  %v463 = vpop.permute.xlu0 %462
  %vm464 = vcmp.lt.s32.totalorder %v314, 113
  %v465 = vsel %vm464, %v457, %v461
  %v466 = vsel %vm464, %v459, %v463
  %v467 = vsel %vm464, %v461, %v457
  %v468 = vsel %vm464, %v463, %v459
  %s469 = scalar_lea.vmem %s1, 6
  %v470 = vld [vmem:[%s469] ss:$8 sm:$0x3]
  %v472 = vlaneseq
  %v473 = vshrl.u32 %v472, 7
  %v474 = vsub.s32 0, %v473
  %v475 = vrot.slane %v470, %v474
  %v476 = vlaneseq
  %v477 = vshrl.u32 %v476, 7
  %v478 = vsub.s32 1, %v477
  %v479 = vrot.slane %v470, %v478
  %v482 = vmul.f32 %v465, %v475
  %v483 = vmul.f32 %v467, %v479
  %v484 = vmul.f32 %v466, %v475
  %v485 = vmul.f32 %v468, %v479
  %486 = vrot.lane.b32.xlu0 %v273, 112
  %v487 = vpop.permute.xlu0 %486
  %488 = vrot.lane.b32.xlu0 %v303, 112
  %v489 = vpop.permute.xlu0 %488
  %490 = vrot.lane.b32.xlu0 %v274, 112
  %v491 = vpop.permute.xlu0 %490
  %492 = vrot.lane.b32.xlu0 %v304, 112
  %v493 = vpop.permute.xlu0 %492
  %vm494 = vcmp.lt.s32.totalorder %v314, 112
  %v495 = vsel %vm494, %v487, %v491
  %v496 = vsel %vm494, %v489, %v493
  %v497 = vsel %vm494, %v491, %v487
  %v498 = vsel %vm494, %v493, %v489
  %s499 = scalar_lea.vmem %s1, 7
  %v500 = vld [vmem:[%s499] ss:$8 sm:$0x3]
  %v502 = vlaneseq
  %v503 = vshrl.u32 %v502, 7
  %v504 = vsub.s32 0, %v503
  %v505 = vrot.slane %v500, %v504
  %v506 = vlaneseq
  %v507 = vshrl.u32 %v506, 7
  %v508 = vsub.s32 1, %v507
  %v509 = vrot.slane %v500, %v508
  %v512 = vmul.f32 %v495, %v505
  %v513 = vmul.f32 %v497, %v509
  %v514 = vmul.f32 %v496, %v505
  %v515 = vmul.f32 %v498, %v509
  %516 = vrot.lane.b32.xlu0 %v273, 111
  %v517 = vpop.permute.xlu0 %516
  %518 = vrot.lane.b32.xlu0 %v303, 111
  %v519 = vpop.permute.xlu0 %518
  %520 = vrot.lane.b32.xlu0 %v274, 111
  %v521 = vpop.permute.xlu0 %520
  %522 = vrot.lane.b32.xlu0 %v304, 111
  %v523 = vpop.permute.xlu0 %522
  %vm524 = vcmp.lt.s32.totalorder %v314, 111
  %v525 = vsel %vm524, %v517, %v521
  %v526 = vsel %vm524, %v519, %v523
  %v527 = vsel %vm524, %v521, %v517
  %v528 = vsel %vm524, %v523, %v519
  %s529 = scalar_lea.vmem %s1, 16
  %v530 = vld [vmem:[%s529] ss:$8 sm:$0x3]
  %v532 = vlaneseq
  %v533 = vshrl.u32 %v532, 7
  %v534 = vsub.s32 0, %v533
  %v535 = vrot.slane %v530, %v534
  %v536 = vlaneseq
  %v537 = vshrl.u32 %v536, 7
  %v538 = vsub.s32 1, %v537
  %v539 = vrot.slane %v530, %v538
  %v542 = vmul.f32 %v525, %v535
  %v543 = vmul.f32 %v527, %v539
  %v544 = vmul.f32 %v526, %v535
  %v545 = vmul.f32 %v528, %v539
  %v546 = vld [vmem:[%s2] sm:$0xff]
  %v547 = vld [vmem:[%s3] sm:$0xff]
  %549 = vset.pattern.permute.xlu0 0
  %550 = vperm.xlu0 %549, %v547
  %v551 = vpop.permute.xlu0 %550
  %vm553 = vcmask 588800
  %v555 = vsel %vm553, %v546, 0
  %557 = vmatprep.subr.mxu0 0.0
  %558 = vmatpush1.msra.mxu0 0.0
  %559 = vmatprep.subr.mxu0 0.0
  %560 = vmatpush1.msra.mxu0 0.0
  %561 = vmatprep.subr.mxu0 0.0
  %562 = vmatpush1.msra.mxu0 0.0
  %563 = vmatprep.subr.mxu0 0.0
  %564 = vmatpush1.msra.mxu0 0.0
  %565 = vmatprep.subr.mxu0 0.0
  %566 = vmatpush1.msra.mxu0 0.0
  %567 = vmatprep.subr.mxu0 0.0
  %568 = vmatpush1.msra.mxu0 0.0
  %569 = vmatprep.subr.mxu0 0.0
  %570 = vmatpush1.msra.mxu0 0.0
  %v571 = vand.u32 %v543, 4294901760
  %572 = vmatprep.subr.mxu0 %v571
  %v573 = vand.u32 %v542, 4294901760
  %574 = vmatpush1.msra.mxu0 %v573
  %v575 = vand.u32 %v513, 4294901760
  %576 = vmatprep.subr.mxu0 %v575
  %v577 = vand.u32 %v512, 4294901760
  %578 = vmatpush1.msra.mxu0 %v577
  %v579 = vand.u32 %v483, 4294901760
  %580 = vmatprep.subr.mxu0 %v579
  %v581 = vand.u32 %v482, 4294901760
  %582 = vmatpush1.msra.mxu0 %v581
  %v583 = vand.u32 %v453, 4294901760
  %584 = vmatprep.subr.mxu0 %v583
  %v585 = vand.u32 %v452, 4294901760
  %586 = vmatpush1.msra.mxu0 %v585
  %v587 = vand.u32 %v274, 4294901760
  %588 = vmatprep.subr.mxu0 %v587
  %v589 = vand.u32 %v273, 4294901760
  %590 = vmatpush1.msra.mxu0 %v589
  %v591 = vand.u32 %v423, 4294901760
  %592 = vmatprep.subr.mxu0 %v591
  %v593 = vand.u32 %v422, 4294901760
  %594 = vmatpush1.msra.mxu0 %v593
  %v595 = vand.u32 %v393, 4294901760
  %596 = vmatprep.subr.mxu0 %v595
  %v597 = vand.u32 %v392, 4294901760
  %598 = vmatpush1.msra.mxu0 %v597
  %v599 = vand.u32 %v363, 4294901760
  %600 = vmatprep.subr.mxu0 %v599
  %v601 = vand.u32 %v362, 4294901760
  %602 = vmatpush1.msra.mxu0 %v601
  %v603 = vand.u32 %v333, 4294901760
  %604 = vmatprep.subr.mxu0 %v603
  %v605 = vand.u32 %v332, 4294901760
  %606 = vmatpush1.msra.mxu0 %v605
  %607 = vmatprep.subr.mxu0 0.0
  %608 = vmatpush2.msra.mxu0 0.0
  %609 = vmatprep.subr.mxu0 0.0
  %610 = vmatpush2.msra.mxu0 0.0
  %611 = vmatprep.subr.mxu0 0.0
  %612 = vmatpush2.msra.mxu0 0.0
  %613 = vmatprep.subr.mxu0 0.0
  %614 = vmatpush2.msra.mxu0 0.0
  %615 = vmatprep.subr.mxu0 0.0
  %616 = vmatpush2.msra.mxu0 0.0
  %617 = vmatprep.subr.mxu0 0.0
  %618 = vmatpush2.msra.mxu0 0.0
  %619 = vmatprep.subr.mxu0 0.0
  %620 = vmatpush2.msra.mxu0 0.0
  %621 = vmatprep.subr.mxu0 0.0
  %622 = vmatpush2.msra.mxu0 0.0
  %623 = vmatprep.subr.mxu0 0.0
  %624 = vmatpush2.msra.mxu0 0.0
  %625 = vmatprep.subr.mxu0 0.0
  %626 = vmatpush2.msra.mxu0 0.0
  %627 = vmatprep.subr.mxu0 0.0
  %628 = vmatpush2.msra.mxu0 0.0
  %629 = vmatprep.subr.mxu0 0.0
  %630 = vmatpush2.msra.mxu0 0.0
  %631 = vmatprep.subr.mxu0 0.0
  %632 = vmatpush2.msra.mxu0 0.0
  %633 = vmatprep.subr.mxu0 0.0
  %634 = vmatpush2.msra.mxu0 0.0
  %635 = vmatprep.subr.mxu0 0.0
  %636 = vmatpush2.msra.mxu0 0.0
  %637 = vmatprep.subr.mxu0 0.0
  %638 = vmatpush2.msra.mxu0 0.0
  %639 = vmatprep.mubr.f32.mxu0 0.0
  %v640 = vand.u32 %v555, 4294901760
  %v641 = vsub.f32 %v555, %v640
  %v642 = vand.u32 %v641, 4294901760
  %v643 = vsub.f32 %v641, %v642
  %v644 = vand.u32 %v643, 4294901760
  %645 = vmatmul.mubr.f32.gmra.mxu0 %v644
  %v646 = vpop.f32.mrf.mxu0
  %v647 = vadd.f32 %v551, %v646
  %v648 = vpop.f32.mrf.mxu0
  %v649 = vadd.f32 %v551, %v648
  %650 = vdwg.mxu0
  %651 = vmatprep.subr.mxu0 0.0
  %652 = vmatpush1.msra.mxu0 0.0
  %653 = vmatprep.subr.mxu0 0.0
  %654 = vmatpush1.msra.mxu0 0.0
  %655 = vmatprep.subr.mxu0 0.0
  %656 = vmatpush1.msra.mxu0 0.0
  %657 = vmatprep.subr.mxu0 0.0
  %658 = vmatpush1.msra.mxu0 0.0
  %659 = vmatprep.subr.mxu0 0.0
  %660 = vmatpush1.msra.mxu0 0.0
  %661 = vmatprep.subr.mxu0 0.0
  %662 = vmatpush1.msra.mxu0 0.0
  %663 = vmatprep.subr.mxu0 0.0
  %664 = vmatpush1.msra.mxu0 0.0
  %v665 = vand.u32 %v543, 4294901760
  %v666 = vsub.f32 %v543, %v665
  %v667 = vand.u32 %v666, 4294901760
  %v668 = vsub.f32 %v666, %v667
  %v669 = vand.u32 %v668, 4294901760
  %670 = vmatprep.subr.mxu0 %v669
  %v671 = vand.u32 %v542, 4294901760
  %v672 = vsub.f32 %v542, %v671
  %v673 = vand.u32 %v672, 4294901760
  %v674 = vsub.f32 %v672, %v673
  %v675 = vand.u32 %v674, 4294901760
  %676 = vmatpush1.msra.mxu0 %v675
  %v677 = vand.u32 %v513, 4294901760
  %v678 = vsub.f32 %v513, %v677
  %v679 = vand.u32 %v678, 4294901760
  %v680 = vsub.f32 %v678, %v679
  %v681 = vand.u32 %v680, 4294901760
  %682 = vmatprep.subr.mxu0 %v681
  %v683 = vand.u32 %v512, 4294901760
  %v684 = vsub.f32 %v512, %v683
  %v685 = vand.u32 %v684, 4294901760
  %v686 = vsub.f32 %v684, %v685
  %v687 = vand.u32 %v686, 4294901760
  %688 = vmatpush1.msra.mxu0 %v687
  %v689 = vand.u32 %v483, 4294901760
  %v690 = vsub.f32 %v483, %v689
  %v691 = vand.u32 %v690, 4294901760
  %v692 = vsub.f32 %v690, %v691
  %v693 = vand.u32 %v692, 4294901760
  %694 = vmatprep.subr.mxu0 %v693
  %v695 = vand.u32 %v482, 4294901760
  %v696 = vsub.f32 %v482, %v695
  %v697 = vand.u32 %v696, 4294901760
  %v698 = vsub.f32 %v696, %v697
  %v699 = vand.u32 %v698, 4294901760
  %700 = vmatpush1.msra.mxu0 %v699
  %v701 = vand.u32 %v453, 4294901760
  %v702 = vsub.f32 %v453, %v701
  %v703 = vand.u32 %v702, 4294901760
  %v704 = vsub.f32 %v702, %v703
  %v705 = vand.u32 %v704, 4294901760
  %706 = vmatprep.subr.mxu0 %v705
  %v707 = vand.u32 %v452, 4294901760
  %v708 = vsub.f32 %v452, %v707
  %v709 = vand.u32 %v708, 4294901760
  %v710 = vsub.f32 %v708, %v709
  %v711 = vand.u32 %v710, 4294901760
  %712 = vmatpush1.msra.mxu0 %v711
  %v713 = vand.u32 %v274, 4294901760
  %v714 = vsub.f32 %v274, %v713
  %v715 = vand.u32 %v714, 4294901760
  %v716 = vsub.f32 %v714, %v715
  %v717 = vand.u32 %v716, 4294901760
  %718 = vmatprep.subr.mxu0 %v717
  %v719 = vand.u32 %v273, 4294901760
  %v720 = vsub.f32 %v273, %v719
  %v721 = vand.u32 %v720, 4294901760
  %v722 = vsub.f32 %v720, %v721
  %v723 = vand.u32 %v722, 4294901760
  %724 = vmatpush1.msra.mxu0 %v723
  %v725 = vand.u32 %v423, 4294901760
  %v726 = vsub.f32 %v423, %v725
  %v727 = vand.u32 %v726, 4294901760
  %v728 = vsub.f32 %v726, %v727
  %v729 = vand.u32 %v728, 4294901760
  %730 = vmatprep.subr.mxu0 %v729
  %v731 = vand.u32 %v422, 4294901760
  %v732 = vsub.f32 %v422, %v731
  %v733 = vand.u32 %v732, 4294901760
  %v734 = vsub.f32 %v732, %v733
  %v735 = vand.u32 %v734, 4294901760
  %736 = vmatpush1.msra.mxu0 %v735
  %v737 = vand.u32 %v393, 4294901760
  %v738 = vsub.f32 %v393, %v737
  %v739 = vand.u32 %v738, 4294901760
  %v740 = vsub.f32 %v738, %v739
  %v741 = vand.u32 %v740, 4294901760
  %742 = vmatprep.subr.mxu0 %v741
  %v743 = vand.u32 %v392, 4294901760
  %v744 = vsub.f32 %v392, %v743
  %v745 = vand.u32 %v744, 4294901760
  %v746 = vsub.f32 %v744, %v745
  %v747 = vand.u32 %v746, 4294901760
  %748 = vmatpush1.msra.mxu0 %v747
  %v749 = vand.u32 %v363, 4294901760
  %v750 = vsub.f32 %v363, %v749
  %v751 = vand.u32 %v750, 4294901760
  %v752 = vsub.f32 %v750, %v751
  %v753 = vand.u32 %v752, 4294901760
  %754 = vmatprep.subr.mxu0 %v753
  %v755 = vand.u32 %v362, 4294901760
  %v756 = vsub.f32 %v362, %v755
  %v757 = vand.u32 %v756, 4294901760
  %v758 = vsub.f32 %v756, %v757
  %v759 = vand.u32 %v758, 4294901760
  %760 = vmatpush1.msra.mxu0 %v759
  %v761 = vand.u32 %v333, 4294901760
  %v762 = vsub.f32 %v333, %v761
  %v763 = vand.u32 %v762, 4294901760
  %v764 = vsub.f32 %v762, %v763
  %v765 = vand.u32 %v764, 4294901760
  %766 = vmatprep.subr.mxu0 %v765
  %v767 = vand.u32 %v332, 4294901760
  %v768 = vsub.f32 %v332, %v767
  %v769 = vand.u32 %v768, 4294901760
  %v770 = vsub.f32 %v768, %v769
  %v771 = vand.u32 %v770, 4294901760
  %772 = vmatpush1.msra.mxu0 %v771
  %773 = vmatprep.subr.mxu0 0.0
  %774 = vmatpush2.msra.mxu0 0.0
  %775 = vmatprep.subr.mxu0 0.0
  %776 = vmatpush2.msra.mxu0 0.0
  %777 = vmatprep.subr.mxu0 0.0
  %778 = vmatpush2.msra.mxu0 0.0
  %779 = vmatprep.subr.mxu0 0.0
  %780 = vmatpush2.msra.mxu0 0.0
  %781 = vmatprep.subr.mxu0 0.0
  %782 = vmatpush2.msra.mxu0 0.0
  %783 = vmatprep.subr.mxu0 0.0
  %784 = vmatpush2.msra.mxu0 0.0
  %785 = vmatprep.subr.mxu0 0.0
  %786 = vmatpush2.msra.mxu0 0.0
  %787 = vmatprep.subr.mxu0 0.0
  %788 = vmatpush2.msra.mxu0 0.0
  %789 = vmatprep.subr.mxu0 0.0
  %790 = vmatpush2.msra.mxu0 0.0
  %791 = vmatprep.subr.mxu0 0.0
  %792 = vmatpush2.msra.mxu0 0.0
  %793 = vmatprep.subr.mxu0 0.0
  %794 = vmatpush2.msra.mxu0 0.0
  %795 = vmatprep.subr.mxu0 0.0
  %796 = vmatpush2.msra.mxu0 0.0
  %797 = vmatprep.subr.mxu0 0.0
  %798 = vmatpush2.msra.mxu0 0.0
  %799 = vmatprep.subr.mxu0 0.0
  %800 = vmatpush2.msra.mxu0 0.0
  %801 = vmatprep.subr.mxu0 0.0
  %802 = vmatpush2.msra.mxu0 0.0
  %803 = vmatprep.subr.mxu0 0.0
  %804 = vmatpush2.msra.mxu0 0.0
  %805 = vmatprep.mubr.f32.mxu0 0.0
  %v806 = vand.u32 %v555, 4294901760
  %807 = vmatmul.mubr.f32.gmra.mxu0 %v806
  %v808 = vpop.f32.mrf.mxu0
  %v809 = vadd.f32 %v647, %v808
  %v810 = vpop.f32.mrf.mxu0
  %v811 = vadd.f32 %v649, %v810
  %812 = vdwg.mxu0
  %813 = vmatprep.subr.mxu0 0.0
  %814 = vmatpush1.msra.mxu0 0.0
  %815 = vmatprep.subr.mxu0 0.0
  %816 = vmatpush1.msra.mxu0 0.0
  %817 = vmatprep.subr.mxu0 0.0
  %818 = vmatpush1.msra.mxu0 0.0
  %819 = vmatprep.subr.mxu0 0.0
  %820 = vmatpush1.msra.mxu0 0.0
  %821 = vmatprep.subr.mxu0 0.0
  %822 = vmatpush1.msra.mxu0 0.0
  %823 = vmatprep.subr.mxu0 0.0
  %824 = vmatpush1.msra.mxu0 0.0
  %825 = vmatprep.subr.mxu0 0.0
  %826 = vmatpush1.msra.mxu0 0.0
  %v827 = vand.u32 %v543, 4294901760
  %v828 = vsub.f32 %v543, %v827
  %829 = vmatprep.subr.mxu0 %v828
  %v830 = vand.u32 %v542, 4294901760
  %v831 = vsub.f32 %v542, %v830
  %832 = vmatpush1.msra.mxu0 %v831
  %v833 = vand.u32 %v513, 4294901760
  %v834 = vsub.f32 %v513, %v833
  %835 = vmatprep.subr.mxu0 %v834
  %v836 = vand.u32 %v512, 4294901760
  %v837 = vsub.f32 %v512, %v836
  %838 = vmatpush1.msra.mxu0 %v837
  %v839 = vand.u32 %v483, 4294901760
  %v840 = vsub.f32 %v483, %v839
  %841 = vmatprep.subr.mxu0 %v840
  %v842 = vand.u32 %v482, 4294901760
  %v843 = vsub.f32 %v482, %v842
  %844 = vmatpush1.msra.mxu0 %v843
  %v845 = vand.u32 %v453, 4294901760
  %v846 = vsub.f32 %v453, %v845
  %847 = vmatprep.subr.mxu0 %v846
  %v848 = vand.u32 %v452, 4294901760
  %v849 = vsub.f32 %v452, %v848
  %850 = vmatpush1.msra.mxu0 %v849
  %v851 = vand.u32 %v274, 4294901760
  %v852 = vsub.f32 %v274, %v851
  %853 = vmatprep.subr.mxu0 %v852
  %v854 = vand.u32 %v273, 4294901760
  %v855 = vsub.f32 %v273, %v854
  %856 = vmatpush1.msra.mxu0 %v855
  %v857 = vand.u32 %v423, 4294901760
  %v858 = vsub.f32 %v423, %v857
  %859 = vmatprep.subr.mxu0 %v858
  %v860 = vand.u32 %v422, 4294901760
  %v861 = vsub.f32 %v422, %v860
  %862 = vmatpush1.msra.mxu0 %v861
  %v863 = vand.u32 %v393, 4294901760
  %v864 = vsub.f32 %v393, %v863
  %865 = vmatprep.subr.mxu0 %v864
  %v866 = vand.u32 %v392, 4294901760
  %v867 = vsub.f32 %v392, %v866
  %868 = vmatpush1.msra.mxu0 %v867
  %v869 = vand.u32 %v363, 4294901760
  %v870 = vsub.f32 %v363, %v869
  %871 = vmatprep.subr.mxu0 %v870
  %v872 = vand.u32 %v362, 4294901760
  %v873 = vsub.f32 %v362, %v872
  %874 = vmatpush1.msra.mxu0 %v873
  %v875 = vand.u32 %v333, 4294901760
  %v876 = vsub.f32 %v333, %v875
  %877 = vmatprep.subr.mxu0 %v876
  %v878 = vand.u32 %v332, 4294901760
  %v879 = vsub.f32 %v332, %v878
  %880 = vmatpush1.msra.mxu0 %v879
  %881 = vmatprep.subr.mxu0 0.0
  %882 = vmatpush2.msra.mxu0 0.0
  %883 = vmatprep.subr.mxu0 0.0
  %884 = vmatpush2.msra.mxu0 0.0
  %885 = vmatprep.subr.mxu0 0.0
  %886 = vmatpush2.msra.mxu0 0.0
  %887 = vmatprep.subr.mxu0 0.0
  %888 = vmatpush2.msra.mxu0 0.0
  %889 = vmatprep.subr.mxu0 0.0
  %890 = vmatpush2.msra.mxu0 0.0
  %891 = vmatprep.subr.mxu0 0.0
  %892 = vmatpush2.msra.mxu0 0.0
  %893 = vmatprep.subr.mxu0 0.0
  %894 = vmatpush2.msra.mxu0 0.0
  %895 = vmatprep.subr.mxu0 0.0
  %896 = vmatpush2.msra.mxu0 0.0
  %897 = vmatprep.subr.mxu0 0.0
  %898 = vmatpush2.msra.mxu0 0.0
  %899 = vmatprep.subr.mxu0 0.0
  %900 = vmatpush2.msra.mxu0 0.0
  %901 = vmatprep.subr.mxu0 0.0
  %902 = vmatpush2.msra.mxu0 0.0
  %903 = vmatprep.subr.mxu0 0.0
  %904 = vmatpush2.msra.mxu0 0.0
  %905 = vmatprep.subr.mxu0 0.0
  %906 = vmatpush2.msra.mxu0 0.0
  %907 = vmatprep.subr.mxu0 0.0
  %908 = vmatpush2.msra.mxu0 0.0
  %909 = vmatprep.subr.mxu0 0.0
  %910 = vmatpush2.msra.mxu0 0.0
  %911 = vmatprep.subr.mxu0 0.0
  %912 = vmatpush2.msra.mxu0 0.0
  %913 = vmatprep.mubr.f32.mxu0 0.0
  %v914 = vand.u32 %v555, 4294901760
  %v915 = vsub.f32 %v555, %v914
  %916 = vmatmul.mubr.f32.gmra.mxu0 %v915
  %v917 = vpop.f32.mrf.mxu0
  %v918 = vadd.f32 %v809, %v917
  %v919 = vpop.f32.mrf.mxu0
  %v920 = vadd.f32 %v811, %v919
  %921 = vdwg.mxu0
  %922 = vmatprep.subr.mxu0 0.0
  %923 = vmatpush1.msra.mxu0 0.0
  %924 = vmatprep.subr.mxu0 0.0
  %925 = vmatpush1.msra.mxu0 0.0
  %926 = vmatprep.subr.mxu0 0.0
  %927 = vmatpush1.msra.mxu0 0.0
  %928 = vmatprep.subr.mxu0 0.0
  %929 = vmatpush1.msra.mxu0 0.0
  %930 = vmatprep.subr.mxu0 0.0
  %931 = vmatpush1.msra.mxu0 0.0
  %932 = vmatprep.subr.mxu0 0.0
  %933 = vmatpush1.msra.mxu0 0.0
  %934 = vmatprep.subr.mxu0 0.0
  %935 = vmatpush1.msra.mxu0 0.0
  %v936 = vand.u32 %v543, 4294901760
  %937 = vmatprep.subr.mxu0 %v936
  %v938 = vand.u32 %v542, 4294901760
  %939 = vmatpush1.msra.mxu0 %v938
  %v940 = vand.u32 %v513, 4294901760
  %941 = vmatprep.subr.mxu0 %v940
  %v942 = vand.u32 %v512, 4294901760
  %943 = vmatpush1.msra.mxu0 %v942
  %v944 = vand.u32 %v483, 4294901760
  %945 = vmatprep.subr.mxu0 %v944
  %v946 = vand.u32 %v482, 4294901760
  %947 = vmatpush1.msra.mxu0 %v946
  %v948 = vand.u32 %v453, 4294901760
  %949 = vmatprep.subr.mxu0 %v948
  %v950 = vand.u32 %v452, 4294901760
  %951 = vmatpush1.msra.mxu0 %v950
  %v952 = vand.u32 %v274, 4294901760
  %953 = vmatprep.subr.mxu0 %v952
  %v954 = vand.u32 %v273, 4294901760
  %955 = vmatpush1.msra.mxu0 %v954
  %v956 = vand.u32 %v423, 4294901760
  %957 = vmatprep.subr.mxu0 %v956
  %v958 = vand.u32 %v422, 4294901760
  %959 = vmatpush1.msra.mxu0 %v958
  %v960 = vand.u32 %v393, 4294901760
  %961 = vmatprep.subr.mxu0 %v960
  %v962 = vand.u32 %v392, 4294901760
  %963 = vmatpush1.msra.mxu0 %v962
  %v964 = vand.u32 %v363, 4294901760
  %965 = vmatprep.subr.mxu0 %v964
  %v966 = vand.u32 %v362, 4294901760
  %967 = vmatpush1.msra.mxu0 %v966
  %v968 = vand.u32 %v333, 4294901760
  %969 = vmatprep.subr.mxu0 %v968
  %v970 = vand.u32 %v332, 4294901760
  %971 = vmatpush1.msra.mxu0 %v970
  %972 = vmatprep.subr.mxu0 0.0
  %973 = vmatpush2.msra.mxu0 0.0
  %974 = vmatprep.subr.mxu0 0.0
  %975 = vmatpush2.msra.mxu0 0.0
  %976 = vmatprep.subr.mxu0 0.0
  %977 = vmatpush2.msra.mxu0 0.0
  %978 = vmatprep.subr.mxu0 0.0
  %979 = vmatpush2.msra.mxu0 0.0
  %980 = vmatprep.subr.mxu0 0.0
  %981 = vmatpush2.msra.mxu0 0.0
  %982 = vmatprep.subr.mxu0 0.0
  %983 = vmatpush2.msra.mxu0 0.0
  %984 = vmatprep.subr.mxu0 0.0
  %985 = vmatpush2.msra.mxu0 0.0
  %986 = vmatprep.subr.mxu0 0.0
  %987 = vmatpush2.msra.mxu0 0.0
  %988 = vmatprep.subr.mxu0 0.0
  %989 = vmatpush2.msra.mxu0 0.0
  %990 = vmatprep.subr.mxu0 0.0
  %991 = vmatpush2.msra.mxu0 0.0
  %992 = vmatprep.subr.mxu0 0.0
  %993 = vmatpush2.msra.mxu0 0.0
  %994 = vmatprep.subr.mxu0 0.0
  %995 = vmatpush2.msra.mxu0 0.0
  %996 = vmatprep.subr.mxu0 0.0
  %997 = vmatpush2.msra.mxu0 0.0
  %998 = vmatprep.subr.mxu0 0.0
  %999 = vmatpush2.msra.mxu0 0.0
  %1000 = vmatprep.subr.mxu0 0.0
  %1001 = vmatpush2.msra.mxu0 0.0
  %1002 = vmatprep.subr.mxu0 0.0
  %1003 = vmatpush2.msra.mxu0 0.0
  %1004 = vmatprep.mubr.f32.mxu0 0.0
  %v1005 = vand.u32 %v555, 4294901760
  %v1006 = vsub.f32 %v555, %v1005
  %v1007 = vand.u32 %v1006, 4294901760
  %1008 = vmatmul.mubr.f32.gmra.mxu0 %v1007
  %v1009 = vpop.f32.mrf.mxu0
  %v1010 = vadd.f32 %v918, %v1009
  %v1011 = vpop.f32.mrf.mxu0
  %v1012 = vadd.f32 %v920, %v1011
  %1013 = vdwg.mxu0
  %1014 = vmatprep.subr.mxu0 0.0
  %1015 = vmatpush1.msra.mxu0 0.0
  %1016 = vmatprep.subr.mxu0 0.0
  %1017 = vmatpush1.msra.mxu0 0.0
  %1018 = vmatprep.subr.mxu0 0.0
  %1019 = vmatpush1.msra.mxu0 0.0
  %1020 = vmatprep.subr.mxu0 0.0
  %1021 = vmatpush1.msra.mxu0 0.0
  %1022 = vmatprep.subr.mxu0 0.0
  %1023 = vmatpush1.msra.mxu0 0.0
  %1024 = vmatprep.subr.mxu0 0.0
  %1025 = vmatpush1.msra.mxu0 0.0
  %1026 = vmatprep.subr.mxu0 0.0
  %1027 = vmatpush1.msra.mxu0 0.0
  %v1028 = vand.u32 %v543, 4294901760
  %v1029 = vsub.f32 %v543, %v1028
  %v1030 = vand.u32 %v1029, 4294901760
  %1031 = vmatprep.subr.mxu0 %v1030
  %v1032 = vand.u32 %v542, 4294901760
  %v1033 = vsub.f32 %v542, %v1032
  %v1034 = vand.u32 %v1033, 4294901760
  %1035 = vmatpush1.msra.mxu0 %v1034
  %v1036 = vand.u32 %v513, 4294901760
  %v1037 = vsub.f32 %v513, %v1036
  %v1038 = vand.u32 %v1037, 4294901760
  %1039 = vmatprep.subr.mxu0 %v1038
  %v1040 = vand.u32 %v512, 4294901760
  %v1041 = vsub.f32 %v512, %v1040
  %v1042 = vand.u32 %v1041, 4294901760
  %1043 = vmatpush1.msra.mxu0 %v1042
  %v1044 = vand.u32 %v483, 4294901760
  %v1045 = vsub.f32 %v483, %v1044
  %v1046 = vand.u32 %v1045, 4294901760
  %1047 = vmatprep.subr.mxu0 %v1046
  %v1048 = vand.u32 %v482, 4294901760
  %v1049 = vsub.f32 %v482, %v1048
  %v1050 = vand.u32 %v1049, 4294901760
  %1051 = vmatpush1.msra.mxu0 %v1050
  %v1052 = vand.u32 %v453, 4294901760
  %v1053 = vsub.f32 %v453, %v1052
  %v1054 = vand.u32 %v1053, 4294901760
  %1055 = vmatprep.subr.mxu0 %v1054
  %v1056 = vand.u32 %v452, 4294901760
  %v1057 = vsub.f32 %v452, %v1056
  %v1058 = vand.u32 %v1057, 4294901760
  %1059 = vmatpush1.msra.mxu0 %v1058
  %v1060 = vand.u32 %v274, 4294901760
  %v1061 = vsub.f32 %v274, %v1060
  %v1062 = vand.u32 %v1061, 4294901760
  %1063 = vmatprep.subr.mxu0 %v1062
  %v1064 = vand.u32 %v273, 4294901760
  %v1065 = vsub.f32 %v273, %v1064
  %v1066 = vand.u32 %v1065, 4294901760
  %1067 = vmatpush1.msra.mxu0 %v1066
  %v1068 = vand.u32 %v423, 4294901760
  %v1069 = vsub.f32 %v423, %v1068
  %v1070 = vand.u32 %v1069, 4294901760
  %1071 = vmatprep.subr.mxu0 %v1070
  %v1072 = vand.u32 %v422, 4294901760
  %v1073 = vsub.f32 %v422, %v1072
  %v1074 = vand.u32 %v1073, 4294901760
  %1075 = vmatpush1.msra.mxu0 %v1074
  %v1076 = vand.u32 %v393, 4294901760
  %v1077 = vsub.f32 %v393, %v1076
  %v1078 = vand.u32 %v1077, 4294901760
  %1079 = vmatprep.subr.mxu0 %v1078
  %v1080 = vand.u32 %v392, 4294901760
  %v1081 = vsub.f32 %v392, %v1080
  %v1082 = vand.u32 %v1081, 4294901760
  %1083 = vmatpush1.msra.mxu0 %v1082
  %v1084 = vand.u32 %v363, 4294901760
  %v1085 = vsub.f32 %v363, %v1084
  %v1086 = vand.u32 %v1085, 4294901760
  %1087 = vmatprep.subr.mxu0 %v1086
  %v1088 = vand.u32 %v362, 4294901760
  %v1089 = vsub.f32 %v362, %v1088
  %v1090 = vand.u32 %v1089, 4294901760
  %1091 = vmatpush1.msra.mxu0 %v1090
  %v1092 = vand.u32 %v333, 4294901760
  %v1093 = vsub.f32 %v333, %v1092
  %v1094 = vand.u32 %v1093, 4294901760
  %1095 = vmatprep.subr.mxu0 %v1094
  %v1096 = vand.u32 %v332, 4294901760
  %v1097 = vsub.f32 %v332, %v1096
  %v1098 = vand.u32 %v1097, 4294901760
  %1099 = vmatpush1.msra.mxu0 %v1098
  %1100 = vmatprep.subr.mxu0 0.0
  %1101 = vmatpush2.msra.mxu0 0.0
  %1102 = vmatprep.subr.mxu0 0.0
  %1103 = vmatpush2.msra.mxu0 0.0
  %1104 = vmatprep.subr.mxu0 0.0
  %1105 = vmatpush2.msra.mxu0 0.0
  %1106 = vmatprep.subr.mxu0 0.0
  %1107 = vmatpush2.msra.mxu0 0.0
  %1108 = vmatprep.subr.mxu0 0.0
  %1109 = vmatpush2.msra.mxu0 0.0
  %1110 = vmatprep.subr.mxu0 0.0
  %1111 = vmatpush2.msra.mxu0 0.0
  %1112 = vmatprep.subr.mxu0 0.0
  %1113 = vmatpush2.msra.mxu0 0.0
  %1114 = vmatprep.subr.mxu0 0.0
  %1115 = vmatpush2.msra.mxu0 0.0
  %1116 = vmatprep.subr.mxu0 0.0
  %1117 = vmatpush2.msra.mxu0 0.0
  %1118 = vmatprep.subr.mxu0 0.0
  %1119 = vmatpush2.msra.mxu0 0.0
  %1120 = vmatprep.subr.mxu0 0.0
  %1121 = vmatpush2.msra.mxu0 0.0
  %1122 = vmatprep.subr.mxu0 0.0
  %1123 = vmatpush2.msra.mxu0 0.0
  %1124 = vmatprep.subr.mxu0 0.0
  %1125 = vmatpush2.msra.mxu0 0.0
  %1126 = vmatprep.subr.mxu0 0.0
  %1127 = vmatpush2.msra.mxu0 0.0
  %1128 = vmatprep.subr.mxu0 0.0
  %1129 = vmatpush2.msra.mxu0 0.0
  %1130 = vmatprep.subr.mxu0 0.0
  %1131 = vmatpush2.msra.mxu0 0.0
  %1132 = vmatprep.mubr.f32.mxu0 0.0
  %v1133 = vand.u32 %v555, 4294901760
  %1134 = vmatmul.mubr.f32.gmra.mxu0 %v1133
  %v1135 = vpop.f32.mrf.mxu0
  %v1136 = vadd.f32 %v1010, %v1135
  %v1137 = vpop.f32.mrf.mxu0
  %v1138 = vadd.f32 %v1012, %v1137
  %1139 = vdwg.mxu0
  %1140 = vmatprep.subr.mxu0 0.0
  %1141 = vmatpush1.msra.mxu0 0.0
  %1142 = vmatprep.subr.mxu0 0.0
  %1143 = vmatpush1.msra.mxu0 0.0
  %1144 = vmatprep.subr.mxu0 0.0
  %1145 = vmatpush1.msra.mxu0 0.0
  %1146 = vmatprep.subr.mxu0 0.0
  %1147 = vmatpush1.msra.mxu0 0.0
  %1148 = vmatprep.subr.mxu0 0.0
  %1149 = vmatpush1.msra.mxu0 0.0
  %1150 = vmatprep.subr.mxu0 0.0
  %1151 = vmatpush1.msra.mxu0 0.0
  %1152 = vmatprep.subr.mxu0 0.0
  %1153 = vmatpush1.msra.mxu0 0.0
  %v1154 = vand.u32 %v543, 4294901760
  %1155 = vmatprep.subr.mxu0 %v1154
  %v1156 = vand.u32 %v542, 4294901760
  %1157 = vmatpush1.msra.mxu0 %v1156
  %v1158 = vand.u32 %v513, 4294901760
  %1159 = vmatprep.subr.mxu0 %v1158
  %v1160 = vand.u32 %v512, 4294901760
  %1161 = vmatpush1.msra.mxu0 %v1160
  %v1162 = vand.u32 %v483, 4294901760
  %1163 = vmatprep.subr.mxu0 %v1162
  %v1164 = vand.u32 %v482, 4294901760
  %1165 = vmatpush1.msra.mxu0 %v1164
  %v1166 = vand.u32 %v453, 4294901760
  %1167 = vmatprep.subr.mxu0 %v1166
  %v1168 = vand.u32 %v452, 4294901760
  %1169 = vmatpush1.msra.mxu0 %v1168
  %v1170 = vand.u32 %v274, 4294901760
  %1171 = vmatprep.subr.mxu0 %v1170
  %v1172 = vand.u32 %v273, 4294901760
  %1173 = vmatpush1.msra.mxu0 %v1172
  %v1174 = vand.u32 %v423, 4294901760
  %1175 = vmatprep.subr.mxu0 %v1174
  %v1176 = vand.u32 %v422, 4294901760
  %1177 = vmatpush1.msra.mxu0 %v1176
  %v1178 = vand.u32 %v393, 4294901760
  %1179 = vmatprep.subr.mxu0 %v1178
  %v1180 = vand.u32 %v392, 4294901760
  %1181 = vmatpush1.msra.mxu0 %v1180
  %v1182 = vand.u32 %v363, 4294901760
  %1183 = vmatprep.subr.mxu0 %v1182
  %v1184 = vand.u32 %v362, 4294901760
  %1185 = vmatpush1.msra.mxu0 %v1184
  %v1186 = vand.u32 %v333, 4294901760
  %1187 = vmatprep.subr.mxu0 %v1186
  %v1188 = vand.u32 %v332, 4294901760
  %1189 = vmatpush1.msra.mxu0 %v1188
  %1190 = vmatprep.subr.mxu0 0.0
  %1191 = vmatpush2.msra.mxu0 0.0
  %1192 = vmatprep.subr.mxu0 0.0
  %1193 = vmatpush2.msra.mxu0 0.0
  %1194 = vmatprep.subr.mxu0 0.0
  %1195 = vmatpush2.msra.mxu0 0.0
  %1196 = vmatprep.subr.mxu0 0.0
  %1197 = vmatpush2.msra.mxu0 0.0
  %1198 = vmatprep.subr.mxu0 0.0
  %1199 = vmatpush2.msra.mxu0 0.0
  %1200 = vmatprep.subr.mxu0 0.0
  %1201 = vmatpush2.msra.mxu0 0.0
  %1202 = vmatprep.subr.mxu0 0.0
  %1203 = vmatpush2.msra.mxu0 0.0
  %1204 = vmatprep.subr.mxu0 0.0
  %1205 = vmatpush2.msra.mxu0 0.0
  %1206 = vmatprep.subr.mxu0 0.0
  %1207 = vmatpush2.msra.mxu0 0.0
  %1208 = vmatprep.subr.mxu0 0.0
  %1209 = vmatpush2.msra.mxu0 0.0
  %1210 = vmatprep.subr.mxu0 0.0
  %1211 = vmatpush2.msra.mxu0 0.0
  %1212 = vmatprep.subr.mxu0 0.0
  %1213 = vmatpush2.msra.mxu0 0.0
  %1214 = vmatprep.subr.mxu0 0.0
  %1215 = vmatpush2.msra.mxu0 0.0
  %1216 = vmatprep.subr.mxu0 0.0
  %1217 = vmatpush2.msra.mxu0 0.0
  %1218 = vmatprep.subr.mxu0 0.0
  %1219 = vmatpush2.msra.mxu0 0.0
  %1220 = vmatprep.subr.mxu0 0.0
  %1221 = vmatpush2.msra.mxu0 0.0
  %1222 = vmatprep.mubr.f32.mxu0 0.0
  %v1223 = vand.u32 %v555, 4294901760
  %1224 = vmatmul.mubr.f32.gmra.mxu0 %v1223
  %v1225 = vpop.f32.mrf.mxu0
  %v1226 = vadd.f32 %v1136, %v1225
  %v1227 = vpop.f32.mrf.mxu0
  %v1228 = vadd.f32 %v1138, %v1227
  %1229 = vdwg.mxu0
  %1230 = vmatprep.subr.mxu0 0.0
  %1231 = vmatpush1.msra.mxu0 0.0
  %1232 = vmatprep.subr.mxu0 0.0
  %1233 = vmatpush1.msra.mxu0 0.0
  %1234 = vmatprep.subr.mxu0 0.0
  %1235 = vmatpush1.msra.mxu0 0.0
  %1236 = vmatprep.subr.mxu0 0.0
  %1237 = vmatpush1.msra.mxu0 0.0
  %1238 = vmatprep.subr.mxu0 0.0
  %1239 = vmatpush1.msra.mxu0 0.0
  %1240 = vmatprep.subr.mxu0 0.0
  %1241 = vmatpush1.msra.mxu0 0.0
  %1242 = vmatprep.subr.mxu0 0.0
  %1243 = vmatpush1.msra.mxu0 0.0
  %v1244 = vand.u32 %v545, 4294901760
  %1245 = vmatprep.subr.mxu0 %v1244
  %v1246 = vand.u32 %v544, 4294901760
  %1247 = vmatpush1.msra.mxu0 %v1246
  %v1248 = vand.u32 %v515, 4294901760
  %1249 = vmatprep.subr.mxu0 %v1248
  %v1250 = vand.u32 %v514, 4294901760
  %1251 = vmatpush1.msra.mxu0 %v1250
  %v1252 = vand.u32 %v485, 4294901760
  %1253 = vmatprep.subr.mxu0 %v1252
  %v1254 = vand.u32 %v484, 4294901760
  %1255 = vmatpush1.msra.mxu0 %v1254
  %v1256 = vand.u32 %v455, 4294901760
  %1257 = vmatprep.subr.mxu0 %v1256
  %v1258 = vand.u32 %v454, 4294901760
  %1259 = vmatpush1.msra.mxu0 %v1258
  %v1260 = vand.u32 %v304, 4294901760
  %1261 = vmatprep.subr.mxu0 %v1260
  %v1262 = vand.u32 %v303, 4294901760
  %1263 = vmatpush1.msra.mxu0 %v1262
  %v1264 = vand.u32 %v425, 4294901760
  %1265 = vmatprep.subr.mxu0 %v1264
  %v1266 = vand.u32 %v424, 4294901760
  %1267 = vmatpush1.msra.mxu0 %v1266
  %v1268 = vand.u32 %v395, 4294901760
  %1269 = vmatprep.subr.mxu0 %v1268
  %v1270 = vand.u32 %v394, 4294901760
  %1271 = vmatpush1.msra.mxu0 %v1270
  %v1272 = vand.u32 %v365, 4294901760
  %1273 = vmatprep.subr.mxu0 %v1272
  %v1274 = vand.u32 %v364, 4294901760
  %1275 = vmatpush1.msra.mxu0 %v1274
  %v1276 = vand.u32 %v335, 4294901760
  %1277 = vmatprep.subr.mxu0 %v1276
  %v1278 = vand.u32 %v334, 4294901760
  %1279 = vmatpush1.msra.mxu0 %v1278
  %1280 = vmatprep.subr.mxu0 0.0
  %1281 = vmatpush2.msra.mxu0 0.0
  %1282 = vmatprep.subr.mxu0 0.0
  %1283 = vmatpush2.msra.mxu0 0.0
  %1284 = vmatprep.subr.mxu0 0.0
  %1285 = vmatpush2.msra.mxu0 0.0
  %1286 = vmatprep.subr.mxu0 0.0
  %1287 = vmatpush2.msra.mxu0 0.0
  %1288 = vmatprep.subr.mxu0 0.0
  %1289 = vmatpush2.msra.mxu0 0.0
  %1290 = vmatprep.subr.mxu0 0.0
  %1291 = vmatpush2.msra.mxu0 0.0
  %1292 = vmatprep.subr.mxu0 0.0
  %1293 = vmatpush2.msra.mxu0 0.0
  %1294 = vmatprep.subr.mxu0 0.0
  %1295 = vmatpush2.msra.mxu0 0.0
  %1296 = vmatprep.subr.mxu0 0.0
  %1297 = vmatpush2.msra.mxu0 0.0
  %1298 = vmatprep.subr.mxu0 0.0
  %1299 = vmatpush2.msra.mxu0 0.0
  %1300 = vmatprep.subr.mxu0 0.0
  %1301 = vmatpush2.msra.mxu0 0.0
  %1302 = vmatprep.subr.mxu0 0.0
  %1303 = vmatpush2.msra.mxu0 0.0
  %1304 = vmatprep.subr.mxu0 0.0
  %1305 = vmatpush2.msra.mxu0 0.0
  %1306 = vmatprep.subr.mxu0 0.0
  %1307 = vmatpush2.msra.mxu0 0.0
  %1308 = vmatprep.subr.mxu0 0.0
  %1309 = vmatpush2.msra.mxu0 0.0
  %1310 = vmatprep.subr.mxu0 0.0
  %1311 = vmatpush2.msra.mxu0 0.0
  %1312 = vmatprep.mubr.f32.mxu0 0.0
  %v1313 = vand.u32 %v555, 4294901760
  %v1314 = vsub.f32 %v555, %v1313
  %v1315 = vand.u32 %v1314, 4294901760
  %v1316 = vsub.f32 %v1314, %v1315
  %v1317 = vand.u32 %v1316, 4294901760
  %1318 = vmatmul.mubr.f32.gmra.mxu0 %v1317
  %v1319 = vpop.f32.mrf.mxu0
  %v1320 = vadd.f32 %v551, %v1319
  %v1321 = vpop.f32.mrf.mxu0
  %v1322 = vadd.f32 %v551, %v1321
  %1323 = vdwg.mxu0
  %1324 = vmatprep.subr.mxu0 0.0
  %1325 = vmatpush1.msra.mxu0 0.0
  %1326 = vmatprep.subr.mxu0 0.0
  %1327 = vmatpush1.msra.mxu0 0.0
  %1328 = vmatprep.subr.mxu0 0.0
  %1329 = vmatpush1.msra.mxu0 0.0
  %1330 = vmatprep.subr.mxu0 0.0
  %1331 = vmatpush1.msra.mxu0 0.0
  %1332 = vmatprep.subr.mxu0 0.0
  %1333 = vmatpush1.msra.mxu0 0.0
  %1334 = vmatprep.subr.mxu0 0.0
  %1335 = vmatpush1.msra.mxu0 0.0
  %1336 = vmatprep.subr.mxu0 0.0
  %1337 = vmatpush1.msra.mxu0 0.0
  %v1338 = vand.u32 %v545, 4294901760
  %v1339 = vsub.f32 %v545, %v1338
  %v1340 = vand.u32 %v1339, 4294901760
  %v1341 = vsub.f32 %v1339, %v1340
  %v1342 = vand.u32 %v1341, 4294901760
  %1343 = vmatprep.subr.mxu0 %v1342
  %v1344 = vand.u32 %v544, 4294901760
  %v1345 = vsub.f32 %v544, %v1344
  %v1346 = vand.u32 %v1345, 4294901760
  %v1347 = vsub.f32 %v1345, %v1346
  %v1348 = vand.u32 %v1347, 4294901760
  %1349 = vmatpush1.msra.mxu0 %v1348
  %v1350 = vand.u32 %v515, 4294901760
  %v1351 = vsub.f32 %v515, %v1350
  %v1352 = vand.u32 %v1351, 4294901760
  %v1353 = vsub.f32 %v1351, %v1352
  %v1354 = vand.u32 %v1353, 4294901760
  %1355 = vmatprep.subr.mxu0 %v1354
  %v1356 = vand.u32 %v514, 4294901760
  %v1357 = vsub.f32 %v514, %v1356
  %v1358 = vand.u32 %v1357, 4294901760
  %v1359 = vsub.f32 %v1357, %v1358
  %v1360 = vand.u32 %v1359, 4294901760
  %1361 = vmatpush1.msra.mxu0 %v1360
  %v1362 = vand.u32 %v485, 4294901760
  %v1363 = vsub.f32 %v485, %v1362
  %v1364 = vand.u32 %v1363, 4294901760
  %v1365 = vsub.f32 %v1363, %v1364
  %v1366 = vand.u32 %v1365, 4294901760
  %1367 = vmatprep.subr.mxu0 %v1366
  %v1368 = vand.u32 %v484, 4294901760
  %v1369 = vsub.f32 %v484, %v1368
  %v1370 = vand.u32 %v1369, 4294901760
  %v1371 = vsub.f32 %v1369, %v1370
  %v1372 = vand.u32 %v1371, 4294901760
  %1373 = vmatpush1.msra.mxu0 %v1372
  %v1374 = vand.u32 %v455, 4294901760
  %v1375 = vsub.f32 %v455, %v1374
  %v1376 = vand.u32 %v1375, 4294901760
  %v1377 = vsub.f32 %v1375, %v1376
  %v1378 = vand.u32 %v1377, 4294901760
  %1379 = vmatprep.subr.mxu0 %v1378
  %v1380 = vand.u32 %v454, 4294901760
  %v1381 = vsub.f32 %v454, %v1380
  %v1382 = vand.u32 %v1381, 4294901760
  %v1383 = vsub.f32 %v1381, %v1382
  %v1384 = vand.u32 %v1383, 4294901760
  %1385 = vmatpush1.msra.mxu0 %v1384
  %v1386 = vand.u32 %v304, 4294901760
  %v1387 = vsub.f32 %v304, %v1386
  %v1388 = vand.u32 %v1387, 4294901760
  %v1389 = vsub.f32 %v1387, %v1388
  %v1390 = vand.u32 %v1389, 4294901760
  %1391 = vmatprep.subr.mxu0 %v1390
  %v1392 = vand.u32 %v303, 4294901760
  %v1393 = vsub.f32 %v303, %v1392
  %v1394 = vand.u32 %v1393, 4294901760
  %v1395 = vsub.f32 %v1393, %v1394
  %v1396 = vand.u32 %v1395, 4294901760
  %1397 = vmatpush1.msra.mxu0 %v1396
  %v1398 = vand.u32 %v425, 4294901760
  %v1399 = vsub.f32 %v425, %v1398
  %v1400 = vand.u32 %v1399, 4294901760
  %v1401 = vsub.f32 %v1399, %v1400
  %v1402 = vand.u32 %v1401, 4294901760
  %1403 = vmatprep.subr.mxu0 %v1402
  %v1404 = vand.u32 %v424, 4294901760
  %v1405 = vsub.f32 %v424, %v1404
  %v1406 = vand.u32 %v1405, 4294901760
  %v1407 = vsub.f32 %v1405, %v1406
  %v1408 = vand.u32 %v1407, 4294901760
  %1409 = vmatpush1.msra.mxu0 %v1408
  %v1410 = vand.u32 %v395, 4294901760
  %v1411 = vsub.f32 %v395, %v1410
  %v1412 = vand.u32 %v1411, 4294901760
  %v1413 = vsub.f32 %v1411, %v1412
  %v1414 = vand.u32 %v1413, 4294901760
  %1415 = vmatprep.subr.mxu0 %v1414
  %v1416 = vand.u32 %v394, 4294901760
  %v1417 = vsub.f32 %v394, %v1416
  %v1418 = vand.u32 %v1417, 4294901760
  %v1419 = vsub.f32 %v1417, %v1418
  %v1420 = vand.u32 %v1419, 4294901760
  %1421 = vmatpush1.msra.mxu0 %v1420
  %v1422 = vand.u32 %v365, 4294901760
  %v1423 = vsub.f32 %v365, %v1422
  %v1424 = vand.u32 %v1423, 4294901760
  %v1425 = vsub.f32 %v1423, %v1424
  %v1426 = vand.u32 %v1425, 4294901760
  %1427 = vmatprep.subr.mxu0 %v1426
  %v1428 = vand.u32 %v364, 4294901760
  %v1429 = vsub.f32 %v364, %v1428
  %v1430 = vand.u32 %v1429, 4294901760
  %v1431 = vsub.f32 %v1429, %v1430
  %v1432 = vand.u32 %v1431, 4294901760
  %1433 = vmatpush1.msra.mxu0 %v1432
  %v1434 = vand.u32 %v335, 4294901760
  %v1435 = vsub.f32 %v335, %v1434
  %v1436 = vand.u32 %v1435, 4294901760
  %v1437 = vsub.f32 %v1435, %v1436
  %v1438 = vand.u32 %v1437, 4294901760
  %1439 = vmatprep.subr.mxu0 %v1438
  %v1440 = vand.u32 %v334, 4294901760
  %v1441 = vsub.f32 %v334, %v1440
  %v1442 = vand.u32 %v1441, 4294901760
  %v1443 = vsub.f32 %v1441, %v1442
  %v1444 = vand.u32 %v1443, 4294901760
  %1445 = vmatpush1.msra.mxu0 %v1444
  %1446 = vmatprep.subr.mxu0 0.0
  %1447 = vmatpush2.msra.mxu0 0.0
  %1448 = vmatprep.subr.mxu0 0.0
  %1449 = vmatpush2.msra.mxu0 0.0
  %1450 = vmatprep.subr.mxu0 0.0
  %1451 = vmatpush2.msra.mxu0 0.0
  %1452 = vmatprep.subr.mxu0 0.0
  %1453 = vmatpush2.msra.mxu0 0.0
  %1454 = vmatprep.subr.mxu0 0.0
  %1455 = vmatpush2.msra.mxu0 0.0
  %1456 = vmatprep.subr.mxu0 0.0
  %1457 = vmatpush2.msra.mxu0 0.0
  %1458 = vmatprep.subr.mxu0 0.0
  %1459 = vmatpush2.msra.mxu0 0.0
  %1460 = vmatprep.subr.mxu0 0.0
  %1461 = vmatpush2.msra.mxu0 0.0
  %1462 = vmatprep.subr.mxu0 0.0
  %1463 = vmatpush2.msra.mxu0 0.0
  %1464 = vmatprep.subr.mxu0 0.0
  %1465 = vmatpush2.msra.mxu0 0.0
  %1466 = vmatprep.subr.mxu0 0.0
  %1467 = vmatpush2.msra.mxu0 0.0
  %1468 = vmatprep.subr.mxu0 0.0
  %1469 = vmatpush2.msra.mxu0 0.0
  %1470 = vmatprep.subr.mxu0 0.0
  %1471 = vmatpush2.msra.mxu0 0.0
  %1472 = vmatprep.subr.mxu0 0.0
  %1473 = vmatpush2.msra.mxu0 0.0
  %1474 = vmatprep.subr.mxu0 0.0
  %1475 = vmatpush2.msra.mxu0 0.0
  %1476 = vmatprep.subr.mxu0 0.0
  %1477 = vmatpush2.msra.mxu0 0.0
  %1478 = vmatprep.mubr.f32.mxu0 0.0
  %v1479 = vand.u32 %v555, 4294901760
  %1480 = vmatmul.mubr.f32.gmra.mxu0 %v1479
  %v1481 = vpop.f32.mrf.mxu0
  %v1482 = vadd.f32 %v1320, %v1481
  %v1483 = vpop.f32.mrf.mxu0
  %v1484 = vadd.f32 %v1322, %v1483
  %1485 = vdwg.mxu0
  %1486 = vmatprep.subr.mxu0 0.0
  %1487 = vmatpush1.msra.mxu0 0.0
  %1488 = vmatprep.subr.mxu0 0.0
  %1489 = vmatpush1.msra.mxu0 0.0
  %1490 = vmatprep.subr.mxu0 0.0
  %1491 = vmatpush1.msra.mxu0 0.0
  %1492 = vmatprep.subr.mxu0 0.0
  %1493 = vmatpush1.msra.mxu0 0.0
  %1494 = vmatprep.subr.mxu0 0.0
  %1495 = vmatpush1.msra.mxu0 0.0
  %1496 = vmatprep.subr.mxu0 0.0
  %1497 = vmatpush1.msra.mxu0 0.0
  %1498 = vmatprep.subr.mxu0 0.0
  %1499 = vmatpush1.msra.mxu0 0.0
  %v1500 = vand.u32 %v545, 4294901760
  %v1501 = vsub.f32 %v545, %v1500
  %1502 = vmatprep.subr.mxu0 %v1501
  %v1503 = vand.u32 %v544, 4294901760
  %v1504 = vsub.f32 %v544, %v1503
  %1505 = vmatpush1.msra.mxu0 %v1504
  %v1506 = vand.u32 %v515, 4294901760
  %v1507 = vsub.f32 %v515, %v1506
  %1508 = vmatprep.subr.mxu0 %v1507
  %v1509 = vand.u32 %v514, 4294901760
  %v1510 = vsub.f32 %v514, %v1509
  %1511 = vmatpush1.msra.mxu0 %v1510
  %v1512 = vand.u32 %v485, 4294901760
  %v1513 = vsub.f32 %v485, %v1512
  %1514 = vmatprep.subr.mxu0 %v1513
  %v1515 = vand.u32 %v484, 4294901760
  %v1516 = vsub.f32 %v484, %v1515
  %1517 = vmatpush1.msra.mxu0 %v1516
  %v1518 = vand.u32 %v455, 4294901760
  %v1519 = vsub.f32 %v455, %v1518
  %1520 = vmatprep.subr.mxu0 %v1519
  %v1521 = vand.u32 %v454, 4294901760
  %v1522 = vsub.f32 %v454, %v1521
  %1523 = vmatpush1.msra.mxu0 %v1522
  %v1524 = vand.u32 %v304, 4294901760
  %v1525 = vsub.f32 %v304, %v1524
  %1526 = vmatprep.subr.mxu0 %v1525
  %v1527 = vand.u32 %v303, 4294901760
  %v1528 = vsub.f32 %v303, %v1527
  %1529 = vmatpush1.msra.mxu0 %v1528
  %v1530 = vand.u32 %v425, 4294901760
  %v1531 = vsub.f32 %v425, %v1530
  %1532 = vmatprep.subr.mxu0 %v1531
  %v1533 = vand.u32 %v424, 4294901760
  %v1534 = vsub.f32 %v424, %v1533
  %1535 = vmatpush1.msra.mxu0 %v1534
  %v1536 = vand.u32 %v395, 4294901760
  %v1537 = vsub.f32 %v395, %v1536
  %1538 = vmatprep.subr.mxu0 %v1537
  %v1539 = vand.u32 %v394, 4294901760
  %v1540 = vsub.f32 %v394, %v1539
  %1541 = vmatpush1.msra.mxu0 %v1540
  %v1542 = vand.u32 %v365, 4294901760
  %v1543 = vsub.f32 %v365, %v1542
  %1544 = vmatprep.subr.mxu0 %v1543
  %v1545 = vand.u32 %v364, 4294901760
  %v1546 = vsub.f32 %v364, %v1545
  %1547 = vmatpush1.msra.mxu0 %v1546
  %v1548 = vand.u32 %v335, 4294901760
  %v1549 = vsub.f32 %v335, %v1548
  %1550 = vmatprep.subr.mxu0 %v1549
  %v1551 = vand.u32 %v334, 4294901760
  %v1552 = vsub.f32 %v334, %v1551
  %1553 = vmatpush1.msra.mxu0 %v1552
  %1554 = vmatprep.subr.mxu0 0.0
  %1555 = vmatpush2.msra.mxu0 0.0
  %1556 = vmatprep.subr.mxu0 0.0
  %1557 = vmatpush2.msra.mxu0 0.0
  %1558 = vmatprep.subr.mxu0 0.0
  %1559 = vmatpush2.msra.mxu0 0.0
  %1560 = vmatprep.subr.mxu0 0.0
  %1561 = vmatpush2.msra.mxu0 0.0
  %1562 = vmatprep.subr.mxu0 0.0
  %1563 = vmatpush2.msra.mxu0 0.0
  %1564 = vmatprep.subr.mxu0 0.0
  %1565 = vmatpush2.msra.mxu0 0.0
  %1566 = vmatprep.subr.mxu0 0.0
  %1567 = vmatpush2.msra.mxu0 0.0
  %1568 = vmatprep.subr.mxu0 0.0
  %1569 = vmatpush2.msra.mxu0 0.0
  %1570 = vmatprep.subr.mxu0 0.0
  %1571 = vmatpush2.msra.mxu0 0.0
  %1572 = vmatprep.subr.mxu0 0.0
  %1573 = vmatpush2.msra.mxu0 0.0
  %1574 = vmatprep.subr.mxu0 0.0
  %1575 = vmatpush2.msra.mxu0 0.0
  %1576 = vmatprep.subr.mxu0 0.0
  %1577 = vmatpush2.msra.mxu0 0.0
  %1578 = vmatprep.subr.mxu0 0.0
  %1579 = vmatpush2.msra.mxu0 0.0
  %1580 = vmatprep.subr.mxu0 0.0
  %1581 = vmatpush2.msra.mxu0 0.0
  %1582 = vmatprep.subr.mxu0 0.0
  %1583 = vmatpush2.msra.mxu0 0.0
  %1584 = vmatprep.subr.mxu0 0.0
  %1585 = vmatpush2.msra.mxu0 0.0
  %1586 = vmatprep.mubr.f32.mxu0 0.0
  %v1587 = vand.u32 %v555, 4294901760
  %v1588 = vsub.f32 %v555, %v1587
  %1589 = vmatmul.mubr.f32.gmra.mxu0 %v1588
  %v1590 = vpop.f32.mrf.mxu0
  %v1591 = vadd.f32 %v1482, %v1590
  %v1592 = vpop.f32.mrf.mxu0
  %v1593 = vadd.f32 %v1484, %v1592
  %1594 = vdwg.mxu0
  %1595 = vmatprep.subr.mxu0 0.0
  %1596 = vmatpush1.msra.mxu0 0.0
  %1597 = vmatprep.subr.mxu0 0.0
  %1598 = vmatpush1.msra.mxu0 0.0
  %1599 = vmatprep.subr.mxu0 0.0
  %1600 = vmatpush1.msra.mxu0 0.0
  %1601 = vmatprep.subr.mxu0 0.0
  %1602 = vmatpush1.msra.mxu0 0.0
  %1603 = vmatprep.subr.mxu0 0.0
  %1604 = vmatpush1.msra.mxu0 0.0
  %1605 = vmatprep.subr.mxu0 0.0
  %1606 = vmatpush1.msra.mxu0 0.0
  %1607 = vmatprep.subr.mxu0 0.0
  %1608 = vmatpush1.msra.mxu0 0.0
  %v1609 = vand.u32 %v545, 4294901760
  %1610 = vmatprep.subr.mxu0 %v1609
  %v1611 = vand.u32 %v544, 4294901760
  %1612 = vmatpush1.msra.mxu0 %v1611
  %v1613 = vand.u32 %v515, 4294901760
  %1614 = vmatprep.subr.mxu0 %v1613
  %v1615 = vand.u32 %v514, 4294901760
  %1616 = vmatpush1.msra.mxu0 %v1615
  %v1617 = vand.u32 %v485, 4294901760
  %1618 = vmatprep.subr.mxu0 %v1617
  %v1619 = vand.u32 %v484, 4294901760
  %1620 = vmatpush1.msra.mxu0 %v1619
  %v1621 = vand.u32 %v455, 4294901760
  %1622 = vmatprep.subr.mxu0 %v1621
  %v1623 = vand.u32 %v454, 4294901760
  %1624 = vmatpush1.msra.mxu0 %v1623
  %v1625 = vand.u32 %v304, 4294901760
  %1626 = vmatprep.subr.mxu0 %v1625
  %v1627 = vand.u32 %v303, 4294901760
  %1628 = vmatpush1.msra.mxu0 %v1627
  %v1629 = vand.u32 %v425, 4294901760
  %1630 = vmatprep.subr.mxu0 %v1629
  %v1631 = vand.u32 %v424, 4294901760
  %1632 = vmatpush1.msra.mxu0 %v1631
  %v1633 = vand.u32 %v395, 4294901760
  %1634 = vmatprep.subr.mxu0 %v1633
  %v1635 = vand.u32 %v394, 4294901760
  %1636 = vmatpush1.msra.mxu0 %v1635
  %v1637 = vand.u32 %v365, 4294901760
  %1638 = vmatprep.subr.mxu0 %v1637
  %v1639 = vand.u32 %v364, 4294901760
  %1640 = vmatpush1.msra.mxu0 %v1639
  %v1641 = vand.u32 %v335, 4294901760
  %1642 = vmatprep.subr.mxu0 %v1641
  %v1643 = vand.u32 %v334, 4294901760
  %1644 = vmatpush1.msra.mxu0 %v1643
  %1645 = vmatprep.subr.mxu0 0.0
  %1646 = vmatpush2.msra.mxu0 0.0
  %1647 = vmatprep.subr.mxu0 0.0
  %1648 = vmatpush2.msra.mxu0 0.0
  %1649 = vmatprep.subr.mxu0 0.0
  %1650 = vmatpush2.msra.mxu0 0.0
  %1651 = vmatprep.subr.mxu0 0.0
  %1652 = vmatpush2.msra.mxu0 0.0
  %1653 = vmatprep.subr.mxu0 0.0
  %1654 = vmatpush2.msra.mxu0 0.0
  %1655 = vmatprep.subr.mxu0 0.0
  %1656 = vmatpush2.msra.mxu0 0.0
  %1657 = vmatprep.subr.mxu0 0.0
  %1658 = vmatpush2.msra.mxu0 0.0
  %1659 = vmatprep.subr.mxu0 0.0
  %1660 = vmatpush2.msra.mxu0 0.0
  %1661 = vmatprep.subr.mxu0 0.0
  %1662 = vmatpush2.msra.mxu0 0.0
  %1663 = vmatprep.subr.mxu0 0.0
  %1664 = vmatpush2.msra.mxu0 0.0
  %1665 = vmatprep.subr.mxu0 0.0
  %1666 = vmatpush2.msra.mxu0 0.0
  %1667 = vmatprep.subr.mxu0 0.0
  %1668 = vmatpush2.msra.mxu0 0.0
  %1669 = vmatprep.subr.mxu0 0.0
  %1670 = vmatpush2.msra.mxu0 0.0
  %1671 = vmatprep.subr.mxu0 0.0
  %1672 = vmatpush2.msra.mxu0 0.0
  %1673 = vmatprep.subr.mxu0 0.0
  %1674 = vmatpush2.msra.mxu0 0.0
  %1675 = vmatprep.subr.mxu0 0.0
  %1676 = vmatpush2.msra.mxu0 0.0
  %1677 = vmatprep.mubr.f32.mxu0 0.0
  %v1678 = vand.u32 %v555, 4294901760
  %v1679 = vsub.f32 %v555, %v1678
  %v1680 = vand.u32 %v1679, 4294901760
  %1681 = vmatmul.mubr.f32.gmra.mxu0 %v1680
  %v1682 = vpop.f32.mrf.mxu0
  %v1683 = vadd.f32 %v1591, %v1682
  %v1684 = vpop.f32.mrf.mxu0
  %v1685 = vadd.f32 %v1593, %v1684
  %1686 = vdwg.mxu0
  %1687 = vmatprep.subr.mxu0 0.0
  %1688 = vmatpush1.msra.mxu0 0.0
  %1689 = vmatprep.subr.mxu0 0.0
  %1690 = vmatpush1.msra.mxu0 0.0
  %1691 = vmatprep.subr.mxu0 0.0
  %1692 = vmatpush1.msra.mxu0 0.0
  %1693 = vmatprep.subr.mxu0 0.0
  %1694 = vmatpush1.msra.mxu0 0.0
  %1695 = vmatprep.subr.mxu0 0.0
  %1696 = vmatpush1.msra.mxu0 0.0
  %1697 = vmatprep.subr.mxu0 0.0
  %1698 = vmatpush1.msra.mxu0 0.0
  %1699 = vmatprep.subr.mxu0 0.0
  %1700 = vmatpush1.msra.mxu0 0.0
  %v1701 = vand.u32 %v545, 4294901760
  %v1702 = vsub.f32 %v545, %v1701
  %v1703 = vand.u32 %v1702, 4294901760
  %1704 = vmatprep.subr.mxu0 %v1703
  %v1705 = vand.u32 %v544, 4294901760
  %v1706 = vsub.f32 %v544, %v1705
  %v1707 = vand.u32 %v1706, 4294901760
  %1708 = vmatpush1.msra.mxu0 %v1707
  %v1709 = vand.u32 %v515, 4294901760
  %v1710 = vsub.f32 %v515, %v1709
  %v1711 = vand.u32 %v1710, 4294901760
  %1712 = vmatprep.subr.mxu0 %v1711
  %v1713 = vand.u32 %v514, 4294901760
  %v1714 = vsub.f32 %v514, %v1713
  %v1715 = vand.u32 %v1714, 4294901760
  %1716 = vmatpush1.msra.mxu0 %v1715
  %v1717 = vand.u32 %v485, 4294901760
  %v1718 = vsub.f32 %v485, %v1717
  %v1719 = vand.u32 %v1718, 4294901760
  %1720 = vmatprep.subr.mxu0 %v1719
  %v1721 = vand.u32 %v484, 4294901760
  %v1722 = vsub.f32 %v484, %v1721
  %v1723 = vand.u32 %v1722, 4294901760
  %1724 = vmatpush1.msra.mxu0 %v1723
  %v1725 = vand.u32 %v455, 4294901760
  %v1726 = vsub.f32 %v455, %v1725
  %v1727 = vand.u32 %v1726, 4294901760
  %1728 = vmatprep.subr.mxu0 %v1727
  %v1729 = vand.u32 %v454, 4294901760
  %v1730 = vsub.f32 %v454, %v1729
  %v1731 = vand.u32 %v1730, 4294901760
  %1732 = vmatpush1.msra.mxu0 %v1731
  %v1733 = vand.u32 %v304, 4294901760
  %v1734 = vsub.f32 %v304, %v1733
  %v1735 = vand.u32 %v1734, 4294901760
  %1736 = vmatprep.subr.mxu0 %v1735
  %v1737 = vand.u32 %v303, 4294901760
  %v1738 = vsub.f32 %v303, %v1737
  %v1739 = vand.u32 %v1738, 4294901760
  %1740 = vmatpush1.msra.mxu0 %v1739
  %v1741 = vand.u32 %v425, 4294901760
  %v1742 = vsub.f32 %v425, %v1741
  %v1743 = vand.u32 %v1742, 4294901760
  %1744 = vmatprep.subr.mxu0 %v1743
  %v1745 = vand.u32 %v424, 4294901760
  %v1746 = vsub.f32 %v424, %v1745
  %v1747 = vand.u32 %v1746, 4294901760
  %1748 = vmatpush1.msra.mxu0 %v1747
  %v1749 = vand.u32 %v395, 4294901760
  %v1750 = vsub.f32 %v395, %v1749
  %v1751 = vand.u32 %v1750, 4294901760
  %1752 = vmatprep.subr.mxu0 %v1751
  %v1753 = vand.u32 %v394, 4294901760
  %v1754 = vsub.f32 %v394, %v1753
  %v1755 = vand.u32 %v1754, 4294901760
  %1756 = vmatpush1.msra.mxu0 %v1755
  %v1757 = vand.u32 %v365, 4294901760
  %v1758 = vsub.f32 %v365, %v1757
  %v1759 = vand.u32 %v1758, 4294901760
  %1760 = vmatprep.subr.mxu0 %v1759
  %v1761 = vand.u32 %v364, 4294901760
  %v1762 = vsub.f32 %v364, %v1761
  %v1763 = vand.u32 %v1762, 4294901760
  %1764 = vmatpush1.msra.mxu0 %v1763
  %v1765 = vand.u32 %v335, 4294901760
  %v1766 = vsub.f32 %v335, %v1765
  %v1767 = vand.u32 %v1766, 4294901760
  %1768 = vmatprep.subr.mxu0 %v1767
  %v1769 = vand.u32 %v334, 4294901760
  %v1770 = vsub.f32 %v334, %v1769
  %v1771 = vand.u32 %v1770, 4294901760
  %1772 = vmatpush1.msra.mxu0 %v1771
  %1773 = vmatprep.subr.mxu0 0.0
  %1774 = vmatpush2.msra.mxu0 0.0
  %1775 = vmatprep.subr.mxu0 0.0
  %1776 = vmatpush2.msra.mxu0 0.0
  %1777 = vmatprep.subr.mxu0 0.0
  %1778 = vmatpush2.msra.mxu0 0.0
  %1779 = vmatprep.subr.mxu0 0.0
  %1780 = vmatpush2.msra.mxu0 0.0
  %1781 = vmatprep.subr.mxu0 0.0
  %1782 = vmatpush2.msra.mxu0 0.0
  %1783 = vmatprep.subr.mxu0 0.0
  %1784 = vmatpush2.msra.mxu0 0.0
  %1785 = vmatprep.subr.mxu0 0.0
  %1786 = vmatpush2.msra.mxu0 0.0
  %1787 = vmatprep.subr.mxu0 0.0
  %1788 = vmatpush2.msra.mxu0 0.0
  %1789 = vmatprep.subr.mxu0 0.0
  %1790 = vmatpush2.msra.mxu0 0.0
  %1791 = vmatprep.subr.mxu0 0.0
  %1792 = vmatpush2.msra.mxu0 0.0
  %1793 = vmatprep.subr.mxu0 0.0
  %1794 = vmatpush2.msra.mxu0 0.0
  %1795 = vmatprep.subr.mxu0 0.0
  %1796 = vmatpush2.msra.mxu0 0.0
  %1797 = vmatprep.subr.mxu0 0.0
  %1798 = vmatpush2.msra.mxu0 0.0
  %1799 = vmatprep.subr.mxu0 0.0
  %1800 = vmatpush2.msra.mxu0 0.0
  %1801 = vmatprep.subr.mxu0 0.0
  %1802 = vmatpush2.msra.mxu0 0.0
  %1803 = vmatprep.subr.mxu0 0.0
  %1804 = vmatpush2.msra.mxu0 0.0
  %1805 = vmatprep.mubr.f32.mxu0 0.0
  %v1806 = vand.u32 %v555, 4294901760
  %1807 = vmatmul.mubr.f32.gmra.mxu0 %v1806
  %v1808 = vpop.f32.mrf.mxu0
  %v1809 = vadd.f32 %v1683, %v1808
  %v1810 = vpop.f32.mrf.mxu0
  %v1811 = vadd.f32 %v1685, %v1810
  %1812 = vdwg.mxu0
  %1813 = vmatprep.subr.mxu0 0.0
  %1814 = vmatpush1.msra.mxu0 0.0
  %1815 = vmatprep.subr.mxu0 0.0
  %1816 = vmatpush1.msra.mxu0 0.0
  %1817 = vmatprep.subr.mxu0 0.0
  %1818 = vmatpush1.msra.mxu0 0.0
  %1819 = vmatprep.subr.mxu0 0.0
  %1820 = vmatpush1.msra.mxu0 0.0
  %1821 = vmatprep.subr.mxu0 0.0
  %1822 = vmatpush1.msra.mxu0 0.0
  %1823 = vmatprep.subr.mxu0 0.0
  %1824 = vmatpush1.msra.mxu0 0.0
  %1825 = vmatprep.subr.mxu0 0.0
  %1826 = vmatpush1.msra.mxu0 0.0
  %v1827 = vand.u32 %v545, 4294901760
  %1828 = vmatprep.subr.mxu0 %v1827
  %v1829 = vand.u32 %v544, 4294901760
  %1830 = vmatpush1.msra.mxu0 %v1829
  %v1831 = vand.u32 %v515, 4294901760
  %1832 = vmatprep.subr.mxu0 %v1831
  %v1833 = vand.u32 %v514, 4294901760
  %1834 = vmatpush1.msra.mxu0 %v1833
  %v1835 = vand.u32 %v485, 4294901760
  %1836 = vmatprep.subr.mxu0 %v1835
  %v1837 = vand.u32 %v484, 4294901760
  %1838 = vmatpush1.msra.mxu0 %v1837
  %v1839 = vand.u32 %v455, 4294901760
  %1840 = vmatprep.subr.mxu0 %v1839
  %v1841 = vand.u32 %v454, 4294901760
  %1842 = vmatpush1.msra.mxu0 %v1841
  %v1843 = vand.u32 %v304, 4294901760
  %1844 = vmatprep.subr.mxu0 %v1843
  %v1845 = vand.u32 %v303, 4294901760
  %1846 = vmatpush1.msra.mxu0 %v1845
  %v1847 = vand.u32 %v425, 4294901760
  %1848 = vmatprep.subr.mxu0 %v1847
  %v1849 = vand.u32 %v424, 4294901760
  %1850 = vmatpush1.msra.mxu0 %v1849
  %v1851 = vand.u32 %v395, 4294901760
  %1852 = vmatprep.subr.mxu0 %v1851
  %v1853 = vand.u32 %v394, 4294901760
  %1854 = vmatpush1.msra.mxu0 %v1853
  %v1855 = vand.u32 %v365, 4294901760
  %1856 = vmatprep.subr.mxu0 %v1855
  %v1857 = vand.u32 %v364, 4294901760
  %1858 = vmatpush1.msra.mxu0 %v1857
  %v1859 = vand.u32 %v335, 4294901760
  %1860 = vmatprep.subr.mxu0 %v1859
  %v1861 = vand.u32 %v334, 4294901760
  %1862 = vmatpush1.msra.mxu0 %v1861
  %1863 = vmatprep.subr.mxu0 0.0
  %1864 = vmatpush2.msra.mxu0 0.0
  %1865 = vmatprep.subr.mxu0 0.0
  %1866 = vmatpush2.msra.mxu0 0.0
  %1867 = vmatprep.subr.mxu0 0.0
  %1868 = vmatpush2.msra.mxu0 0.0
  %1869 = vmatprep.subr.mxu0 0.0
  %1870 = vmatpush2.msra.mxu0 0.0
  %1871 = vmatprep.subr.mxu0 0.0
  %1872 = vmatpush2.msra.mxu0 0.0
  %1873 = vmatprep.subr.mxu0 0.0
  %1874 = vmatpush2.msra.mxu0 0.0
  %1875 = vmatprep.subr.mxu0 0.0
  %1876 = vmatpush2.msra.mxu0 0.0
  %1877 = vmatprep.subr.mxu0 0.0
  %1878 = vmatpush2.msra.mxu0 0.0
  %1879 = vmatprep.subr.mxu0 0.0
  %1880 = vmatpush2.msra.mxu0 0.0
  %1881 = vmatprep.subr.mxu0 0.0
  %1882 = vmatpush2.msra.mxu0 0.0
  %1883 = vmatprep.subr.mxu0 0.0
  %1884 = vmatpush2.msra.mxu0 0.0
  %1885 = vmatprep.subr.mxu0 0.0
  %1886 = vmatpush2.msra.mxu0 0.0
  %1887 = vmatprep.subr.mxu0 0.0
  %1888 = vmatpush2.msra.mxu0 0.0
  %1889 = vmatprep.subr.mxu0 0.0
  %1890 = vmatpush2.msra.mxu0 0.0
  %1891 = vmatprep.subr.mxu0 0.0
  %1892 = vmatpush2.msra.mxu0 0.0
  %1893 = vmatprep.subr.mxu0 0.0
  %1894 = vmatpush2.msra.mxu0 0.0
  %1895 = vmatprep.mubr.f32.mxu0 0.0
  %v1896 = vand.u32 %v555, 4294901760
  %1897 = vmatmul.mubr.f32.gmra.mxu0 %v1896
  %v1898 = vpop.f32.mrf.mxu0
  %v1899 = vadd.f32 %v1809, %v1898
  %v1900 = vpop.f32.mrf.mxu0
  %v1901 = vadd.f32 %v1811, %v1900
  %1902 = vdwg.mxu0
  %v1903 = vld [vmem:[%s4] sm:$0xff]
  %v1904 = vld [vmem:[%s4 + $0x8] sm:$0xff]
  %v1905 = vld [vmem:[%s4 + $0x10] sm:$0xff]
  %v1906 = vld [vmem:[%s4 + $0x18] sm:$0xff]
  %v1907 = vld [vmem:[%s4 + $0x20] sm:$0xff]
  %v1908 = vld [vmem:[%s4 + $0x28] sm:$0xff]
  %v1909 = vld [vmem:[%s4 + $0x30] sm:$0xff]
  %v1910 = vld [vmem:[%s4 + $0x38] sm:$0xff]
  %v1911 = vld [vmem:[%s5] sm:$0xff]
  %v1912 = vld [vmem:[%s5 + $0x8] sm:$0xff]
  %v1913 = vld [vmem:[%s5 + $0x10] sm:$0xff]
  %v1914 = vld [vmem:[%s5 + $0x18] sm:$0xff]
  %v1915 = vld [vmem:[%s5 + $0x20] sm:$0xff]
  %v1916 = vld [vmem:[%s5 + $0x28] sm:$0xff]
  %v1917 = vld [vmem:[%s5 + $0x30] sm:$0xff]
  %v1918 = vld [vmem:[%s5 + $0x38] sm:$0xff]
  %1920 = vset.pattern.permute.xlu0 0
  %1921 = vperm.xlu0 %1920, %v1911
  %v1922 = vpop.permute.xlu0 %1921
  %1925 = vset.pattern.permute.xlu0 0
  %1926 = vperm.xlu0 %1925, %v1912
  %v1927 = vpop.permute.xlu0 %1926
  %1930 = vset.pattern.permute.xlu0 0
  %1931 = vperm.xlu0 %1930, %v1913
  %v1932 = vpop.permute.xlu0 %1931
  %1935 = vset.pattern.permute.xlu0 0
  %1936 = vperm.xlu0 %1935, %v1914
  %v1937 = vpop.permute.xlu0 %1936
  %1940 = vset.pattern.permute.xlu0 0
  %1941 = vperm.xlu0 %1940, %v1915
  %v1942 = vpop.permute.xlu0 %1941
  %1945 = vset.pattern.permute.xlu0 0
  %1946 = vperm.xlu0 %1945, %v1916
  %v1947 = vpop.permute.xlu0 %1946
  %1950 = vset.pattern.permute.xlu0 0
  %1951 = vperm.xlu0 %1950, %v1917
  %v1952 = vpop.permute.xlu0 %1951
  %1955 = vset.pattern.permute.xlu0 0
  %1956 = vperm.xlu0 %1955, %v1918
  %v1957 = vpop.permute.xlu0 %1956
  %vm1959 = vcmask 654336
  %v1961 = vsel %vm1959, %v1903, 0
  %v1964 = vsel %vm1959, %v1904, 0
  %v1967 = vsel %vm1959, %v1905, 0
  %v1970 = vsel %vm1959, %v1906, 0
  %v1973 = vsel %vm1959, %v1907, 0
  %v1976 = vsel %vm1959, %v1908, 0
  %v1979 = vsel %vm1959, %v1909, 0
  %v1982 = vsel %vm1959, %v1910, 0
  %1984 = vmatprep.subr.mxu0 0.0
  %1985 = vmatpush1.msra.mxu0 0.0
  %1986 = vmatprep.subr.mxu0 0.0
  %1987 = vmatpush1.msra.mxu0 0.0
  %1988 = vmatprep.subr.mxu0 0.0
  %1989 = vmatpush1.msra.mxu0 0.0
  %1990 = vmatprep.subr.mxu0 0.0
  %1991 = vmatpush1.msra.mxu0 0.0
  %1992 = vmatprep.subr.mxu0 0.0
  %1993 = vmatpush1.msra.mxu0 0.0
  %1994 = vmatprep.subr.mxu0 0.0
  %1995 = vmatpush1.msra.mxu0 0.0
  %v1996 = vand.u32 %v1901, 4294901760
  %1997 = vmatprep.subr.mxu0 %v1996
  %v1998 = vand.u32 %v1899, 4294901760
  %1999 = vmatpush1.msra.mxu0 %v1998
  %v2000 = vand.u32 %v1228, 4294901760
  %2001 = vmatprep.subr.mxu0 %v2000
  %v2002 = vand.u32 %v1226, 4294901760
  %2003 = vmatpush1.msra.mxu0 %v2002
  %v2004 = vand.u32 %v272, 4294901760
  %2005 = vmatprep.subr.mxu0 %v2004
  %v2006 = vand.u32 %v271, 4294901760
  %2007 = vmatpush1.msra.mxu0 %v2006
  %v2008 = vand.u32 %v268, 4294901760
  %2009 = vmatprep.subr.mxu0 %v2008
  %v2010 = vand.u32 %v267, 4294901760
  %2011 = vmatpush1.msra.mxu0 %v2010
  %v2012 = vand.u32 %v264, 4294901760
  %2013 = vmatprep.subr.mxu0 %v2012
  %v2014 = vand.u32 %v263, 4294901760
  %2015 = vmatpush1.msra.mxu0 %v2014
  %v2016 = vand.u32 %v260, 4294901760
  %2017 = vmatprep.subr.mxu0 %v2016
  %v2018 = vand.u32 %v259, 4294901760
  %2019 = vmatpush1.msra.mxu0 %v2018
  %v2020 = vand.u32 %v256, 4294901760
  %2021 = vmatprep.subr.mxu0 %v2020
  %v2022 = vand.u32 %v255, 4294901760
  %2023 = vmatpush1.msra.mxu0 %v2022
  %v2024 = vand.u32 %v252, 4294901760
  %2025 = vmatprep.subr.mxu0 %v2024
  %v2026 = vand.u32 %v251, 4294901760
  %2027 = vmatpush1.msra.mxu0 %v2026
  %v2028 = vand.u32 %v248, 4294901760
  %2029 = vmatprep.subr.mxu0 %v2028
  %v2030 = vand.u32 %v247, 4294901760
  %2031 = vmatpush1.msra.mxu0 %v2030
  %v2032 = vand.u32 %v246, 4294901760
  %2033 = vmatprep.subr.mxu0 %v2032
  %v2034 = vand.u32 %v245, 4294901760
  %2035 = vmatpush1.msra.mxu0 %v2034
  %2036 = vmatprep.subr.mxu0 0.0
  %2037 = vmatpush2.msra.mxu0 0.0
  %2038 = vmatprep.subr.mxu0 0.0
  %2039 = vmatpush2.msra.mxu0 0.0
  %2040 = vmatprep.subr.mxu0 0.0
  %2041 = vmatpush2.msra.mxu0 0.0
  %2042 = vmatprep.subr.mxu0 0.0
  %2043 = vmatpush2.msra.mxu0 0.0
  %2044 = vmatprep.subr.mxu0 0.0
  %2045 = vmatpush2.msra.mxu0 0.0
  %2046 = vmatprep.subr.mxu0 0.0
  %2047 = vmatpush2.msra.mxu0 0.0
  %2048 = vmatprep.subr.mxu0 0.0
  %2049 = vmatpush2.msra.mxu0 0.0
  %2050 = vmatprep.subr.mxu0 0.0
  %2051 = vmatpush2.msra.mxu0 0.0
  %2052 = vmatprep.subr.mxu0 0.0
  %2053 = vmatpush2.msra.mxu0 0.0
  %2054 = vmatprep.subr.mxu0 0.0
  %2055 = vmatpush2.msra.mxu0 0.0
  %2056 = vmatprep.subr.mxu0 0.0
  %2057 = vmatpush2.msra.mxu0 0.0
  %2058 = vmatprep.subr.mxu0 0.0
  %2059 = vmatpush2.msra.mxu0 0.0
  %2060 = vmatprep.subr.mxu0 0.0
  %2061 = vmatpush2.msra.mxu0 0.0
  %2062 = vmatprep.subr.mxu0 0.0
  %2063 = vmatpush2.msra.mxu0 0.0
  %2064 = vmatprep.subr.mxu0 0.0
  %2065 = vmatpush2.msra.mxu0 0.0
  %2066 = vmatprep.subr.mxu0 0.0
  %2067 = vmatpush2.msra.mxu0 0.0
  %2068 = vmatprep.mubr.f32.mxu0 0.0
  %v2069 = vand.u32 %v1961, 4294901760
  %v2070 = vsub.f32 %v1961, %v2069
  %v2071 = vand.u32 %v2070, 4294901760
  %v2072 = vsub.f32 %v2070, %v2071
  %v2073 = vand.u32 %v2072, 4294901760
  %2074 = vmatmul.mubr.f32.gmra.mxu0 %v2073
  %v2075 = vpop.f32.mrf.mxu0
  %v2076 = vadd.f32 %v1922, %v2075
  %v2077 = vpop.f32.mrf.mxu0
  %v2078 = vadd.f32 %v1922, %v2077
  %2079 = vmatprep.mubr.f32.mxu0 0.0
  %v2080 = vand.u32 %v1964, 4294901760
  %v2081 = vsub.f32 %v1964, %v2080
  %v2082 = vand.u32 %v2081, 4294901760
  %v2083 = vsub.f32 %v2081, %v2082
  %v2084 = vand.u32 %v2083, 4294901760
  %2085 = vmatmul.mubr.f32.gmra.mxu0 %v2084
  %v2086 = vpop.f32.mrf.mxu0
  %v2087 = vadd.f32 %v1927, %v2086
  %v2088 = vpop.f32.mrf.mxu0
  %v2089 = vadd.f32 %v1927, %v2088
  %2090 = vmatprep.mubr.f32.mxu0 0.0
  %v2091 = vand.u32 %v1967, 4294901760
  %v2092 = vsub.f32 %v1967, %v2091
  %v2093 = vand.u32 %v2092, 4294901760
  %v2094 = vsub.f32 %v2092, %v2093
  %v2095 = vand.u32 %v2094, 4294901760
  %2096 = vmatmul.mubr.f32.gmra.mxu0 %v2095
  %v2097 = vpop.f32.mrf.mxu0
  %v2098 = vadd.f32 %v1932, %v2097
  %v2099 = vpop.f32.mrf.mxu0
  %v2100 = vadd.f32 %v1932, %v2099
  %2101 = vmatprep.mubr.f32.mxu0 0.0
  %v2102 = vand.u32 %v1970, 4294901760
  %v2103 = vsub.f32 %v1970, %v2102
  %v2104 = vand.u32 %v2103, 4294901760
  %v2105 = vsub.f32 %v2103, %v2104
  %v2106 = vand.u32 %v2105, 4294901760
  %2107 = vmatmul.mubr.f32.gmra.mxu0 %v2106
  %v2108 = vpop.f32.mrf.mxu0
  %v2109 = vadd.f32 %v1937, %v2108
  %v2110 = vpop.f32.mrf.mxu0
  %v2111 = vadd.f32 %v1937, %v2110
  %2112 = vmatprep.mubr.f32.mxu0 0.0
  %v2113 = vand.u32 %v1973, 4294901760
  %v2114 = vsub.f32 %v1973, %v2113
  %v2115 = vand.u32 %v2114, 4294901760
  %v2116 = vsub.f32 %v2114, %v2115
  %v2117 = vand.u32 %v2116, 4294901760
  %2118 = vmatmul.mubr.f32.gmra.mxu0 %v2117
  %v2119 = vpop.f32.mrf.mxu0
  %v2120 = vadd.f32 %v1942, %v2119
  %v2121 = vpop.f32.mrf.mxu0
  %v2122 = vadd.f32 %v1942, %v2121
  %2123 = vmatprep.mubr.f32.mxu0 0.0
  %v2124 = vand.u32 %v1976, 4294901760
  %v2125 = vsub.f32 %v1976, %v2124
  %v2126 = vand.u32 %v2125, 4294901760
  %v2127 = vsub.f32 %v2125, %v2126
  %v2128 = vand.u32 %v2127, 4294901760
  %2129 = vmatmul.mubr.f32.gmra.mxu0 %v2128
  %v2130 = vpop.f32.mrf.mxu0
  %v2131 = vadd.f32 %v1947, %v2130
  %v2132 = vpop.f32.mrf.mxu0
  %v2133 = vadd.f32 %v1947, %v2132
  %2134 = vmatprep.mubr.f32.mxu0 0.0
  %v2135 = vand.u32 %v1979, 4294901760
  %v2136 = vsub.f32 %v1979, %v2135
  %v2137 = vand.u32 %v2136, 4294901760
  %v2138 = vsub.f32 %v2136, %v2137
  %v2139 = vand.u32 %v2138, 4294901760
  %2140 = vmatmul.mubr.f32.gmra.mxu0 %v2139
  %v2141 = vpop.f32.mrf.mxu0
  %v2142 = vadd.f32 %v1952, %v2141
  %v2143 = vpop.f32.mrf.mxu0
  %v2144 = vadd.f32 %v1952, %v2143
  %2145 = vmatprep.mubr.f32.mxu0 0.0
  %v2146 = vand.u32 %v1982, 4294901760
  %v2147 = vsub.f32 %v1982, %v2146
  %v2148 = vand.u32 %v2147, 4294901760
  %v2149 = vsub.f32 %v2147, %v2148
  %v2150 = vand.u32 %v2149, 4294901760
  %2151 = vmatmul.mubr.f32.gmra.mxu0 %v2150
  %v2152 = vpop.f32.mrf.mxu0
  %v2153 = vadd.f32 %v1957, %v2152
  %v2154 = vpop.f32.mrf.mxu0
  %v2155 = vadd.f32 %v1957, %v2154
  %2156 = vdwg.mxu0
  %2157 = vmatprep.subr.mxu0 0.0
  %2158 = vmatpush1.msra.mxu0 0.0
  %2159 = vmatprep.subr.mxu0 0.0
  %2160 = vmatpush1.msra.mxu0 0.0
  %2161 = vmatprep.subr.mxu0 0.0
  %2162 = vmatpush1.msra.mxu0 0.0
  %2163 = vmatprep.subr.mxu0 0.0
  %2164 = vmatpush1.msra.mxu0 0.0
  %2165 = vmatprep.subr.mxu0 0.0
  %2166 = vmatpush1.msra.mxu0 0.0
  %2167 = vmatprep.subr.mxu0 0.0
  %2168 = vmatpush1.msra.mxu0 0.0
  %v2169 = vand.u32 %v1901, 4294901760
  %v2170 = vsub.f32 %v1901, %v2169
  %v2171 = vand.u32 %v2170, 4294901760
  %v2172 = vsub.f32 %v2170, %v2171
  %v2173 = vand.u32 %v2172, 4294901760
  %2174 = vmatprep.subr.mxu0 %v2173
  %v2175 = vand.u32 %v1899, 4294901760
  %v2176 = vsub.f32 %v1899, %v2175
  %v2177 = vand.u32 %v2176, 4294901760
  %v2178 = vsub.f32 %v2176, %v2177
  %v2179 = vand.u32 %v2178, 4294901760
  %2180 = vmatpush1.msra.mxu0 %v2179
  %v2181 = vand.u32 %v1228, 4294901760
  %v2182 = vsub.f32 %v1228, %v2181
  %v2183 = vand.u32 %v2182, 4294901760
  %v2184 = vsub.f32 %v2182, %v2183
  %v2185 = vand.u32 %v2184, 4294901760
  %2186 = vmatprep.subr.mxu0 %v2185
  %v2187 = vand.u32 %v1226, 4294901760
  %v2188 = vsub.f32 %v1226, %v2187
  %v2189 = vand.u32 %v2188, 4294901760
  %v2190 = vsub.f32 %v2188, %v2189
  %v2191 = vand.u32 %v2190, 4294901760
  %2192 = vmatpush1.msra.mxu0 %v2191
  %v2193 = vand.u32 %v272, 4294901760
  %v2194 = vsub.f32 %v272, %v2193
  %v2195 = vand.u32 %v2194, 4294901760
  %v2196 = vsub.f32 %v2194, %v2195
  %v2197 = vand.u32 %v2196, 4294901760
  %2198 = vmatprep.subr.mxu0 %v2197
  %v2199 = vand.u32 %v271, 4294901760
  %v2200 = vsub.f32 %v271, %v2199
  %v2201 = vand.u32 %v2200, 4294901760
  %v2202 = vsub.f32 %v2200, %v2201
  %v2203 = vand.u32 %v2202, 4294901760
  %2204 = vmatpush1.msra.mxu0 %v2203
  %v2205 = vand.u32 %v268, 4294901760
  %v2206 = vsub.f32 %v268, %v2205
  %v2207 = vand.u32 %v2206, 4294901760
  %v2208 = vsub.f32 %v2206, %v2207
  %v2209 = vand.u32 %v2208, 4294901760
  %2210 = vmatprep.subr.mxu0 %v2209
  %v2211 = vand.u32 %v267, 4294901760
  %v2212 = vsub.f32 %v267, %v2211
  %v2213 = vand.u32 %v2212, 4294901760
  %v2214 = vsub.f32 %v2212, %v2213
  %v2215 = vand.u32 %v2214, 4294901760
  %2216 = vmatpush1.msra.mxu0 %v2215
  %v2217 = vand.u32 %v264, 4294901760
  %v2218 = vsub.f32 %v264, %v2217
  %v2219 = vand.u32 %v2218, 4294901760
  %v2220 = vsub.f32 %v2218, %v2219
  %v2221 = vand.u32 %v2220, 4294901760
  %2222 = vmatprep.subr.mxu0 %v2221
  %v2223 = vand.u32 %v263, 4294901760
  %v2224 = vsub.f32 %v263, %v2223
  %v2225 = vand.u32 %v2224, 4294901760
  %v2226 = vsub.f32 %v2224, %v2225
  %v2227 = vand.u32 %v2226, 4294901760
  %2228 = vmatpush1.msra.mxu0 %v2227
  %v2229 = vand.u32 %v260, 4294901760
  %v2230 = vsub.f32 %v260, %v2229
  %v2231 = vand.u32 %v2230, 4294901760
  %v2232 = vsub.f32 %v2230, %v2231
  %v2233 = vand.u32 %v2232, 4294901760
  %2234 = vmatprep.subr.mxu0 %v2233
  %v2235 = vand.u32 %v259, 4294901760
  %v2236 = vsub.f32 %v259, %v2235
  %v2237 = vand.u32 %v2236, 4294901760
  %v2238 = vsub.f32 %v2236, %v2237
  %v2239 = vand.u32 %v2238, 4294901760
  %2240 = vmatpush1.msra.mxu0 %v2239
  %v2241 = vand.u32 %v256, 4294901760
  %v2242 = vsub.f32 %v256, %v2241
  %v2243 = vand.u32 %v2242, 4294901760
  %v2244 = vsub.f32 %v2242, %v2243
  %v2245 = vand.u32 %v2244, 4294901760
  %2246 = vmatprep.subr.mxu0 %v2245
  %v2247 = vand.u32 %v255, 4294901760
  %v2248 = vsub.f32 %v255, %v2247
  %v2249 = vand.u32 %v2248, 4294901760
  %v2250 = vsub.f32 %v2248, %v2249
  %v2251 = vand.u32 %v2250, 4294901760
  %2252 = vmatpush1.msra.mxu0 %v2251
  %v2253 = vand.u32 %v252, 4294901760
  %v2254 = vsub.f32 %v252, %v2253
  %v2255 = vand.u32 %v2254, 4294901760
  %v2256 = vsub.f32 %v2254, %v2255
  %v2257 = vand.u32 %v2256, 4294901760
  %2258 = vmatprep.subr.mxu0 %v2257
  %v2259 = vand.u32 %v251, 4294901760
  %v2260 = vsub.f32 %v251, %v2259
  %v2261 = vand.u32 %v2260, 4294901760
  %v2262 = vsub.f32 %v2260, %v2261
  %v2263 = vand.u32 %v2262, 4294901760
  %2264 = vmatpush1.msra.mxu0 %v2263
  %v2265 = vand.u32 %v248, 4294901760
  %v2266 = vsub.f32 %v248, %v2265
  %v2267 = vand.u32 %v2266, 4294901760
  %v2268 = vsub.f32 %v2266, %v2267
  %v2269 = vand.u32 %v2268, 4294901760
  %2270 = vmatprep.subr.mxu0 %v2269
  %v2271 = vand.u32 %v247, 4294901760
  %v2272 = vsub.f32 %v247, %v2271
  %v2273 = vand.u32 %v2272, 4294901760
  %v2274 = vsub.f32 %v2272, %v2273
  %v2275 = vand.u32 %v2274, 4294901760
  %2276 = vmatpush1.msra.mxu0 %v2275
  %v2277 = vand.u32 %v246, 4294901760
  %v2278 = vsub.f32 %v246, %v2277
  %v2279 = vand.u32 %v2278, 4294901760
  %v2280 = vsub.f32 %v2278, %v2279
  %v2281 = vand.u32 %v2280, 4294901760
  %2282 = vmatprep.subr.mxu0 %v2281
  %v2283 = vand.u32 %v245, 4294901760
  %v2284 = vsub.f32 %v245, %v2283
  %v2285 = vand.u32 %v2284, 4294901760
  %v2286 = vsub.f32 %v2284, %v2285
  %v2287 = vand.u32 %v2286, 4294901760
  %2288 = vmatpush1.msra.mxu0 %v2287
  %2289 = vmatprep.subr.mxu0 0.0
  %2290 = vmatpush2.msra.mxu0 0.0
  %2291 = vmatprep.subr.mxu0 0.0
  %2292 = vmatpush2.msra.mxu0 0.0
  %2293 = vmatprep.subr.mxu0 0.0
  %2294 = vmatpush2.msra.mxu0 0.0
  %2295 = vmatprep.subr.mxu0 0.0
  %2296 = vmatpush2.msra.mxu0 0.0
  %2297 = vmatprep.subr.mxu0 0.0
  %2298 = vmatpush2.msra.mxu0 0.0
  %2299 = vmatprep.subr.mxu0 0.0
  %2300 = vmatpush2.msra.mxu0 0.0
  %2301 = vmatprep.subr.mxu0 0.0
  %2302 = vmatpush2.msra.mxu0 0.0
  %2303 = vmatprep.subr.mxu0 0.0
  %2304 = vmatpush2.msra.mxu0 0.0
  %2305 = vmatprep.subr.mxu0 0.0
  %2306 = vmatpush2.msra.mxu0 0.0
  %2307 = vmatprep.subr.mxu0 0.0
  %2308 = vmatpush2.msra.mxu0 0.0
  %2309 = vmatprep.subr.mxu0 0.0
  %2310 = vmatpush2.msra.mxu0 0.0
  %2311 = vmatprep.subr.mxu0 0.0
  %2312 = vmatpush2.msra.mxu0 0.0
  %2313 = vmatprep.subr.mxu0 0.0
  %2314 = vmatpush2.msra.mxu0 0.0
  %2315 = vmatprep.subr.mxu0 0.0
  %2316 = vmatpush2.msra.mxu0 0.0
  %2317 = vmatprep.subr.mxu0 0.0
  %2318 = vmatpush2.msra.mxu0 0.0
  %2319 = vmatprep.subr.mxu0 0.0
  %2320 = vmatpush2.msra.mxu0 0.0
  %2321 = vmatprep.mubr.f32.mxu0 0.0
  %v2322 = vand.u32 %v1961, 4294901760
  %2323 = vmatmul.mubr.f32.gmra.mxu0 %v2322
  %v2324 = vpop.f32.mrf.mxu0
  %v2325 = vadd.f32 %v2076, %v2324
  %v2326 = vpop.f32.mrf.mxu0
  %v2327 = vadd.f32 %v2078, %v2326
  %2328 = vmatprep.mubr.f32.mxu0 0.0
  %v2329 = vand.u32 %v1964, 4294901760
  %2330 = vmatmul.mubr.f32.gmra.mxu0 %v2329
  %v2331 = vpop.f32.mrf.mxu0
  %v2332 = vadd.f32 %v2087, %v2331
  %v2333 = vpop.f32.mrf.mxu0
  %v2334 = vadd.f32 %v2089, %v2333
  %2335 = vmatprep.mubr.f32.mxu0 0.0
  %v2336 = vand.u32 %v1967, 4294901760
  %2337 = vmatmul.mubr.f32.gmra.mxu0 %v2336
  %v2338 = vpop.f32.mrf.mxu0
  %v2339 = vadd.f32 %v2098, %v2338
  %v2340 = vpop.f32.mrf.mxu0
  %v2341 = vadd.f32 %v2100, %v2340
  %2342 = vmatprep.mubr.f32.mxu0 0.0
  %v2343 = vand.u32 %v1970, 4294901760
  %2344 = vmatmul.mubr.f32.gmra.mxu0 %v2343
  %v2345 = vpop.f32.mrf.mxu0
  %v2346 = vadd.f32 %v2109, %v2345
  %v2347 = vpop.f32.mrf.mxu0
  %v2348 = vadd.f32 %v2111, %v2347
  %2349 = vmatprep.mubr.f32.mxu0 0.0
  %v2350 = vand.u32 %v1973, 4294901760
  %2351 = vmatmul.mubr.f32.gmra.mxu0 %v2350
  %v2352 = vpop.f32.mrf.mxu0
  %v2353 = vadd.f32 %v2120, %v2352
  %v2354 = vpop.f32.mrf.mxu0
  %v2355 = vadd.f32 %v2122, %v2354
  %2356 = vmatprep.mubr.f32.mxu0 0.0
  %v2357 = vand.u32 %v1976, 4294901760
  %2358 = vmatmul.mubr.f32.gmra.mxu0 %v2357
  %v2359 = vpop.f32.mrf.mxu0
  %v2360 = vadd.f32 %v2131, %v2359
  %v2361 = vpop.f32.mrf.mxu0
  %v2362 = vadd.f32 %v2133, %v2361
  %2363 = vmatprep.mubr.f32.mxu0 0.0
  %v2364 = vand.u32 %v1979, 4294901760
  %2365 = vmatmul.mubr.f32.gmra.mxu0 %v2364
  %v2366 = vpop.f32.mrf.mxu0
  %v2367 = vadd.f32 %v2142, %v2366
  %v2368 = vpop.f32.mrf.mxu0
  %v2369 = vadd.f32 %v2144, %v2368
  %2370 = vmatprep.mubr.f32.mxu0 0.0
  %v2371 = vand.u32 %v1982, 4294901760
  %2372 = vmatmul.mubr.f32.gmra.mxu0 %v2371
  %v2373 = vpop.f32.mrf.mxu0
  %v2374 = vadd.f32 %v2153, %v2373
  %v2375 = vpop.f32.mrf.mxu0
  %v2376 = vadd.f32 %v2155, %v2375
  %2377 = vdwg.mxu0
  %2378 = vmatprep.subr.mxu0 0.0
  %2379 = vmatpush1.msra.mxu0 0.0
  %2380 = vmatprep.subr.mxu0 0.0
  %2381 = vmatpush1.msra.mxu0 0.0
  %2382 = vmatprep.subr.mxu0 0.0
  %2383 = vmatpush1.msra.mxu0 0.0
  %2384 = vmatprep.subr.mxu0 0.0
  %2385 = vmatpush1.msra.mxu0 0.0
  %2386 = vmatprep.subr.mxu0 0.0
  %2387 = vmatpush1.msra.mxu0 0.0
  %2388 = vmatprep.subr.mxu0 0.0
  %2389 = vmatpush1.msra.mxu0 0.0
  %v2390 = vand.u32 %v1901, 4294901760
  %v2391 = vsub.f32 %v1901, %v2390
  %2392 = vmatprep.subr.mxu0 %v2391
  %v2393 = vand.u32 %v1899, 4294901760
  %v2394 = vsub.f32 %v1899, %v2393
  %2395 = vmatpush1.msra.mxu0 %v2394
  %v2396 = vand.u32 %v1228, 4294901760
  %v2397 = vsub.f32 %v1228, %v2396
  %2398 = vmatprep.subr.mxu0 %v2397
  %v2399 = vand.u32 %v1226, 4294901760
  %v2400 = vsub.f32 %v1226, %v2399
  %2401 = vmatpush1.msra.mxu0 %v2400
  %v2402 = vand.u32 %v272, 4294901760
  %v2403 = vsub.f32 %v272, %v2402
  %2404 = vmatprep.subr.mxu0 %v2403
  %v2405 = vand.u32 %v271, 4294901760
  %v2406 = vsub.f32 %v271, %v2405
  %2407 = vmatpush1.msra.mxu0 %v2406
  %v2408 = vand.u32 %v268, 4294901760
  %v2409 = vsub.f32 %v268, %v2408
  %2410 = vmatprep.subr.mxu0 %v2409
  %v2411 = vand.u32 %v267, 4294901760
  %v2412 = vsub.f32 %v267, %v2411
  %2413 = vmatpush1.msra.mxu0 %v2412
  %v2414 = vand.u32 %v264, 4294901760
  %v2415 = vsub.f32 %v264, %v2414
  %2416 = vmatprep.subr.mxu0 %v2415
  %v2417 = vand.u32 %v263, 4294901760
  %v2418 = vsub.f32 %v263, %v2417
  %2419 = vmatpush1.msra.mxu0 %v2418
  %v2420 = vand.u32 %v260, 4294901760
  %v2421 = vsub.f32 %v260, %v2420
  %2422 = vmatprep.subr.mxu0 %v2421
  %v2423 = vand.u32 %v259, 4294901760
  %v2424 = vsub.f32 %v259, %v2423
  %2425 = vmatpush1.msra.mxu0 %v2424
  %v2426 = vand.u32 %v256, 4294901760
  %v2427 = vsub.f32 %v256, %v2426
  %2428 = vmatprep.subr.mxu0 %v2427
  %v2429 = vand.u32 %v255, 4294901760
  %v2430 = vsub.f32 %v255, %v2429
  %2431 = vmatpush1.msra.mxu0 %v2430
  %v2432 = vand.u32 %v252, 4294901760
  %v2433 = vsub.f32 %v252, %v2432
  %2434 = vmatprep.subr.mxu0 %v2433
  %v2435 = vand.u32 %v251, 4294901760
  %v2436 = vsub.f32 %v251, %v2435
  %2437 = vmatpush1.msra.mxu0 %v2436
  %v2438 = vand.u32 %v248, 4294901760
  %v2439 = vsub.f32 %v248, %v2438
  %2440 = vmatprep.subr.mxu0 %v2439
  %v2441 = vand.u32 %v247, 4294901760
  %v2442 = vsub.f32 %v247, %v2441
  %2443 = vmatpush1.msra.mxu0 %v2442
  %v2444 = vand.u32 %v246, 4294901760
  %v2445 = vsub.f32 %v246, %v2444
  %2446 = vmatprep.subr.mxu0 %v2445
  %v2447 = vand.u32 %v245, 4294901760
  %v2448 = vsub.f32 %v245, %v2447
  %2449 = vmatpush1.msra.mxu0 %v2448
  %2450 = vmatprep.subr.mxu0 0.0
  %2451 = vmatpush2.msra.mxu0 0.0
  %2452 = vmatprep.subr.mxu0 0.0
  %2453 = vmatpush2.msra.mxu0 0.0
  %2454 = vmatprep.subr.mxu0 0.0
  %2455 = vmatpush2.msra.mxu0 0.0
  %2456 = vmatprep.subr.mxu0 0.0
  %2457 = vmatpush2.msra.mxu0 0.0
  %2458 = vmatprep.subr.mxu0 0.0
  %2459 = vmatpush2.msra.mxu0 0.0
  %2460 = vmatprep.subr.mxu0 0.0
  %2461 = vmatpush2.msra.mxu0 0.0
  %2462 = vmatprep.subr.mxu0 0.0
  %2463 = vmatpush2.msra.mxu0 0.0
  %2464 = vmatprep.subr.mxu0 0.0
  %2465 = vmatpush2.msra.mxu0 0.0
  %2466 = vmatprep.subr.mxu0 0.0
  %2467 = vmatpush2.msra.mxu0 0.0
  %2468 = vmatprep.subr.mxu0 0.0
  %2469 = vmatpush2.msra.mxu0 0.0
  %2470 = vmatprep.subr.mxu0 0.0
  %2471 = vmatpush2.msra.mxu0 0.0
  %2472 = vmatprep.subr.mxu0 0.0
  %2473 = vmatpush2.msra.mxu0 0.0
  %2474 = vmatprep.subr.mxu0 0.0
  %2475 = vmatpush2.msra.mxu0 0.0
  %2476 = vmatprep.subr.mxu0 0.0
  %2477 = vmatpush2.msra.mxu0 0.0
  %2478 = vmatprep.subr.mxu0 0.0
  %2479 = vmatpush2.msra.mxu0 0.0
  %2480 = vmatprep.subr.mxu0 0.0
  %2481 = vmatpush2.msra.mxu0 0.0
  %2482 = vmatprep.mubr.f32.mxu0 0.0
  %v2483 = vand.u32 %v1961, 4294901760
  %v2484 = vsub.f32 %v1961, %v2483
  %2485 = vmatmul.mubr.f32.gmra.mxu0 %v2484
  %v2486 = vpop.f32.mrf.mxu0
  %v2487 = vadd.f32 %v2325, %v2486
  %v2488 = vpop.f32.mrf.mxu0
  %v2489 = vadd.f32 %v2327, %v2488
  %2490 = vmatprep.mubr.f32.mxu0 0.0
  %v2491 = vand.u32 %v1964, 4294901760
  %v2492 = vsub.f32 %v1964, %v2491
  %2493 = vmatmul.mubr.f32.gmra.mxu0 %v2492
  %v2494 = vpop.f32.mrf.mxu0
  %v2495 = vadd.f32 %v2332, %v2494
  %v2496 = vpop.f32.mrf.mxu0
  %v2497 = vadd.f32 %v2334, %v2496
  %2498 = vmatprep.mubr.f32.mxu0 0.0
  %v2499 = vand.u32 %v1967, 4294901760
  %v2500 = vsub.f32 %v1967, %v2499
  %2501 = vmatmul.mubr.f32.gmra.mxu0 %v2500
  %v2502 = vpop.f32.mrf.mxu0
  %v2503 = vadd.f32 %v2339, %v2502
  %v2504 = vpop.f32.mrf.mxu0
  %v2505 = vadd.f32 %v2341, %v2504
  %2506 = vmatprep.mubr.f32.mxu0 0.0
  %v2507 = vand.u32 %v1970, 4294901760
  %v2508 = vsub.f32 %v1970, %v2507
  %2509 = vmatmul.mubr.f32.gmra.mxu0 %v2508
  %v2510 = vpop.f32.mrf.mxu0
  %v2511 = vadd.f32 %v2346, %v2510
  %v2512 = vpop.f32.mrf.mxu0
  %v2513 = vadd.f32 %v2348, %v2512
  %2514 = vmatprep.mubr.f32.mxu0 0.0
  %v2515 = vand.u32 %v1973, 4294901760
  %v2516 = vsub.f32 %v1973, %v2515
  %2517 = vmatmul.mubr.f32.gmra.mxu0 %v2516
  %v2518 = vpop.f32.mrf.mxu0
  %v2519 = vadd.f32 %v2353, %v2518
  %v2520 = vpop.f32.mrf.mxu0
  %v2521 = vadd.f32 %v2355, %v2520
  %2522 = vmatprep.mubr.f32.mxu0 0.0
  %v2523 = vand.u32 %v1976, 4294901760
  %v2524 = vsub.f32 %v1976, %v2523
  %2525 = vmatmul.mubr.f32.gmra.mxu0 %v2524
  %v2526 = vpop.f32.mrf.mxu0
  %v2527 = vadd.f32 %v2360, %v2526
  %v2528 = vpop.f32.mrf.mxu0
  %v2529 = vadd.f32 %v2362, %v2528
  %2530 = vmatprep.mubr.f32.mxu0 0.0
  %v2531 = vand.u32 %v1979, 4294901760
  %v2532 = vsub.f32 %v1979, %v2531
  %2533 = vmatmul.mubr.f32.gmra.mxu0 %v2532
  %v2534 = vpop.f32.mrf.mxu0
  %v2535 = vadd.f32 %v2367, %v2534
  %v2536 = vpop.f32.mrf.mxu0
  %v2537 = vadd.f32 %v2369, %v2536
  %2538 = vmatprep.mubr.f32.mxu0 0.0
  %v2539 = vand.u32 %v1982, 4294901760
  %v2540 = vsub.f32 %v1982, %v2539
  %2541 = vmatmul.mubr.f32.gmra.mxu0 %v2540
  %v2542 = vpop.f32.mrf.mxu0
  %v2543 = vadd.f32 %v2374, %v2542
  %v2544 = vpop.f32.mrf.mxu0
  %v2545 = vadd.f32 %v2376, %v2544
  %2546 = vdwg.mxu0
  %2547 = vmatprep.subr.mxu0 0.0
  %2548 = vmatpush1.msra.mxu0 0.0
  %2549 = vmatprep.subr.mxu0 0.0
  %2550 = vmatpush1.msra.mxu0 0.0
  %2551 = vmatprep.subr.mxu0 0.0
  %2552 = vmatpush1.msra.mxu0 0.0
  %2553 = vmatprep.subr.mxu0 0.0
  %2554 = vmatpush1.msra.mxu0 0.0
  %2555 = vmatprep.subr.mxu0 0.0
  %2556 = vmatpush1.msra.mxu0 0.0
  %2557 = vmatprep.subr.mxu0 0.0
  %2558 = vmatpush1.msra.mxu0 0.0
  %v2559 = vand.u32 %v1901, 4294901760
  %2560 = vmatprep.subr.mxu0 %v2559
  %v2561 = vand.u32 %v1899, 4294901760
  %2562 = vmatpush1.msra.mxu0 %v2561
  %v2563 = vand.u32 %v1228, 4294901760
  %2564 = vmatprep.subr.mxu0 %v2563
  %v2565 = vand.u32 %v1226, 4294901760
  %2566 = vmatpush1.msra.mxu0 %v2565
  %v2567 = vand.u32 %v272, 4294901760
  %2568 = vmatprep.subr.mxu0 %v2567
  %v2569 = vand.u32 %v271, 4294901760
  %2570 = vmatpush1.msra.mxu0 %v2569
  %v2571 = vand.u32 %v268, 4294901760
  %2572 = vmatprep.subr.mxu0 %v2571
  %v2573 = vand.u32 %v267, 4294901760
  %2574 = vmatpush1.msra.mxu0 %v2573
  %v2575 = vand.u32 %v264, 4294901760
  %2576 = vmatprep.subr.mxu0 %v2575
  %v2577 = vand.u32 %v263, 4294901760
  %2578 = vmatpush1.msra.mxu0 %v2577
  %v2579 = vand.u32 %v260, 4294901760
  %2580 = vmatprep.subr.mxu0 %v2579
  %v2581 = vand.u32 %v259, 4294901760
  %2582 = vmatpush1.msra.mxu0 %v2581
  %v2583 = vand.u32 %v256, 4294901760
  %2584 = vmatprep.subr.mxu0 %v2583
  %v2585 = vand.u32 %v255, 4294901760
  %2586 = vmatpush1.msra.mxu0 %v2585
  %v2587 = vand.u32 %v252, 4294901760
  %2588 = vmatprep.subr.mxu0 %v2587
  %v2589 = vand.u32 %v251, 4294901760
  %2590 = vmatpush1.msra.mxu0 %v2589
  %v2591 = vand.u32 %v248, 4294901760
  %2592 = vmatprep.subr.mxu0 %v2591
  %v2593 = vand.u32 %v247, 4294901760
  %2594 = vmatpush1.msra.mxu0 %v2593
  %v2595 = vand.u32 %v246, 4294901760
  %2596 = vmatprep.subr.mxu0 %v2595
  %v2597 = vand.u32 %v245, 4294901760
  %2598 = vmatpush1.msra.mxu0 %v2597
  %2599 = vmatprep.subr.mxu0 0.0
  %2600 = vmatpush2.msra.mxu0 0.0
  %2601 = vmatprep.subr.mxu0 0.0
  %2602 = vmatpush2.msra.mxu0 0.0
  %2603 = vmatprep.subr.mxu0 0.0
  %2604 = vmatpush2.msra.mxu0 0.0
  %2605 = vmatprep.subr.mxu0 0.0
  %2606 = vmatpush2.msra.mxu0 0.0
  %2607 = vmatprep.subr.mxu0 0.0
  %2608 = vmatpush2.msra.mxu0 0.0
  %2609 = vmatprep.subr.mxu0 0.0
  %2610 = vmatpush2.msra.mxu0 0.0
  %2611 = vmatprep.subr.mxu0 0.0
  %2612 = vmatpush2.msra.mxu0 0.0
  %2613 = vmatprep.subr.mxu0 0.0
  %2614 = vmatpush2.msra.mxu0 0.0
  %2615 = vmatprep.subr.mxu0 0.0
  %2616 = vmatpush2.msra.mxu0 0.0
  %2617 = vmatprep.subr.mxu0 0.0
  %2618 = vmatpush2.msra.mxu0 0.0
  %2619 = vmatprep.subr.mxu0 0.0
  %2620 = vmatpush2.msra.mxu0 0.0
  %2621 = vmatprep.subr.mxu0 0.0
  %2622 = vmatpush2.msra.mxu0 0.0
  %2623 = vmatprep.subr.mxu0 0.0
  %2624 = vmatpush2.msra.mxu0 0.0
  %2625 = vmatprep.subr.mxu0 0.0
  %2626 = vmatpush2.msra.mxu0 0.0
  %2627 = vmatprep.subr.mxu0 0.0
  %2628 = vmatpush2.msra.mxu0 0.0
  %2629 = vmatprep.subr.mxu0 0.0
  %2630 = vmatpush2.msra.mxu0 0.0
  %2631 = vmatprep.mubr.f32.mxu0 0.0
  %v2632 = vand.u32 %v1961, 4294901760
  %v2633 = vsub.f32 %v1961, %v2632
  %v2634 = vand.u32 %v2633, 4294901760
  %2635 = vmatmul.mubr.f32.gmra.mxu0 %v2634
  %v2636 = vpop.f32.mrf.mxu0
  %v2637 = vadd.f32 %v2487, %v2636
  %v2638 = vpop.f32.mrf.mxu0
  %v2639 = vadd.f32 %v2489, %v2638
  %2640 = vmatprep.mubr.f32.mxu0 0.0
  %v2641 = vand.u32 %v1964, 4294901760
  %v2642 = vsub.f32 %v1964, %v2641
  %v2643 = vand.u32 %v2642, 4294901760
  %2644 = vmatmul.mubr.f32.gmra.mxu0 %v2643
  %v2645 = vpop.f32.mrf.mxu0
  %v2646 = vadd.f32 %v2495, %v2645
  %v2647 = vpop.f32.mrf.mxu0
  %v2648 = vadd.f32 %v2497, %v2647
  %2649 = vmatprep.mubr.f32.mxu0 0.0
  %v2650 = vand.u32 %v1967, 4294901760
  %v2651 = vsub.f32 %v1967, %v2650
  %v2652 = vand.u32 %v2651, 4294901760
  %2653 = vmatmul.mubr.f32.gmra.mxu0 %v2652
  %v2654 = vpop.f32.mrf.mxu0
  %v2655 = vadd.f32 %v2503, %v2654
  %v2656 = vpop.f32.mrf.mxu0
  %v2657 = vadd.f32 %v2505, %v2656
  %2658 = vmatprep.mubr.f32.mxu0 0.0
  %v2659 = vand.u32 %v1970, 4294901760
  %v2660 = vsub.f32 %v1970, %v2659
  %v2661 = vand.u32 %v2660, 4294901760
  %2662 = vmatmul.mubr.f32.gmra.mxu0 %v2661
  %v2663 = vpop.f32.mrf.mxu0
  %v2664 = vadd.f32 %v2511, %v2663
  %v2665 = vpop.f32.mrf.mxu0
  %v2666 = vadd.f32 %v2513, %v2665
  %2667 = vmatprep.mubr.f32.mxu0 0.0
  %v2668 = vand.u32 %v1973, 4294901760
  %v2669 = vsub.f32 %v1973, %v2668
  %v2670 = vand.u32 %v2669, 4294901760
  %2671 = vmatmul.mubr.f32.gmra.mxu0 %v2670
  %v2672 = vpop.f32.mrf.mxu0
  %v2673 = vadd.f32 %v2519, %v2672
  %v2674 = vpop.f32.mrf.mxu0
  %v2675 = vadd.f32 %v2521, %v2674
  %2676 = vmatprep.mubr.f32.mxu0 0.0
  %v2677 = vand.u32 %v1976, 4294901760
  %v2678 = vsub.f32 %v1976, %v2677
  %v2679 = vand.u32 %v2678, 4294901760
  %2680 = vmatmul.mubr.f32.gmra.mxu0 %v2679
  %v2681 = vpop.f32.mrf.mxu0
  %v2682 = vadd.f32 %v2527, %v2681
  %v2683 = vpop.f32.mrf.mxu0
  %v2684 = vadd.f32 %v2529, %v2683
  %2685 = vmatprep.mubr.f32.mxu0 0.0
  %v2686 = vand.u32 %v1979, 4294901760
  %v2687 = vsub.f32 %v1979, %v2686
  %v2688 = vand.u32 %v2687, 4294901760
  %2689 = vmatmul.mubr.f32.gmra.mxu0 %v2688
  %v2690 = vpop.f32.mrf.mxu0
  %v2691 = vadd.f32 %v2535, %v2690
  %v2692 = vpop.f32.mrf.mxu0
  %v2693 = vadd.f32 %v2537, %v2692
  %2694 = vmatprep.mubr.f32.mxu0 0.0
  %v2695 = vand.u32 %v1982, 4294901760
  %v2696 = vsub.f32 %v1982, %v2695
  %v2697 = vand.u32 %v2696, 4294901760
  %2698 = vmatmul.mubr.f32.gmra.mxu0 %v2697
  %v2699 = vpop.f32.mrf.mxu0
  %v2700 = vadd.f32 %v2543, %v2699
  %v2701 = vpop.f32.mrf.mxu0
  %v2702 = vadd.f32 %v2545, %v2701
  %2703 = vdwg.mxu0
  %2704 = vmatprep.subr.mxu0 0.0
  %2705 = vmatpush1.msra.mxu0 0.0
  %2706 = vmatprep.subr.mxu0 0.0
  %2707 = vmatpush1.msra.mxu0 0.0
  %2708 = vmatprep.subr.mxu0 0.0
  %2709 = vmatpush1.msra.mxu0 0.0
  %2710 = vmatprep.subr.mxu0 0.0
  %2711 = vmatpush1.msra.mxu0 0.0
  %2712 = vmatprep.subr.mxu0 0.0
  %2713 = vmatpush1.msra.mxu0 0.0
  %2714 = vmatprep.subr.mxu0 0.0
  %2715 = vmatpush1.msra.mxu0 0.0
  %v2716 = vand.u32 %v1901, 4294901760
  %v2717 = vsub.f32 %v1901, %v2716
  %v2718 = vand.u32 %v2717, 4294901760
  %2719 = vmatprep.subr.mxu0 %v2718
  %v2720 = vand.u32 %v1899, 4294901760
  %v2721 = vsub.f32 %v1899, %v2720
  %v2722 = vand.u32 %v2721, 4294901760
  %2723 = vmatpush1.msra.mxu0 %v2722
  %v2724 = vand.u32 %v1228, 4294901760
  %v2725 = vsub.f32 %v1228, %v2724
  %v2726 = vand.u32 %v2725, 4294901760
  %2727 = vmatprep.subr.mxu0 %v2726
  %v2728 = vand.u32 %v1226, 4294901760
  %v2729 = vsub.f32 %v1226, %v2728
  %v2730 = vand.u32 %v2729, 4294901760
  %2731 = vmatpush1.msra.mxu0 %v2730
  %v2732 = vand.u32 %v272, 4294901760
  %v2733 = vsub.f32 %v272, %v2732
  %v2734 = vand.u32 %v2733, 4294901760
  %2735 = vmatprep.subr.mxu0 %v2734
  %v2736 = vand.u32 %v271, 4294901760
  %v2737 = vsub.f32 %v271, %v2736
  %v2738 = vand.u32 %v2737, 4294901760
  %2739 = vmatpush1.msra.mxu0 %v2738
  %v2740 = vand.u32 %v268, 4294901760
  %v2741 = vsub.f32 %v268, %v2740
  %v2742 = vand.u32 %v2741, 4294901760
  %2743 = vmatprep.subr.mxu0 %v2742
  %v2744 = vand.u32 %v267, 4294901760
  %v2745 = vsub.f32 %v267, %v2744
  %v2746 = vand.u32 %v2745, 4294901760
  %2747 = vmatpush1.msra.mxu0 %v2746
  %v2748 = vand.u32 %v264, 4294901760
  %v2749 = vsub.f32 %v264, %v2748
  %v2750 = vand.u32 %v2749, 4294901760
  %2751 = vmatprep.subr.mxu0 %v2750
  %v2752 = vand.u32 %v263, 4294901760
  %v2753 = vsub.f32 %v263, %v2752
  %v2754 = vand.u32 %v2753, 4294901760
  %2755 = vmatpush1.msra.mxu0 %v2754
  %v2756 = vand.u32 %v260, 4294901760
  %v2757 = vsub.f32 %v260, %v2756
  %v2758 = vand.u32 %v2757, 4294901760
  %2759 = vmatprep.subr.mxu0 %v2758
  %v2760 = vand.u32 %v259, 4294901760
  %v2761 = vsub.f32 %v259, %v2760
  %v2762 = vand.u32 %v2761, 4294901760
  %2763 = vmatpush1.msra.mxu0 %v2762
  %v2764 = vand.u32 %v256, 4294901760
  %v2765 = vsub.f32 %v256, %v2764
  %v2766 = vand.u32 %v2765, 4294901760
  %2767 = vmatprep.subr.mxu0 %v2766
  %v2768 = vand.u32 %v255, 4294901760
  %v2769 = vsub.f32 %v255, %v2768
  %v2770 = vand.u32 %v2769, 4294901760
  %2771 = vmatpush1.msra.mxu0 %v2770
  %v2772 = vand.u32 %v252, 4294901760
  %v2773 = vsub.f32 %v252, %v2772
  %v2774 = vand.u32 %v2773, 4294901760
  %2775 = vmatprep.subr.mxu0 %v2774
  %v2776 = vand.u32 %v251, 4294901760
  %v2777 = vsub.f32 %v251, %v2776
  %v2778 = vand.u32 %v2777, 4294901760
  %2779 = vmatpush1.msra.mxu0 %v2778
  %v2780 = vand.u32 %v248, 4294901760
  %v2781 = vsub.f32 %v248, %v2780
  %v2782 = vand.u32 %v2781, 4294901760
  %2783 = vmatprep.subr.mxu0 %v2782
  %v2784 = vand.u32 %v247, 4294901760
  %v2785 = vsub.f32 %v247, %v2784
  %v2786 = vand.u32 %v2785, 4294901760
  %2787 = vmatpush1.msra.mxu0 %v2786
  %v2788 = vand.u32 %v246, 4294901760
  %v2789 = vsub.f32 %v246, %v2788
  %v2790 = vand.u32 %v2789, 4294901760
  %2791 = vmatprep.subr.mxu0 %v2790
  %v2792 = vand.u32 %v245, 4294901760
  %v2793 = vsub.f32 %v245, %v2792
  %v2794 = vand.u32 %v2793, 4294901760
  %2795 = vmatpush1.msra.mxu0 %v2794
  %2796 = vmatprep.subr.mxu0 0.0
  %2797 = vmatpush2.msra.mxu0 0.0
  %2798 = vmatprep.subr.mxu0 0.0
  %2799 = vmatpush2.msra.mxu0 0.0
  %2800 = vmatprep.subr.mxu0 0.0
  %2801 = vmatpush2.msra.mxu0 0.0
  %2802 = vmatprep.subr.mxu0 0.0
  %2803 = vmatpush2.msra.mxu0 0.0
  %2804 = vmatprep.subr.mxu0 0.0
  %2805 = vmatpush2.msra.mxu0 0.0
  %2806 = vmatprep.subr.mxu0 0.0
  %2807 = vmatpush2.msra.mxu0 0.0
  %2808 = vmatprep.subr.mxu0 0.0
  %2809 = vmatpush2.msra.mxu0 0.0
  %2810 = vmatprep.subr.mxu0 0.0
  %2811 = vmatpush2.msra.mxu0 0.0
  %2812 = vmatprep.subr.mxu0 0.0
  %2813 = vmatpush2.msra.mxu0 0.0
  %2814 = vmatprep.subr.mxu0 0.0
  %2815 = vmatpush2.msra.mxu0 0.0
  %2816 = vmatprep.subr.mxu0 0.0
  %2817 = vmatpush2.msra.mxu0 0.0
  %2818 = vmatprep.subr.mxu0 0.0
  %2819 = vmatpush2.msra.mxu0 0.0
  %2820 = vmatprep.subr.mxu0 0.0
  %2821 = vmatpush2.msra.mxu0 0.0
  %2822 = vmatprep.subr.mxu0 0.0
  %2823 = vmatpush2.msra.mxu0 0.0
  %2824 = vmatprep.subr.mxu0 0.0
  %2825 = vmatpush2.msra.mxu0 0.0
  %2826 = vmatprep.subr.mxu0 0.0
  %2827 = vmatpush2.msra.mxu0 0.0
  %2828 = vmatprep.mubr.f32.mxu0 0.0
  %v2829 = vand.u32 %v1961, 4294901760
  %2830 = vmatmul.mubr.f32.gmra.mxu0 %v2829
  %v2831 = vpop.f32.mrf.mxu0
  %v2832 = vadd.f32 %v2637, %v2831
  %v2833 = vpop.f32.mrf.mxu0
  %v2834 = vadd.f32 %v2639, %v2833
  %2835 = vmatprep.mubr.f32.mxu0 0.0
  %v2836 = vand.u32 %v1964, 4294901760
  %2837 = vmatmul.mubr.f32.gmra.mxu0 %v2836
  %v2838 = vpop.f32.mrf.mxu0
  %v2839 = vadd.f32 %v2646, %v2838
  %v2840 = vpop.f32.mrf.mxu0
  %v2841 = vadd.f32 %v2648, %v2840
  %2842 = vmatprep.mubr.f32.mxu0 0.0
  %v2843 = vand.u32 %v1967, 4294901760
  %2844 = vmatmul.mubr.f32.gmra.mxu0 %v2843
  %v2845 = vpop.f32.mrf.mxu0
  %v2846 = vadd.f32 %v2655, %v2845
  %v2847 = vpop.f32.mrf.mxu0
  %v2848 = vadd.f32 %v2657, %v2847
  %2849 = vmatprep.mubr.f32.mxu0 0.0
  %v2850 = vand.u32 %v1970, 4294901760
  %2851 = vmatmul.mubr.f32.gmra.mxu0 %v2850
  %v2852 = vpop.f32.mrf.mxu0
  %v2853 = vadd.f32 %v2664, %v2852
  %v2854 = vpop.f32.mrf.mxu0
  %v2855 = vadd.f32 %v2666, %v2854
  %2856 = vmatprep.mubr.f32.mxu0 0.0
  %v2857 = vand.u32 %v1973, 4294901760
  %2858 = vmatmul.mubr.f32.gmra.mxu0 %v2857
  %v2859 = vpop.f32.mrf.mxu0
  %v2860 = vadd.f32 %v2673, %v2859
  %v2861 = vpop.f32.mrf.mxu0
  %v2862 = vadd.f32 %v2675, %v2861
  %2863 = vmatprep.mubr.f32.mxu0 0.0
  %v2864 = vand.u32 %v1976, 4294901760
  %2865 = vmatmul.mubr.f32.gmra.mxu0 %v2864
  %v2866 = vpop.f32.mrf.mxu0
  %v2867 = vadd.f32 %v2682, %v2866
  %v2868 = vpop.f32.mrf.mxu0
  %v2869 = vadd.f32 %v2684, %v2868
  %2870 = vmatprep.mubr.f32.mxu0 0.0
  %v2871 = vand.u32 %v1979, 4294901760
  %2872 = vmatmul.mubr.f32.gmra.mxu0 %v2871
  %v2873 = vpop.f32.mrf.mxu0
  %v2874 = vadd.f32 %v2691, %v2873
  %v2875 = vpop.f32.mrf.mxu0
  %v2876 = vadd.f32 %v2693, %v2875
  %2877 = vmatprep.mubr.f32.mxu0 0.0
  %v2878 = vand.u32 %v1982, 4294901760
  %2879 = vmatmul.mubr.f32.gmra.mxu0 %v2878
  %v2880 = vpop.f32.mrf.mxu0
  %v2881 = vadd.f32 %v2700, %v2880
  %v2882 = vpop.f32.mrf.mxu0
  %v2883 = vadd.f32 %v2702, %v2882
  %2884 = vdwg.mxu0
  %2885 = vmatprep.subr.mxu0 0.0
  %2886 = vmatpush1.msra.mxu0 0.0
  %2887 = vmatprep.subr.mxu0 0.0
  %2888 = vmatpush1.msra.mxu0 0.0
  %2889 = vmatprep.subr.mxu0 0.0
  %2890 = vmatpush1.msra.mxu0 0.0
  %2891 = vmatprep.subr.mxu0 0.0
  %2892 = vmatpush1.msra.mxu0 0.0
  %2893 = vmatprep.subr.mxu0 0.0
  %2894 = vmatpush1.msra.mxu0 0.0
  %2895 = vmatprep.subr.mxu0 0.0
  %2896 = vmatpush1.msra.mxu0 0.0
  %v2897 = vand.u32 %v1901, 4294901760
  %2898 = vmatprep.subr.mxu0 %v2897
  %v2899 = vand.u32 %v1899, 4294901760
  %2900 = vmatpush1.msra.mxu0 %v2899
  %v2901 = vand.u32 %v1228, 4294901760
  %2902 = vmatprep.subr.mxu0 %v2901
  %v2903 = vand.u32 %v1226, 4294901760
  %2904 = vmatpush1.msra.mxu0 %v2903
  %v2905 = vand.u32 %v272, 4294901760
  %2906 = vmatprep.subr.mxu0 %v2905
  %v2907 = vand.u32 %v271, 4294901760
  %2908 = vmatpush1.msra.mxu0 %v2907
  %v2909 = vand.u32 %v268, 4294901760
  %2910 = vmatprep.subr.mxu0 %v2909
  %v2911 = vand.u32 %v267, 4294901760
  %2912 = vmatpush1.msra.mxu0 %v2911
  %v2913 = vand.u32 %v264, 4294901760
  %2914 = vmatprep.subr.mxu0 %v2913
  %v2915 = vand.u32 %v263, 4294901760
  %2916 = vmatpush1.msra.mxu0 %v2915
  %v2917 = vand.u32 %v260, 4294901760
  %2918 = vmatprep.subr.mxu0 %v2917
  %v2919 = vand.u32 %v259, 4294901760
  %2920 = vmatpush1.msra.mxu0 %v2919
  %v2921 = vand.u32 %v256, 4294901760
  %2922 = vmatprep.subr.mxu0 %v2921
  %v2923 = vand.u32 %v255, 4294901760
  %2924 = vmatpush1.msra.mxu0 %v2923
  %v2925 = vand.u32 %v252, 4294901760
  %2926 = vmatprep.subr.mxu0 %v2925
  %v2927 = vand.u32 %v251, 4294901760
  %2928 = vmatpush1.msra.mxu0 %v2927
  %v2929 = vand.u32 %v248, 4294901760
  %2930 = vmatprep.subr.mxu0 %v2929
  %v2931 = vand.u32 %v247, 4294901760
  %2932 = vmatpush1.msra.mxu0 %v2931
  %v2933 = vand.u32 %v246, 4294901760
  %2934 = vmatprep.subr.mxu0 %v2933
  %v2935 = vand.u32 %v245, 4294901760
  %2936 = vmatpush1.msra.mxu0 %v2935
  %2937 = vmatprep.subr.mxu0 0.0
  %2938 = vmatpush2.msra.mxu0 0.0
  %2939 = vmatprep.subr.mxu0 0.0
  %2940 = vmatpush2.msra.mxu0 0.0
  %2941 = vmatprep.subr.mxu0 0.0
  %2942 = vmatpush2.msra.mxu0 0.0
  %2943 = vmatprep.subr.mxu0 0.0
  %2944 = vmatpush2.msra.mxu0 0.0
  %2945 = vmatprep.subr.mxu0 0.0
  %2946 = vmatpush2.msra.mxu0 0.0
  %2947 = vmatprep.subr.mxu0 0.0
  %2948 = vmatpush2.msra.mxu0 0.0
  %2949 = vmatprep.subr.mxu0 0.0
  %2950 = vmatpush2.msra.mxu0 0.0
  %2951 = vmatprep.subr.mxu0 0.0
  %2952 = vmatpush2.msra.mxu0 0.0
  %2953 = vmatprep.subr.mxu0 0.0
  %2954 = vmatpush2.msra.mxu0 0.0
  %2955 = vmatprep.subr.mxu0 0.0
  %2956 = vmatpush2.msra.mxu0 0.0
  %2957 = vmatprep.subr.mxu0 0.0
  %2958 = vmatpush2.msra.mxu0 0.0
  %2959 = vmatprep.subr.mxu0 0.0
  %2960 = vmatpush2.msra.mxu0 0.0
  %2961 = vmatprep.subr.mxu0 0.0
  %2962 = vmatpush2.msra.mxu0 0.0
  %2963 = vmatprep.subr.mxu0 0.0
  %2964 = vmatpush2.msra.mxu0 0.0
  %2965 = vmatprep.subr.mxu0 0.0
  %2966 = vmatpush2.msra.mxu0 0.0
  %2967 = vmatprep.subr.mxu0 0.0
  %2968 = vmatpush2.msra.mxu0 0.0
  %2969 = vmatprep.mubr.f32.mxu0 0.0
  %v2970 = vand.u32 %v1961, 4294901760
  %2971 = vmatmul.mubr.f32.gmra.mxu0 %v2970
  %v2972 = vpop.f32.mrf.mxu0
  %v2973 = vadd.f32 %v2832, %v2972
  %v2974 = vpop.f32.mrf.mxu0
  %v2975 = vadd.f32 %v2834, %v2974
  %2976 = vmatprep.mubr.f32.mxu0 0.0
  %v2977 = vand.u32 %v1964, 4294901760
  %2978 = vmatmul.mubr.f32.gmra.mxu0 %v2977
  %v2979 = vpop.f32.mrf.mxu0
  %v2980 = vadd.f32 %v2839, %v2979
  %v2981 = vpop.f32.mrf.mxu0
  %v2982 = vadd.f32 %v2841, %v2981
  %2983 = vmatprep.mubr.f32.mxu0 0.0
  %v2984 = vand.u32 %v1967, 4294901760
  %2985 = vmatmul.mubr.f32.gmra.mxu0 %v2984
  %v2986 = vpop.f32.mrf.mxu0
  %v2987 = vadd.f32 %v2846, %v2986
  %v2988 = vpop.f32.mrf.mxu0
  %v2989 = vadd.f32 %v2848, %v2988
  %2990 = vmatprep.mubr.f32.mxu0 0.0
  %v2991 = vand.u32 %v1970, 4294901760
  %2992 = vmatmul.mubr.f32.gmra.mxu0 %v2991
  %v2993 = vpop.f32.mrf.mxu0
  %v2994 = vadd.f32 %v2853, %v2993
  %v2995 = vpop.f32.mrf.mxu0
  %v2996 = vadd.f32 %v2855, %v2995
  %2997 = vmatprep.mubr.f32.mxu0 0.0
  %v2998 = vand.u32 %v1973, 4294901760
  %2999 = vmatmul.mubr.f32.gmra.mxu0 %v2998
  %v3000 = vpop.f32.mrf.mxu0
  %v3001 = vadd.f32 %v2860, %v3000
  %v3002 = vpop.f32.mrf.mxu0
  %v3003 = vadd.f32 %v2862, %v3002
  %3004 = vmatprep.mubr.f32.mxu0 0.0
  %v3005 = vand.u32 %v1976, 4294901760
  %3006 = vmatmul.mubr.f32.gmra.mxu0 %v3005
  %v3007 = vpop.f32.mrf.mxu0
  %v3008 = vadd.f32 %v2867, %v3007
  %v3009 = vpop.f32.mrf.mxu0
  %v3010 = vadd.f32 %v2869, %v3009
  %3011 = vmatprep.mubr.f32.mxu0 0.0
  %v3012 = vand.u32 %v1979, 4294901760
  %3013 = vmatmul.mubr.f32.gmra.mxu0 %v3012
  %v3014 = vpop.f32.mrf.mxu0
  %v3015 = vadd.f32 %v2874, %v3014
  %v3016 = vpop.f32.mrf.mxu0
  %v3017 = vadd.f32 %v2876, %v3016
  %3018 = vmatprep.mubr.f32.mxu0 0.0
  %v3019 = vand.u32 %v1982, 4294901760
  %3020 = vmatmul.mubr.f32.gmra.mxu0 %v3019
  %v3021 = vpop.f32.mrf.mxu0
  %v3022 = vadd.f32 %v2881, %v3021
  %v3023 = vpop.f32.mrf.mxu0
  %v3024 = vadd.f32 %v2883, %v3023
  %3025 = vdwg.mxu0
  %3026 = vst [vmem:[%s6] sm:$0xff] %v2973
  %3027 = vst [vmem:[%s6 + $0x8] sm:$0xff] %v2975
  %3028 = vst [vmem:[%s42] sm:$0xff] %v2980
  %3029 = vst [vmem:[%s42 + $0x8] sm:$0xff] %v2982
  %3030 = vst [vmem:[%s56] sm:$0xff] %v2987
  %3031 = vst [vmem:[%s56 + $0x8] sm:$0xff] %v2989
  %3032 = vst [vmem:[%s70] sm:$0xff] %v2994
  %3033 = vst [vmem:[%s70 + $0x8] sm:$0xff] %v2996
  %3034 = vst [vmem:[%s84] sm:$0xff] %v3001
  %3035 = vst [vmem:[%s84 + $0x8] sm:$0xff] %v3003
  %3036 = vst [vmem:[%s98] sm:$0xff] %v3008
  %3037 = vst [vmem:[%s98 + $0x8] sm:$0xff] %v3010
  %3038 = vst [vmem:[%s112] sm:$0xff] %v3015
  %3039 = vst [vmem:[%s112 + $0x8] sm:$0xff] %v3017
  %3040 = vst [vmem:[%s126] sm:$0xff] %v3022
  %3041 = vst [vmem:[%s126 + $0x8] sm:$0xff] %v3024
  %v3042 = vld [vmem:[%s133] sm:$0xff]
  %v3043 = vld [vmem:[%s133 + $0x8] sm:$0xff]
  %v3044 = vld [vmem:[%s147] sm:$0xff]
  %v3045 = vld [vmem:[%s147 + $0x8] sm:$0xff]
  %v3046 = vld [vmem:[%s161] sm:$0xff]
  %v3047 = vld [vmem:[%s161 + $0x8] sm:$0xff]
  %v3048 = vld [vmem:[%s175] sm:$0xff]
  %v3049 = vld [vmem:[%s175 + $0x8] sm:$0xff]
  %v3050 = vld [vmem:[%s189] sm:$0xff]
  %v3051 = vld [vmem:[%s189 + $0x8] sm:$0xff]
  %v3052 = vld [vmem:[%s203] sm:$0xff]
  %v3053 = vld [vmem:[%s203 + $0x8] sm:$0xff]
  %v3054 = vld [vmem:[%s217] sm:$0xff]
  %v3055 = vld [vmem:[%s217 + $0x8] sm:$0xff]
  %v3056 = vld [vmem:[%s231] sm:$0xff]
  %v3057 = vld [vmem:[%s231 + $0x8] sm:$0xff]
  %3058 = vmatprep.subr.mxu0 0.0
  %3059 = vmatpush1.msra.mxu0 0.0
  %3060 = vmatprep.subr.mxu0 0.0
  %3061 = vmatpush1.msra.mxu0 0.0
  %3062 = vmatprep.subr.mxu0 0.0
  %3063 = vmatpush1.msra.mxu0 0.0
  %3064 = vmatprep.subr.mxu0 0.0
  %3065 = vmatpush1.msra.mxu0 0.0
  %3066 = vmatprep.subr.mxu0 0.0
  %3067 = vmatpush1.msra.mxu0 0.0
  %3068 = vmatprep.subr.mxu0 0.0
  %3069 = vmatpush1.msra.mxu0 0.0
  %v3070 = vand.u32 %v1901, 4294901760
  %3071 = vmatprep.subr.mxu0 %v3070
  %v3072 = vand.u32 %v1899, 4294901760
  %3073 = vmatpush1.msra.mxu0 %v3072
  %v3074 = vand.u32 %v1228, 4294901760
  %3075 = vmatprep.subr.mxu0 %v3074
  %v3076 = vand.u32 %v1226, 4294901760
  %3077 = vmatpush1.msra.mxu0 %v3076
  %v3078 = vand.u32 %v3057, 4294901760
  %3079 = vmatprep.subr.mxu0 %v3078
  %v3080 = vand.u32 %v3056, 4294901760
  %3081 = vmatpush1.msra.mxu0 %v3080
  %v3082 = vand.u32 %v3055, 4294901760
  %3083 = vmatprep.subr.mxu0 %v3082
  %v3084 = vand.u32 %v3054, 4294901760
  %3085 = vmatpush1.msra.mxu0 %v3084
  %v3086 = vand.u32 %v3053, 4294901760
  %3087 = vmatprep.subr.mxu0 %v3086
  %v3088 = vand.u32 %v3052, 4294901760
  %3089 = vmatpush1.msra.mxu0 %v3088
  %v3090 = vand.u32 %v3051, 4294901760
  %3091 = vmatprep.subr.mxu0 %v3090
  %v3092 = vand.u32 %v3050, 4294901760
  %3093 = vmatpush1.msra.mxu0 %v3092
  %v3094 = vand.u32 %v3049, 4294901760
  %3095 = vmatprep.subr.mxu0 %v3094
  %v3096 = vand.u32 %v3048, 4294901760
  %3097 = vmatpush1.msra.mxu0 %v3096
  %v3098 = vand.u32 %v3047, 4294901760
  %3099 = vmatprep.subr.mxu0 %v3098
  %v3100 = vand.u32 %v3046, 4294901760
  %3101 = vmatpush1.msra.mxu0 %v3100
  %v3102 = vand.u32 %v3045, 4294901760
  %3103 = vmatprep.subr.mxu0 %v3102
  %v3104 = vand.u32 %v3044, 4294901760
  %3105 = vmatpush1.msra.mxu0 %v3104
  %v3106 = vand.u32 %v3043, 4294901760
  %3107 = vmatprep.subr.mxu0 %v3106
  %v3108 = vand.u32 %v3042, 4294901760
  %3109 = vmatpush1.msra.mxu0 %v3108
  %3110 = vmatprep.subr.mxu0 0.0
  %3111 = vmatpush2.msra.mxu0 0.0
  %3112 = vmatprep.subr.mxu0 0.0
  %3113 = vmatpush2.msra.mxu0 0.0
  %3114 = vmatprep.subr.mxu0 0.0
  %3115 = vmatpush2.msra.mxu0 0.0
  %3116 = vmatprep.subr.mxu0 0.0
  %3117 = vmatpush2.msra.mxu0 0.0
  %3118 = vmatprep.subr.mxu0 0.0
  %3119 = vmatpush2.msra.mxu0 0.0
  %3120 = vmatprep.subr.mxu0 0.0
  %3121 = vmatpush2.msra.mxu0 0.0
  %3122 = vmatprep.subr.mxu0 0.0
  %3123 = vmatpush2.msra.mxu0 0.0
  %3124 = vmatprep.subr.mxu0 0.0
  %3125 = vmatpush2.msra.mxu0 0.0
  %3126 = vmatprep.subr.mxu0 0.0
  %3127 = vmatpush2.msra.mxu0 0.0
  %3128 = vmatprep.subr.mxu0 0.0
  %3129 = vmatpush2.msra.mxu0 0.0
  %3130 = vmatprep.subr.mxu0 0.0
  %3131 = vmatpush2.msra.mxu0 0.0
  %3132 = vmatprep.subr.mxu0 0.0
  %3133 = vmatpush2.msra.mxu0 0.0
  %3134 = vmatprep.subr.mxu0 0.0
  %3135 = vmatpush2.msra.mxu0 0.0
  %3136 = vmatprep.subr.mxu0 0.0
  %3137 = vmatpush2.msra.mxu0 0.0
  %3138 = vmatprep.subr.mxu0 0.0
  %3139 = vmatpush2.msra.mxu0 0.0
  %3140 = vmatprep.subr.mxu0 0.0
  %3141 = vmatpush2.msra.mxu0 0.0
  %3142 = vmatprep.mubr.f32.mxu0 0.0
  %v3143 = vand.u32 %v1961, 4294901760
  %v3144 = vsub.f32 %v1961, %v3143
  %v3145 = vand.u32 %v3144, 4294901760
  %v3146 = vsub.f32 %v3144, %v3145
  %v3147 = vand.u32 %v3146, 4294901760
  %3148 = vmatmul.mubr.f32.gmra.mxu0 %v3147
  %v3149 = vpop.f32.mrf.mxu0
  %v3150 = vadd.f32 %v1922, %v3149
  %v3151 = vpop.f32.mrf.mxu0
  %v3152 = vadd.f32 %v1922, %v3151
  %3153 = vmatprep.mubr.f32.mxu0 0.0
  %v3154 = vand.u32 %v1964, 4294901760
  %v3155 = vsub.f32 %v1964, %v3154
  %v3156 = vand.u32 %v3155, 4294901760
  %v3157 = vsub.f32 %v3155, %v3156
  %v3158 = vand.u32 %v3157, 4294901760
  %3159 = vmatmul.mubr.f32.gmra.mxu0 %v3158
  %v3160 = vpop.f32.mrf.mxu0
  %v3161 = vadd.f32 %v1927, %v3160
  %v3162 = vpop.f32.mrf.mxu0
  %v3163 = vadd.f32 %v1927, %v3162
  %3164 = vmatprep.mubr.f32.mxu0 0.0
  %v3165 = vand.u32 %v1967, 4294901760
  %v3166 = vsub.f32 %v1967, %v3165
  %v3167 = vand.u32 %v3166, 4294901760
  %v3168 = vsub.f32 %v3166, %v3167
  %v3169 = vand.u32 %v3168, 4294901760
  %3170 = vmatmul.mubr.f32.gmra.mxu0 %v3169
  %v3171 = vpop.f32.mrf.mxu0
  %v3172 = vadd.f32 %v1932, %v3171
  %v3173 = vpop.f32.mrf.mxu0
  %v3174 = vadd.f32 %v1932, %v3173
  %3175 = vmatprep.mubr.f32.mxu0 0.0
  %v3176 = vand.u32 %v1970, 4294901760
  %v3177 = vsub.f32 %v1970, %v3176
  %v3178 = vand.u32 %v3177, 4294901760
  %v3179 = vsub.f32 %v3177, %v3178
  %v3180 = vand.u32 %v3179, 4294901760
  %3181 = vmatmul.mubr.f32.gmra.mxu0 %v3180
  %v3182 = vpop.f32.mrf.mxu0
  %v3183 = vadd.f32 %v1937, %v3182
  %v3184 = vpop.f32.mrf.mxu0
  %v3185 = vadd.f32 %v1937, %v3184
  %3186 = vmatprep.mubr.f32.mxu0 0.0
  %v3187 = vand.u32 %v1973, 4294901760
  %v3188 = vsub.f32 %v1973, %v3187
  %v3189 = vand.u32 %v3188, 4294901760
  %v3190 = vsub.f32 %v3188, %v3189
  %v3191 = vand.u32 %v3190, 4294901760
  %3192 = vmatmul.mubr.f32.gmra.mxu0 %v3191
  %v3193 = vpop.f32.mrf.mxu0
  %v3194 = vadd.f32 %v1942, %v3193
  %v3195 = vpop.f32.mrf.mxu0
  %v3196 = vadd.f32 %v1942, %v3195
  %3197 = vmatprep.mubr.f32.mxu0 0.0
  %v3198 = vand.u32 %v1976, 4294901760
  %v3199 = vsub.f32 %v1976, %v3198
  %v3200 = vand.u32 %v3199, 4294901760
  %v3201 = vsub.f32 %v3199, %v3200
  %v3202 = vand.u32 %v3201, 4294901760
  %3203 = vmatmul.mubr.f32.gmra.mxu0 %v3202
  %v3204 = vpop.f32.mrf.mxu0
  %v3205 = vadd.f32 %v1947, %v3204
  %v3206 = vpop.f32.mrf.mxu0
  %v3207 = vadd.f32 %v1947, %v3206
  %3208 = vmatprep.mubr.f32.mxu0 0.0
  %v3209 = vand.u32 %v1979, 4294901760
  %v3210 = vsub.f32 %v1979, %v3209
  %v3211 = vand.u32 %v3210, 4294901760
  %v3212 = vsub.f32 %v3210, %v3211
  %v3213 = vand.u32 %v3212, 4294901760
  %3214 = vmatmul.mubr.f32.gmra.mxu0 %v3213
  %v3215 = vpop.f32.mrf.mxu0
  %v3216 = vadd.f32 %v1952, %v3215
  %v3217 = vpop.f32.mrf.mxu0
  %v3218 = vadd.f32 %v1952, %v3217
  %3219 = vmatprep.mubr.f32.mxu0 0.0
  %v3220 = vand.u32 %v1982, 4294901760
  %v3221 = vsub.f32 %v1982, %v3220
  %v3222 = vand.u32 %v3221, 4294901760
  %v3223 = vsub.f32 %v3221, %v3222
  %v3224 = vand.u32 %v3223, 4294901760
  %3225 = vmatmul.mubr.f32.gmra.mxu0 %v3224
  %v3226 = vpop.f32.mrf.mxu0
  %v3227 = vadd.f32 %v1957, %v3226
  %v3228 = vpop.f32.mrf.mxu0
  %v3229 = vadd.f32 %v1957, %v3228
  %3230 = vdwg.mxu0
  %3231 = vmatprep.subr.mxu0 0.0
  %3232 = vmatpush1.msra.mxu0 0.0
  %3233 = vmatprep.subr.mxu0 0.0
  %3234 = vmatpush1.msra.mxu0 0.0
  %3235 = vmatprep.subr.mxu0 0.0
  %3236 = vmatpush1.msra.mxu0 0.0
  %3237 = vmatprep.subr.mxu0 0.0
  %3238 = vmatpush1.msra.mxu0 0.0
  %3239 = vmatprep.subr.mxu0 0.0
  %3240 = vmatpush1.msra.mxu0 0.0
  %3241 = vmatprep.subr.mxu0 0.0
  %3242 = vmatpush1.msra.mxu0 0.0
  %v3243 = vand.u32 %v1901, 4294901760
  %v3244 = vsub.f32 %v1901, %v3243
  %v3245 = vand.u32 %v3244, 4294901760
  %v3246 = vsub.f32 %v3244, %v3245
  %v3247 = vand.u32 %v3246, 4294901760
  %3248 = vmatprep.subr.mxu0 %v3247
  %v3249 = vand.u32 %v1899, 4294901760
  %v3250 = vsub.f32 %v1899, %v3249
  %v3251 = vand.u32 %v3250, 4294901760
  %v3252 = vsub.f32 %v3250, %v3251
  %v3253 = vand.u32 %v3252, 4294901760
  %3254 = vmatpush1.msra.mxu0 %v3253
  %v3255 = vand.u32 %v1228, 4294901760
  %v3256 = vsub.f32 %v1228, %v3255
  %v3257 = vand.u32 %v3256, 4294901760
  %v3258 = vsub.f32 %v3256, %v3257
  %v3259 = vand.u32 %v3258, 4294901760
  %3260 = vmatprep.subr.mxu0 %v3259
  %v3261 = vand.u32 %v1226, 4294901760
  %v3262 = vsub.f32 %v1226, %v3261
  %v3263 = vand.u32 %v3262, 4294901760
  %v3264 = vsub.f32 %v3262, %v3263
  %v3265 = vand.u32 %v3264, 4294901760
  %3266 = vmatpush1.msra.mxu0 %v3265
  %v3267 = vand.u32 %v3057, 4294901760
  %v3268 = vsub.f32 %v3057, %v3267
  %v3269 = vand.u32 %v3268, 4294901760
  %v3270 = vsub.f32 %v3268, %v3269
  %v3271 = vand.u32 %v3270, 4294901760
  %3272 = vmatprep.subr.mxu0 %v3271
  %v3273 = vand.u32 %v3056, 4294901760
  %v3274 = vsub.f32 %v3056, %v3273
  %v3275 = vand.u32 %v3274, 4294901760
  %v3276 = vsub.f32 %v3274, %v3275
  %v3277 = vand.u32 %v3276, 4294901760
  %3278 = vmatpush1.msra.mxu0 %v3277
  %v3279 = vand.u32 %v3055, 4294901760
  %v3280 = vsub.f32 %v3055, %v3279
  %v3281 = vand.u32 %v3280, 4294901760
  %v3282 = vsub.f32 %v3280, %v3281
  %v3283 = vand.u32 %v3282, 4294901760
  %3284 = vmatprep.subr.mxu0 %v3283
  %v3285 = vand.u32 %v3054, 4294901760
  %v3286 = vsub.f32 %v3054, %v3285
  %v3287 = vand.u32 %v3286, 4294901760
  %v3288 = vsub.f32 %v3286, %v3287
  %v3289 = vand.u32 %v3288, 4294901760
  %3290 = vmatpush1.msra.mxu0 %v3289
  %v3291 = vand.u32 %v3053, 4294901760
  %v3292 = vsub.f32 %v3053, %v3291
  %v3293 = vand.u32 %v3292, 4294901760
  %v3294 = vsub.f32 %v3292, %v3293
  %v3295 = vand.u32 %v3294, 4294901760
  %3296 = vmatprep.subr.mxu0 %v3295
  %v3297 = vand.u32 %v3052, 4294901760
  %v3298 = vsub.f32 %v3052, %v3297
  %v3299 = vand.u32 %v3298, 4294901760
  %v3300 = vsub.f32 %v3298, %v3299
  %v3301 = vand.u32 %v3300, 4294901760
  %3302 = vmatpush1.msra.mxu0 %v3301
  %v3303 = vand.u32 %v3051, 4294901760
  %v3304 = vsub.f32 %v3051, %v3303
  %v3305 = vand.u32 %v3304, 4294901760
  %v3306 = vsub.f32 %v3304, %v3305
  %v3307 = vand.u32 %v3306, 4294901760
  %3308 = vmatprep.subr.mxu0 %v3307
  %v3309 = vand.u32 %v3050, 4294901760
  %v3310 = vsub.f32 %v3050, %v3309
  %v3311 = vand.u32 %v3310, 4294901760
  %v3312 = vsub.f32 %v3310, %v3311
  %v3313 = vand.u32 %v3312, 4294901760
  %3314 = vmatpush1.msra.mxu0 %v3313
  %v3315 = vand.u32 %v3049, 4294901760
  %v3316 = vsub.f32 %v3049, %v3315
  %v3317 = vand.u32 %v3316, 4294901760
  %v3318 = vsub.f32 %v3316, %v3317
  %v3319 = vand.u32 %v3318, 4294901760
  %3320 = vmatprep.subr.mxu0 %v3319
  %v3321 = vand.u32 %v3048, 4294901760
  %v3322 = vsub.f32 %v3048, %v3321
  %v3323 = vand.u32 %v3322, 4294901760
  %v3324 = vsub.f32 %v3322, %v3323
  %v3325 = vand.u32 %v3324, 4294901760
  %3326 = vmatpush1.msra.mxu0 %v3325
  %v3327 = vand.u32 %v3047, 4294901760
  %v3328 = vsub.f32 %v3047, %v3327
  %v3329 = vand.u32 %v3328, 4294901760
  %v3330 = vsub.f32 %v3328, %v3329
  %v3331 = vand.u32 %v3330, 4294901760
  %3332 = vmatprep.subr.mxu0 %v3331
  %v3333 = vand.u32 %v3046, 4294901760
  %v3334 = vsub.f32 %v3046, %v3333
  %v3335 = vand.u32 %v3334, 4294901760
  %v3336 = vsub.f32 %v3334, %v3335
  %v3337 = vand.u32 %v3336, 4294901760
  %3338 = vmatpush1.msra.mxu0 %v3337
  %v3339 = vand.u32 %v3045, 4294901760
  %v3340 = vsub.f32 %v3045, %v3339
  %v3341 = vand.u32 %v3340, 4294901760
  %v3342 = vsub.f32 %v3340, %v3341
  %v3343 = vand.u32 %v3342, 4294901760
  %3344 = vmatprep.subr.mxu0 %v3343
  %v3345 = vand.u32 %v3044, 4294901760
  %v3346 = vsub.f32 %v3044, %v3345
  %v3347 = vand.u32 %v3346, 4294901760
  %v3348 = vsub.f32 %v3346, %v3347
  %v3349 = vand.u32 %v3348, 4294901760
  %3350 = vmatpush1.msra.mxu0 %v3349
  %v3351 = vand.u32 %v3043, 4294901760
  %v3352 = vsub.f32 %v3043, %v3351
  %v3353 = vand.u32 %v3352, 4294901760
  %v3354 = vsub.f32 %v3352, %v3353
  %v3355 = vand.u32 %v3354, 4294901760
  %3356 = vmatprep.subr.mxu0 %v3355
  %v3357 = vand.u32 %v3042, 4294901760
  %v3358 = vsub.f32 %v3042, %v3357
  %v3359 = vand.u32 %v3358, 4294901760
  %v3360 = vsub.f32 %v3358, %v3359
  %v3361 = vand.u32 %v3360, 4294901760
  %3362 = vmatpush1.msra.mxu0 %v3361
  %3363 = vmatprep.subr.mxu0 0.0
  %3364 = vmatpush2.msra.mxu0 0.0
  %3365 = vmatprep.subr.mxu0 0.0
  %3366 = vmatpush2.msra.mxu0 0.0
  %3367 = vmatprep.subr.mxu0 0.0
  %3368 = vmatpush2.msra.mxu0 0.0
  %3369 = vmatprep.subr.mxu0 0.0
  %3370 = vmatpush2.msra.mxu0 0.0
  %3371 = vmatprep.subr.mxu0 0.0
  %3372 = vmatpush2.msra.mxu0 0.0
  %3373 = vmatprep.subr.mxu0 0.0
  %3374 = vmatpush2.msra.mxu0 0.0
  %3375 = vmatprep.subr.mxu0 0.0
  %3376 = vmatpush2.msra.mxu0 0.0
  %3377 = vmatprep.subr.mxu0 0.0
  %3378 = vmatpush2.msra.mxu0 0.0
  %3379 = vmatprep.subr.mxu0 0.0
  %3380 = vmatpush2.msra.mxu0 0.0
  %3381 = vmatprep.subr.mxu0 0.0
  %3382 = vmatpush2.msra.mxu0 0.0
  %3383 = vmatprep.subr.mxu0 0.0
  %3384 = vmatpush2.msra.mxu0 0.0
  %3385 = vmatprep.subr.mxu0 0.0
  %3386 = vmatpush2.msra.mxu0 0.0
  %3387 = vmatprep.subr.mxu0 0.0
  %3388 = vmatpush2.msra.mxu0 0.0
  %3389 = vmatprep.subr.mxu0 0.0
  %3390 = vmatpush2.msra.mxu0 0.0
  %3391 = vmatprep.subr.mxu0 0.0
  %3392 = vmatpush2.msra.mxu0 0.0
  %3393 = vmatprep.subr.mxu0 0.0
  %3394 = vmatpush2.msra.mxu0 0.0
  %3395 = vmatprep.mubr.f32.mxu0 0.0
  %v3396 = vand.u32 %v1961, 4294901760
  %3397 = vmatmul.mubr.f32.gmra.mxu0 %v3396
  %v3398 = vpop.f32.mrf.mxu0
  %v3399 = vadd.f32 %v3150, %v3398
  %v3400 = vpop.f32.mrf.mxu0
  %v3401 = vadd.f32 %v3152, %v3400
  %3402 = vmatprep.mubr.f32.mxu0 0.0
  %v3403 = vand.u32 %v1964, 4294901760
  %3404 = vmatmul.mubr.f32.gmra.mxu0 %v3403
  %v3405 = vpop.f32.mrf.mxu0
  %v3406 = vadd.f32 %v3161, %v3405
  %v3407 = vpop.f32.mrf.mxu0
  %v3408 = vadd.f32 %v3163, %v3407
  %3409 = vmatprep.mubr.f32.mxu0 0.0
  %v3410 = vand.u32 %v1967, 4294901760
  %3411 = vmatmul.mubr.f32.gmra.mxu0 %v3410
  %v3412 = vpop.f32.mrf.mxu0
  %v3413 = vadd.f32 %v3172, %v3412
  %v3414 = vpop.f32.mrf.mxu0
  %v3415 = vadd.f32 %v3174, %v3414
  %3416 = vmatprep.mubr.f32.mxu0 0.0
  %v3417 = vand.u32 %v1970, 4294901760
  %3418 = vmatmul.mubr.f32.gmra.mxu0 %v3417
  %v3419 = vpop.f32.mrf.mxu0
  %v3420 = vadd.f32 %v3183, %v3419
  %v3421 = vpop.f32.mrf.mxu0
  %v3422 = vadd.f32 %v3185, %v3421
  %3423 = vmatprep.mubr.f32.mxu0 0.0
  %v3424 = vand.u32 %v1973, 4294901760
  %3425 = vmatmul.mubr.f32.gmra.mxu0 %v3424
  %v3426 = vpop.f32.mrf.mxu0
  %v3427 = vadd.f32 %v3194, %v3426
  %v3428 = vpop.f32.mrf.mxu0
  %v3429 = vadd.f32 %v3196, %v3428
  %3430 = vmatprep.mubr.f32.mxu0 0.0
  %v3431 = vand.u32 %v1976, 4294901760
  %3432 = vmatmul.mubr.f32.gmra.mxu0 %v3431
  %v3433 = vpop.f32.mrf.mxu0
  %v3434 = vadd.f32 %v3205, %v3433
  %v3435 = vpop.f32.mrf.mxu0
  %v3436 = vadd.f32 %v3207, %v3435
  %3437 = vmatprep.mubr.f32.mxu0 0.0
  %v3438 = vand.u32 %v1979, 4294901760
  %3439 = vmatmul.mubr.f32.gmra.mxu0 %v3438
  %v3440 = vpop.f32.mrf.mxu0
  %v3441 = vadd.f32 %v3216, %v3440
  %v3442 = vpop.f32.mrf.mxu0
  %v3443 = vadd.f32 %v3218, %v3442
  %3444 = vmatprep.mubr.f32.mxu0 0.0
  %v3445 = vand.u32 %v1982, 4294901760
  %3446 = vmatmul.mubr.f32.gmra.mxu0 %v3445
  %v3447 = vpop.f32.mrf.mxu0
  %v3448 = vadd.f32 %v3227, %v3447
  %v3449 = vpop.f32.mrf.mxu0
  %v3450 = vadd.f32 %v3229, %v3449
  %3451 = vdwg.mxu0
  %3452 = vmatprep.subr.mxu0 0.0
  %3453 = vmatpush1.msra.mxu0 0.0
  %3454 = vmatprep.subr.mxu0 0.0
  %3455 = vmatpush1.msra.mxu0 0.0
  %3456 = vmatprep.subr.mxu0 0.0
  %3457 = vmatpush1.msra.mxu0 0.0
  %3458 = vmatprep.subr.mxu0 0.0
  %3459 = vmatpush1.msra.mxu0 0.0
  %3460 = vmatprep.subr.mxu0 0.0
  %3461 = vmatpush1.msra.mxu0 0.0
  %3462 = vmatprep.subr.mxu0 0.0
  %3463 = vmatpush1.msra.mxu0 0.0
  %v3464 = vand.u32 %v1901, 4294901760
  %v3465 = vsub.f32 %v1901, %v3464
  %3466 = vmatprep.subr.mxu0 %v3465
  %v3467 = vand.u32 %v1899, 4294901760
  %v3468 = vsub.f32 %v1899, %v3467
  %3469 = vmatpush1.msra.mxu0 %v3468
  %v3470 = vand.u32 %v1228, 4294901760
  %v3471 = vsub.f32 %v1228, %v3470
  %3472 = vmatprep.subr.mxu0 %v3471
  %v3473 = vand.u32 %v1226, 4294901760
  %v3474 = vsub.f32 %v1226, %v3473
  %3475 = vmatpush1.msra.mxu0 %v3474
  %v3476 = vand.u32 %v3057, 4294901760
  %v3477 = vsub.f32 %v3057, %v3476
  %3478 = vmatprep.subr.mxu0 %v3477
  %v3479 = vand.u32 %v3056, 4294901760
  %v3480 = vsub.f32 %v3056, %v3479
  %3481 = vmatpush1.msra.mxu0 %v3480
  %v3482 = vand.u32 %v3055, 4294901760
  %v3483 = vsub.f32 %v3055, %v3482
  %3484 = vmatprep.subr.mxu0 %v3483
  %v3485 = vand.u32 %v3054, 4294901760
  %v3486 = vsub.f32 %v3054, %v3485
  %3487 = vmatpush1.msra.mxu0 %v3486
  %v3488 = vand.u32 %v3053, 4294901760
  %v3489 = vsub.f32 %v3053, %v3488
  %3490 = vmatprep.subr.mxu0 %v3489
  %v3491 = vand.u32 %v3052, 4294901760
  %v3492 = vsub.f32 %v3052, %v3491
  %3493 = vmatpush1.msra.mxu0 %v3492
  %v3494 = vand.u32 %v3051, 4294901760
  %v3495 = vsub.f32 %v3051, %v3494
  %3496 = vmatprep.subr.mxu0 %v3495
  %v3497 = vand.u32 %v3050, 4294901760
  %v3498 = vsub.f32 %v3050, %v3497
  %3499 = vmatpush1.msra.mxu0 %v3498
  %v3500 = vand.u32 %v3049, 4294901760
  %v3501 = vsub.f32 %v3049, %v3500
  %3502 = vmatprep.subr.mxu0 %v3501
  %v3503 = vand.u32 %v3048, 4294901760
  %v3504 = vsub.f32 %v3048, %v3503
  %3505 = vmatpush1.msra.mxu0 %v3504
  %v3506 = vand.u32 %v3047, 4294901760
  %v3507 = vsub.f32 %v3047, %v3506
  %3508 = vmatprep.subr.mxu0 %v3507
  %v3509 = vand.u32 %v3046, 4294901760
  %v3510 = vsub.f32 %v3046, %v3509
  %3511 = vmatpush1.msra.mxu0 %v3510
  %v3512 = vand.u32 %v3045, 4294901760
  %v3513 = vsub.f32 %v3045, %v3512
  %3514 = vmatprep.subr.mxu0 %v3513
  %v3515 = vand.u32 %v3044, 4294901760
  %v3516 = vsub.f32 %v3044, %v3515
  %3517 = vmatpush1.msra.mxu0 %v3516
  %v3518 = vand.u32 %v3043, 4294901760
  %v3519 = vsub.f32 %v3043, %v3518
  %3520 = vmatprep.subr.mxu0 %v3519
  %v3521 = vand.u32 %v3042, 4294901760
  %v3522 = vsub.f32 %v3042, %v3521
  %3523 = vmatpush1.msra.mxu0 %v3522
  %3524 = vmatprep.subr.mxu0 0.0
  %3525 = vmatpush2.msra.mxu0 0.0
  %3526 = vmatprep.subr.mxu0 0.0
  %3527 = vmatpush2.msra.mxu0 0.0
  %3528 = vmatprep.subr.mxu0 0.0
  %3529 = vmatpush2.msra.mxu0 0.0
  %3530 = vmatprep.subr.mxu0 0.0
  %3531 = vmatpush2.msra.mxu0 0.0
  %3532 = vmatprep.subr.mxu0 0.0
  %3533 = vmatpush2.msra.mxu0 0.0
  %3534 = vmatprep.subr.mxu0 0.0
  %3535 = vmatpush2.msra.mxu0 0.0
  %3536 = vmatprep.subr.mxu0 0.0
  %3537 = vmatpush2.msra.mxu0 0.0
  %3538 = vmatprep.subr.mxu0 0.0
  %3539 = vmatpush2.msra.mxu0 0.0
  %3540 = vmatprep.subr.mxu0 0.0
  %3541 = vmatpush2.msra.mxu0 0.0
  %3542 = vmatprep.subr.mxu0 0.0
  %3543 = vmatpush2.msra.mxu0 0.0
  %3544 = vmatprep.subr.mxu0 0.0
  %3545 = vmatpush2.msra.mxu0 0.0
  %3546 = vmatprep.subr.mxu0 0.0
  %3547 = vmatpush2.msra.mxu0 0.0
  %3548 = vmatprep.subr.mxu0 0.0
  %3549 = vmatpush2.msra.mxu0 0.0
  %3550 = vmatprep.subr.mxu0 0.0
  %3551 = vmatpush2.msra.mxu0 0.0
  %3552 = vmatprep.subr.mxu0 0.0
  %3553 = vmatpush2.msra.mxu0 0.0
  %3554 = vmatprep.subr.mxu0 0.0
  %3555 = vmatpush2.msra.mxu0 0.0
  %3556 = vmatprep.mubr.f32.mxu0 0.0
  %v3557 = vand.u32 %v1961, 4294901760
  %v3558 = vsub.f32 %v1961, %v3557
  %3559 = vmatmul.mubr.f32.gmra.mxu0 %v3558
  %v3560 = vpop.f32.mrf.mxu0
  %v3561 = vadd.f32 %v3399, %v3560
  %v3562 = vpop.f32.mrf.mxu0
  %v3563 = vadd.f32 %v3401, %v3562
  %3564 = vmatprep.mubr.f32.mxu0 0.0
  %v3565 = vand.u32 %v1964, 4294901760
  %v3566 = vsub.f32 %v1964, %v3565
  %3567 = vmatmul.mubr.f32.gmra.mxu0 %v3566
  %v3568 = vpop.f32.mrf.mxu0
  %v3569 = vadd.f32 %v3406, %v3568
  %v3570 = vpop.f32.mrf.mxu0
  %v3571 = vadd.f32 %v3408, %v3570
  %3572 = vmatprep.mubr.f32.mxu0 0.0
  %v3573 = vand.u32 %v1967, 4294901760
  %v3574 = vsub.f32 %v1967, %v3573
  %3575 = vmatmul.mubr.f32.gmra.mxu0 %v3574
  %v3576 = vpop.f32.mrf.mxu0
  %v3577 = vadd.f32 %v3413, %v3576
  %v3578 = vpop.f32.mrf.mxu0
  %v3579 = vadd.f32 %v3415, %v3578
  %3580 = vmatprep.mubr.f32.mxu0 0.0
  %v3581 = vand.u32 %v1970, 4294901760
  %v3582 = vsub.f32 %v1970, %v3581
  %3583 = vmatmul.mubr.f32.gmra.mxu0 %v3582
  %v3584 = vpop.f32.mrf.mxu0
  %v3585 = vadd.f32 %v3420, %v3584
  %v3586 = vpop.f32.mrf.mxu0
  %v3587 = vadd.f32 %v3422, %v3586
  %3588 = vmatprep.mubr.f32.mxu0 0.0
  %v3589 = vand.u32 %v1973, 4294901760
  %v3590 = vsub.f32 %v1973, %v3589
  %3591 = vmatmul.mubr.f32.gmra.mxu0 %v3590
  %v3592 = vpop.f32.mrf.mxu0
  %v3593 = vadd.f32 %v3427, %v3592
  %v3594 = vpop.f32.mrf.mxu0
  %v3595 = vadd.f32 %v3429, %v3594
  %3596 = vmatprep.mubr.f32.mxu0 0.0
  %v3597 = vand.u32 %v1976, 4294901760
  %v3598 = vsub.f32 %v1976, %v3597
  %3599 = vmatmul.mubr.f32.gmra.mxu0 %v3598
  %v3600 = vpop.f32.mrf.mxu0
  %v3601 = vadd.f32 %v3434, %v3600
  %v3602 = vpop.f32.mrf.mxu0
  %v3603 = vadd.f32 %v3436, %v3602
  %3604 = vmatprep.mubr.f32.mxu0 0.0
  %v3605 = vand.u32 %v1979, 4294901760
  %v3606 = vsub.f32 %v1979, %v3605
  %3607 = vmatmul.mubr.f32.gmra.mxu0 %v3606
  %v3608 = vpop.f32.mrf.mxu0
  %v3609 = vadd.f32 %v3441, %v3608
  %v3610 = vpop.f32.mrf.mxu0
  %v3611 = vadd.f32 %v3443, %v3610
  %3612 = vmatprep.mubr.f32.mxu0 0.0
  %v3613 = vand.u32 %v1982, 4294901760
  %v3614 = vsub.f32 %v1982, %v3613
  %3615 = vmatmul.mubr.f32.gmra.mxu0 %v3614
  %v3616 = vpop.f32.mrf.mxu0
  %v3617 = vadd.f32 %v3448, %v3616
  %v3618 = vpop.f32.mrf.mxu0
  %v3619 = vadd.f32 %v3450, %v3618
  %3620 = vdwg.mxu0
  %3621 = vmatprep.subr.mxu0 0.0
  %3622 = vmatpush1.msra.mxu0 0.0
  %3623 = vmatprep.subr.mxu0 0.0
  %3624 = vmatpush1.msra.mxu0 0.0
  %3625 = vmatprep.subr.mxu0 0.0
  %3626 = vmatpush1.msra.mxu0 0.0
  %3627 = vmatprep.subr.mxu0 0.0
  %3628 = vmatpush1.msra.mxu0 0.0
  %3629 = vmatprep.subr.mxu0 0.0
  %3630 = vmatpush1.msra.mxu0 0.0
  %3631 = vmatprep.subr.mxu0 0.0
  %3632 = vmatpush1.msra.mxu0 0.0
  %v3633 = vand.u32 %v1901, 4294901760
  %3634 = vmatprep.subr.mxu0 %v3633
  %v3635 = vand.u32 %v1899, 4294901760
  %3636 = vmatpush1.msra.mxu0 %v3635
  %v3637 = vand.u32 %v1228, 4294901760
  %3638 = vmatprep.subr.mxu0 %v3637
  %v3639 = vand.u32 %v1226, 4294901760
  %3640 = vmatpush1.msra.mxu0 %v3639
  %v3641 = vand.u32 %v3057, 4294901760
  %3642 = vmatprep.subr.mxu0 %v3641
  %v3643 = vand.u32 %v3056, 4294901760
  %3644 = vmatpush1.msra.mxu0 %v3643
  %v3645 = vand.u32 %v3055, 4294901760
  %3646 = vmatprep.subr.mxu0 %v3645
  %v3647 = vand.u32 %v3054, 4294901760
  %3648 = vmatpush1.msra.mxu0 %v3647
  %v3649 = vand.u32 %v3053, 4294901760
  %3650 = vmatprep.subr.mxu0 %v3649
  %v3651 = vand.u32 %v3052, 4294901760
  %3652 = vmatpush1.msra.mxu0 %v3651
  %v3653 = vand.u32 %v3051, 4294901760
  %3654 = vmatprep.subr.mxu0 %v3653
  %v3655 = vand.u32 %v3050, 4294901760
  %3656 = vmatpush1.msra.mxu0 %v3655
  %v3657 = vand.u32 %v3049, 4294901760
  %3658 = vmatprep.subr.mxu0 %v3657
  %v3659 = vand.u32 %v3048, 4294901760
  %3660 = vmatpush1.msra.mxu0 %v3659
  %v3661 = vand.u32 %v3047, 4294901760
  %3662 = vmatprep.subr.mxu0 %v3661
  %v3663 = vand.u32 %v3046, 4294901760
  %3664 = vmatpush1.msra.mxu0 %v3663
  %v3665 = vand.u32 %v3045, 4294901760
  %3666 = vmatprep.subr.mxu0 %v3665
  %v3667 = vand.u32 %v3044, 4294901760
  %3668 = vmatpush1.msra.mxu0 %v3667
  %v3669 = vand.u32 %v3043, 4294901760
  %3670 = vmatprep.subr.mxu0 %v3669
  %v3671 = vand.u32 %v3042, 4294901760
  %3672 = vmatpush1.msra.mxu0 %v3671
  %3673 = vmatprep.subr.mxu0 0.0
  %3674 = vmatpush2.msra.mxu0 0.0
  %3675 = vmatprep.subr.mxu0 0.0
  %3676 = vmatpush2.msra.mxu0 0.0
  %3677 = vmatprep.subr.mxu0 0.0
  %3678 = vmatpush2.msra.mxu0 0.0
  %3679 = vmatprep.subr.mxu0 0.0
  %3680 = vmatpush2.msra.mxu0 0.0
  %3681 = vmatprep.subr.mxu0 0.0
  %3682 = vmatpush2.msra.mxu0 0.0
  %3683 = vmatprep.subr.mxu0 0.0
  %3684 = vmatpush2.msra.mxu0 0.0
  %3685 = vmatprep.subr.mxu0 0.0
  %3686 = vmatpush2.msra.mxu0 0.0
  %3687 = vmatprep.subr.mxu0 0.0
  %3688 = vmatpush2.msra.mxu0 0.0
  %3689 = vmatprep.subr.mxu0 0.0
  %3690 = vmatpush2.msra.mxu0 0.0
  %3691 = vmatprep.subr.mxu0 0.0
  %3692 = vmatpush2.msra.mxu0 0.0
  %3693 = vmatprep.subr.mxu0 0.0
  %3694 = vmatpush2.msra.mxu0 0.0
  %3695 = vmatprep.subr.mxu0 0.0
  %3696 = vmatpush2.msra.mxu0 0.0
  %3697 = vmatprep.subr.mxu0 0.0
  %3698 = vmatpush2.msra.mxu0 0.0
  %3699 = vmatprep.subr.mxu0 0.0
  %3700 = vmatpush2.msra.mxu0 0.0
  %3701 = vmatprep.subr.mxu0 0.0
  %3702 = vmatpush2.msra.mxu0 0.0
  %3703 = vmatprep.subr.mxu0 0.0
  %3704 = vmatpush2.msra.mxu0 0.0
  %3705 = vmatprep.mubr.f32.mxu0 0.0
  %v3706 = vand.u32 %v1961, 4294901760
  %v3707 = vsub.f32 %v1961, %v3706
  %v3708 = vand.u32 %v3707, 4294901760
  %3709 = vmatmul.mubr.f32.gmra.mxu0 %v3708
  %v3710 = vpop.f32.mrf.mxu0
  %v3711 = vadd.f32 %v3561, %v3710
  %v3712 = vpop.f32.mrf.mxu0
  %v3713 = vadd.f32 %v3563, %v3712
  %3714 = vmatprep.mubr.f32.mxu0 0.0
  %v3715 = vand.u32 %v1964, 4294901760
  %v3716 = vsub.f32 %v1964, %v3715
  %v3717 = vand.u32 %v3716, 4294901760
  %3718 = vmatmul.mubr.f32.gmra.mxu0 %v3717
  %v3719 = vpop.f32.mrf.mxu0
  %v3720 = vadd.f32 %v3569, %v3719
  %v3721 = vpop.f32.mrf.mxu0
  %v3722 = vadd.f32 %v3571, %v3721
  %3723 = vmatprep.mubr.f32.mxu0 0.0
  %v3724 = vand.u32 %v1967, 4294901760
  %v3725 = vsub.f32 %v1967, %v3724
  %v3726 = vand.u32 %v3725, 4294901760
  %3727 = vmatmul.mubr.f32.gmra.mxu0 %v3726
  %v3728 = vpop.f32.mrf.mxu0
  %v3729 = vadd.f32 %v3577, %v3728
  %v3730 = vpop.f32.mrf.mxu0
  %v3731 = vadd.f32 %v3579, %v3730
  %3732 = vmatprep.mubr.f32.mxu0 0.0
  %v3733 = vand.u32 %v1970, 4294901760
  %v3734 = vsub.f32 %v1970, %v3733
  %v3735 = vand.u32 %v3734, 4294901760
  %3736 = vmatmul.mubr.f32.gmra.mxu0 %v3735
  %v3737 = vpop.f32.mrf.mxu0
  %v3738 = vadd.f32 %v3585, %v3737
  %v3739 = vpop.f32.mrf.mxu0
  %v3740 = vadd.f32 %v3587, %v3739
  %3741 = vmatprep.mubr.f32.mxu0 0.0
  %v3742 = vand.u32 %v1973, 4294901760
  %v3743 = vsub.f32 %v1973, %v3742
  %v3744 = vand.u32 %v3743, 4294901760
  %3745 = vmatmul.mubr.f32.gmra.mxu0 %v3744
  %v3746 = vpop.f32.mrf.mxu0
  %v3747 = vadd.f32 %v3593, %v3746
  %v3748 = vpop.f32.mrf.mxu0
  %v3749 = vadd.f32 %v3595, %v3748
  %3750 = vmatprep.mubr.f32.mxu0 0.0
  %v3751 = vand.u32 %v1976, 4294901760
  %v3752 = vsub.f32 %v1976, %v3751
  %v3753 = vand.u32 %v3752, 4294901760
  %3754 = vmatmul.mubr.f32.gmra.mxu0 %v3753
  %v3755 = vpop.f32.mrf.mxu0
  %v3756 = vadd.f32 %v3601, %v3755
  %v3757 = vpop.f32.mrf.mxu0
  %v3758 = vadd.f32 %v3603, %v3757
  %3759 = vmatprep.mubr.f32.mxu0 0.0
  %v3760 = vand.u32 %v1979, 4294901760
  %v3761 = vsub.f32 %v1979, %v3760
  %v3762 = vand.u32 %v3761, 4294901760
  %3763 = vmatmul.mubr.f32.gmra.mxu0 %v3762
  %v3764 = vpop.f32.mrf.mxu0
  %v3765 = vadd.f32 %v3609, %v3764
  %v3766 = vpop.f32.mrf.mxu0
  %v3767 = vadd.f32 %v3611, %v3766
  %3768 = vmatprep.mubr.f32.mxu0 0.0
  %v3769 = vand.u32 %v1982, 4294901760
  %v3770 = vsub.f32 %v1982, %v3769
  %v3771 = vand.u32 %v3770, 4294901760
  %3772 = vmatmul.mubr.f32.gmra.mxu0 %v3771
  %v3773 = vpop.f32.mrf.mxu0
  %v3774 = vadd.f32 %v3617, %v3773
  %v3775 = vpop.f32.mrf.mxu0
  %v3776 = vadd.f32 %v3619, %v3775
  %3777 = vdwg.mxu0
  %3778 = vmatprep.subr.mxu0 0.0
  %3779 = vmatpush1.msra.mxu0 0.0
  %3780 = vmatprep.subr.mxu0 0.0
  %3781 = vmatpush1.msra.mxu0 0.0
  %3782 = vmatprep.subr.mxu0 0.0
  %3783 = vmatpush1.msra.mxu0 0.0
  %3784 = vmatprep.subr.mxu0 0.0
  %3785 = vmatpush1.msra.mxu0 0.0
  %3786 = vmatprep.subr.mxu0 0.0
  %3787 = vmatpush1.msra.mxu0 0.0
  %3788 = vmatprep.subr.mxu0 0.0
  %3789 = vmatpush1.msra.mxu0 0.0
  %v3790 = vand.u32 %v1901, 4294901760
  %v3791 = vsub.f32 %v1901, %v3790
  %v3792 = vand.u32 %v3791, 4294901760
  %3793 = vmatprep.subr.mxu0 %v3792
  %v3794 = vand.u32 %v1899, 4294901760
  %v3795 = vsub.f32 %v1899, %v3794
  %v3796 = vand.u32 %v3795, 4294901760
  %3797 = vmatpush1.msra.mxu0 %v3796
  %v3798 = vand.u32 %v1228, 4294901760
  %v3799 = vsub.f32 %v1228, %v3798
  %v3800 = vand.u32 %v3799, 4294901760
  %3801 = vmatprep.subr.mxu0 %v3800
  %v3802 = vand.u32 %v1226, 4294901760
  %v3803 = vsub.f32 %v1226, %v3802
  %v3804 = vand.u32 %v3803, 4294901760
  %3805 = vmatpush1.msra.mxu0 %v3804
  %v3806 = vand.u32 %v3057, 4294901760
  %v3807 = vsub.f32 %v3057, %v3806
  %v3808 = vand.u32 %v3807, 4294901760
  %3809 = vmatprep.subr.mxu0 %v3808
  %v3810 = vand.u32 %v3056, 4294901760
  %v3811 = vsub.f32 %v3056, %v3810
  %v3812 = vand.u32 %v3811, 4294901760
  %3813 = vmatpush1.msra.mxu0 %v3812
  %v3814 = vand.u32 %v3055, 4294901760
  %v3815 = vsub.f32 %v3055, %v3814
  %v3816 = vand.u32 %v3815, 4294901760
  %3817 = vmatprep.subr.mxu0 %v3816
  %v3818 = vand.u32 %v3054, 4294901760
  %v3819 = vsub.f32 %v3054, %v3818
  %v3820 = vand.u32 %v3819, 4294901760
  %3821 = vmatpush1.msra.mxu0 %v3820
  %v3822 = vand.u32 %v3053, 4294901760
  %v3823 = vsub.f32 %v3053, %v3822
  %v3824 = vand.u32 %v3823, 4294901760
  %3825 = vmatprep.subr.mxu0 %v3824
  %v3826 = vand.u32 %v3052, 4294901760
  %v3827 = vsub.f32 %v3052, %v3826
  %v3828 = vand.u32 %v3827, 4294901760
  %3829 = vmatpush1.msra.mxu0 %v3828
  %v3830 = vand.u32 %v3051, 4294901760
  %v3831 = vsub.f32 %v3051, %v3830
  %v3832 = vand.u32 %v3831, 4294901760
  %3833 = vmatprep.subr.mxu0 %v3832
  %v3834 = vand.u32 %v3050, 4294901760
  %v3835 = vsub.f32 %v3050, %v3834
  %v3836 = vand.u32 %v3835, 4294901760
  %3837 = vmatpush1.msra.mxu0 %v3836
  %v3838 = vand.u32 %v3049, 4294901760
  %v3839 = vsub.f32 %v3049, %v3838
  %v3840 = vand.u32 %v3839, 4294901760
  %3841 = vmatprep.subr.mxu0 %v3840
  %v3842 = vand.u32 %v3048, 4294901760
  %v3843 = vsub.f32 %v3048, %v3842
  %v3844 = vand.u32 %v3843, 4294901760
  %3845 = vmatpush1.msra.mxu0 %v3844
  %v3846 = vand.u32 %v3047, 4294901760
  %v3847 = vsub.f32 %v3047, %v3846
  %v3848 = vand.u32 %v3847, 4294901760
  %3849 = vmatprep.subr.mxu0 %v3848
  %v3850 = vand.u32 %v3046, 4294901760
  %v3851 = vsub.f32 %v3046, %v3850
  %v3852 = vand.u32 %v3851, 4294901760
  %3853 = vmatpush1.msra.mxu0 %v3852
  %v3854 = vand.u32 %v3045, 4294901760
  %v3855 = vsub.f32 %v3045, %v3854
  %v3856 = vand.u32 %v3855, 4294901760
  %3857 = vmatprep.subr.mxu0 %v3856
  %v3858 = vand.u32 %v3044, 4294901760
  %v3859 = vsub.f32 %v3044, %v3858
  %v3860 = vand.u32 %v3859, 4294901760
  %3861 = vmatpush1.msra.mxu0 %v3860
  %v3862 = vand.u32 %v3043, 4294901760
  %v3863 = vsub.f32 %v3043, %v3862
  %v3864 = vand.u32 %v3863, 4294901760
  %3865 = vmatprep.subr.mxu0 %v3864
  %v3866 = vand.u32 %v3042, 4294901760
  %v3867 = vsub.f32 %v3042, %v3866
  %v3868 = vand.u32 %v3867, 4294901760
  %3869 = vmatpush1.msra.mxu0 %v3868
  %3870 = vmatprep.subr.mxu0 0.0
  %3871 = vmatpush2.msra.mxu0 0.0
  %3872 = vmatprep.subr.mxu0 0.0
  %3873 = vmatpush2.msra.mxu0 0.0
  %3874 = vmatprep.subr.mxu0 0.0
  %3875 = vmatpush2.msra.mxu0 0.0
  %3876 = vmatprep.subr.mxu0 0.0
  %3877 = vmatpush2.msra.mxu0 0.0
  %3878 = vmatprep.subr.mxu0 0.0
  %3879 = vmatpush2.msra.mxu0 0.0
  %3880 = vmatprep.subr.mxu0 0.0
  %3881 = vmatpush2.msra.mxu0 0.0
  %3882 = vmatprep.subr.mxu0 0.0
  %3883 = vmatpush2.msra.mxu0 0.0
  %3884 = vmatprep.subr.mxu0 0.0
  %3885 = vmatpush2.msra.mxu0 0.0
  %3886 = vmatprep.subr.mxu0 0.0
  %3887 = vmatpush2.msra.mxu0 0.0
  %3888 = vmatprep.subr.mxu0 0.0
  %3889 = vmatpush2.msra.mxu0 0.0
  %3890 = vmatprep.subr.mxu0 0.0
  %3891 = vmatpush2.msra.mxu0 0.0
  %3892 = vmatprep.subr.mxu0 0.0
  %3893 = vmatpush2.msra.mxu0 0.0
  %3894 = vmatprep.subr.mxu0 0.0
  %3895 = vmatpush2.msra.mxu0 0.0
  %3896 = vmatprep.subr.mxu0 0.0
  %3897 = vmatpush2.msra.mxu0 0.0
  %3898 = vmatprep.subr.mxu0 0.0
  %3899 = vmatpush2.msra.mxu0 0.0
  %3900 = vmatprep.subr.mxu0 0.0
  %3901 = vmatpush2.msra.mxu0 0.0
  %3902 = vmatprep.mubr.f32.mxu0 0.0
  %v3903 = vand.u32 %v1961, 4294901760
  %3904 = vmatmul.mubr.f32.gmra.mxu0 %v3903
  %v3905 = vpop.f32.mrf.mxu0
  %v3906 = vadd.f32 %v3711, %v3905
  %v3907 = vpop.f32.mrf.mxu0
  %v3908 = vadd.f32 %v3713, %v3907
  %3909 = vmatprep.mubr.f32.mxu0 0.0
  %v3910 = vand.u32 %v1964, 4294901760
  %3911 = vmatmul.mubr.f32.gmra.mxu0 %v3910
  %v3912 = vpop.f32.mrf.mxu0
  %v3913 = vadd.f32 %v3720, %v3912
  %v3914 = vpop.f32.mrf.mxu0
  %v3915 = vadd.f32 %v3722, %v3914
  %3916 = vmatprep.mubr.f32.mxu0 0.0
  %v3917 = vand.u32 %v1967, 4294901760
  %3918 = vmatmul.mubr.f32.gmra.mxu0 %v3917
  %v3919 = vpop.f32.mrf.mxu0
  %v3920 = vadd.f32 %v3729, %v3919
  %v3921 = vpop.f32.mrf.mxu0
  %v3922 = vadd.f32 %v3731, %v3921
  %3923 = vmatprep.mubr.f32.mxu0 0.0
  %v3924 = vand.u32 %v1970, 4294901760
  %3925 = vmatmul.mubr.f32.gmra.mxu0 %v3924
  %v3926 = vpop.f32.mrf.mxu0
  %v3927 = vadd.f32 %v3738, %v3926
  %v3928 = vpop.f32.mrf.mxu0
  %v3929 = vadd.f32 %v3740, %v3928
  %3930 = vmatprep.mubr.f32.mxu0 0.0
  %v3931 = vand.u32 %v1973, 4294901760
  %3932 = vmatmul.mubr.f32.gmra.mxu0 %v3931
  %v3933 = vpop.f32.mrf.mxu0
  %v3934 = vadd.f32 %v3747, %v3933
  %v3935 = vpop.f32.mrf.mxu0
  %v3936 = vadd.f32 %v3749, %v3935
  %3937 = vmatprep.mubr.f32.mxu0 0.0
  %v3938 = vand.u32 %v1976, 4294901760
  %3939 = vmatmul.mubr.f32.gmra.mxu0 %v3938
  %v3940 = vpop.f32.mrf.mxu0
  %v3941 = vadd.f32 %v3756, %v3940
  %v3942 = vpop.f32.mrf.mxu0
  %v3943 = vadd.f32 %v3758, %v3942
  %3944 = vmatprep.mubr.f32.mxu0 0.0
  %v3945 = vand.u32 %v1979, 4294901760
  %3946 = vmatmul.mubr.f32.gmra.mxu0 %v3945
  %v3947 = vpop.f32.mrf.mxu0
  %v3948 = vadd.f32 %v3765, %v3947
  %v3949 = vpop.f32.mrf.mxu0
  %v3950 = vadd.f32 %v3767, %v3949
  %3951 = vmatprep.mubr.f32.mxu0 0.0
  %v3952 = vand.u32 %v1982, 4294901760
  %3953 = vmatmul.mubr.f32.gmra.mxu0 %v3952
  %v3954 = vpop.f32.mrf.mxu0
  %v3955 = vadd.f32 %v3774, %v3954
  %v3956 = vpop.f32.mrf.mxu0
  %v3957 = vadd.f32 %v3776, %v3956
  %3958 = vdwg.mxu0
  %3959 = vmatprep.subr.mxu0 0.0
  %3960 = vmatpush1.msra.mxu0 0.0
  %3961 = vmatprep.subr.mxu0 0.0
  %3962 = vmatpush1.msra.mxu0 0.0
  %3963 = vmatprep.subr.mxu0 0.0
  %3964 = vmatpush1.msra.mxu0 0.0
  %3965 = vmatprep.subr.mxu0 0.0
  %3966 = vmatpush1.msra.mxu0 0.0
  %3967 = vmatprep.subr.mxu0 0.0
  %3968 = vmatpush1.msra.mxu0 0.0
  %3969 = vmatprep.subr.mxu0 0.0
  %3970 = vmatpush1.msra.mxu0 0.0
  %v3971 = vand.u32 %v1901, 4294901760
  %3972 = vmatprep.subr.mxu0 %v3971
  %v3973 = vand.u32 %v1899, 4294901760
  %3974 = vmatpush1.msra.mxu0 %v3973
  %v3975 = vand.u32 %v1228, 4294901760
  %3976 = vmatprep.subr.mxu0 %v3975
  %v3977 = vand.u32 %v1226, 4294901760
  %3978 = vmatpush1.msra.mxu0 %v3977
  %v3979 = vand.u32 %v3057, 4294901760
  %3980 = vmatprep.subr.mxu0 %v3979
  %v3981 = vand.u32 %v3056, 4294901760
  %3982 = vmatpush1.msra.mxu0 %v3981
  %v3983 = vand.u32 %v3055, 4294901760
  %3984 = vmatprep.subr.mxu0 %v3983
  %v3985 = vand.u32 %v3054, 4294901760
  %3986 = vmatpush1.msra.mxu0 %v3985
  %v3987 = vand.u32 %v3053, 4294901760
  %3988 = vmatprep.subr.mxu0 %v3987
  %v3989 = vand.u32 %v3052, 4294901760
  %3990 = vmatpush1.msra.mxu0 %v3989
  %v3991 = vand.u32 %v3051, 4294901760
  %3992 = vmatprep.subr.mxu0 %v3991
  %v3993 = vand.u32 %v3050, 4294901760
  %3994 = vmatpush1.msra.mxu0 %v3993
  %v3995 = vand.u32 %v3049, 4294901760
  %3996 = vmatprep.subr.mxu0 %v3995
  %v3997 = vand.u32 %v3048, 4294901760
  %3998 = vmatpush1.msra.mxu0 %v3997
  %v3999 = vand.u32 %v3047, 4294901760
  %4000 = vmatprep.subr.mxu0 %v3999
  %v4001 = vand.u32 %v3046, 4294901760
  %4002 = vmatpush1.msra.mxu0 %v4001
  %v4003 = vand.u32 %v3045, 4294901760
  %4004 = vmatprep.subr.mxu0 %v4003
  %v4005 = vand.u32 %v3044, 4294901760
  %4006 = vmatpush1.msra.mxu0 %v4005
  %v4007 = vand.u32 %v3043, 4294901760
  %4008 = vmatprep.subr.mxu0 %v4007
  %v4009 = vand.u32 %v3042, 4294901760
  %4010 = vmatpush1.msra.mxu0 %v4009
  %4011 = vmatprep.subr.mxu0 0.0
  %4012 = vmatpush2.msra.mxu0 0.0
  %4013 = vmatprep.subr.mxu0 0.0
  %4014 = vmatpush2.msra.mxu0 0.0
  %4015 = vmatprep.subr.mxu0 0.0
  %4016 = vmatpush2.msra.mxu0 0.0
  %4017 = vmatprep.subr.mxu0 0.0
  %4018 = vmatpush2.msra.mxu0 0.0
  %4019 = vmatprep.subr.mxu0 0.0
  %4020 = vmatpush2.msra.mxu0 0.0
  %4021 = vmatprep.subr.mxu0 0.0
  %4022 = vmatpush2.msra.mxu0 0.0
  %4023 = vmatprep.subr.mxu0 0.0
  %4024 = vmatpush2.msra.mxu0 0.0
  %4025 = vmatprep.subr.mxu0 0.0
  %4026 = vmatpush2.msra.mxu0 0.0
  %4027 = vmatprep.subr.mxu0 0.0
  %4028 = vmatpush2.msra.mxu0 0.0
  %4029 = vmatprep.subr.mxu0 0.0
  %4030 = vmatpush2.msra.mxu0 0.0
  %4031 = vmatprep.subr.mxu0 0.0
  %4032 = vmatpush2.msra.mxu0 0.0
  %4033 = vmatprep.subr.mxu0 0.0
  %4034 = vmatpush2.msra.mxu0 0.0
  %4035 = vmatprep.subr.mxu0 0.0
  %4036 = vmatpush2.msra.mxu0 0.0
  %4037 = vmatprep.subr.mxu0 0.0
  %4038 = vmatpush2.msra.mxu0 0.0
  %4039 = vmatprep.subr.mxu0 0.0
  %4040 = vmatpush2.msra.mxu0 0.0
  %4041 = vmatprep.subr.mxu0 0.0
  %4042 = vmatpush2.msra.mxu0 0.0
  %4043 = vmatprep.mubr.f32.mxu0 0.0
  %v4044 = vand.u32 %v1961, 4294901760
  %4045 = vmatmul.mubr.f32.gmra.mxu0 %v4044
  %v4046 = vpop.f32.mrf.mxu0
  %v4047 = vadd.f32 %v3906, %v4046
  %v4048 = vpop.f32.mrf.mxu0
  %v4049 = vadd.f32 %v3908, %v4048
  %4050 = vmatprep.mubr.f32.mxu0 0.0
  %v4051 = vand.u32 %v1964, 4294901760
  %4052 = vmatmul.mubr.f32.gmra.mxu0 %v4051
  %v4053 = vpop.f32.mrf.mxu0
  %v4054 = vadd.f32 %v3913, %v4053
  %v4055 = vpop.f32.mrf.mxu0
  %v4056 = vadd.f32 %v3915, %v4055
  %4057 = vmatprep.mubr.f32.mxu0 0.0
  %v4058 = vand.u32 %v1967, 4294901760
  %4059 = vmatmul.mubr.f32.gmra.mxu0 %v4058
  %v4060 = vpop.f32.mrf.mxu0
  %v4061 = vadd.f32 %v3920, %v4060
  %v4062 = vpop.f32.mrf.mxu0
  %v4063 = vadd.f32 %v3922, %v4062
  %4064 = vmatprep.mubr.f32.mxu0 0.0
  %v4065 = vand.u32 %v1970, 4294901760
  %4066 = vmatmul.mubr.f32.gmra.mxu0 %v4065
  %v4067 = vpop.f32.mrf.mxu0
  %v4068 = vadd.f32 %v3927, %v4067
  %v4069 = vpop.f32.mrf.mxu0
  %v4070 = vadd.f32 %v3929, %v4069
  %4071 = vmatprep.mubr.f32.mxu0 0.0
  %v4072 = vand.u32 %v1973, 4294901760
  %4073 = vmatmul.mubr.f32.gmra.mxu0 %v4072
  %v4074 = vpop.f32.mrf.mxu0
  %v4075 = vadd.f32 %v3934, %v4074
  %v4076 = vpop.f32.mrf.mxu0
  %v4077 = vadd.f32 %v3936, %v4076
  %4078 = vmatprep.mubr.f32.mxu0 0.0
  %v4079 = vand.u32 %v1976, 4294901760
  %4080 = vmatmul.mubr.f32.gmra.mxu0 %v4079
  %v4081 = vpop.f32.mrf.mxu0
  %v4082 = vadd.f32 %v3941, %v4081
  %v4083 = vpop.f32.mrf.mxu0
  %v4084 = vadd.f32 %v3943, %v4083
  %4085 = vmatprep.mubr.f32.mxu0 0.0
  %v4086 = vand.u32 %v1979, 4294901760
  %4087 = vmatmul.mubr.f32.gmra.mxu0 %v4086
  %v4088 = vpop.f32.mrf.mxu0
  %v4089 = vadd.f32 %v3948, %v4088
  %v4090 = vpop.f32.mrf.mxu0
  %v4091 = vadd.f32 %v3950, %v4090
  %4092 = vmatprep.mubr.f32.mxu0 0.0
  %v4093 = vand.u32 %v1982, 4294901760
  %4094 = vmatmul.mubr.f32.gmra.mxu0 %v4093
  %v4095 = vpop.f32.mrf.mxu0
  %v4096 = vadd.f32 %v3955, %v4095
  %v4097 = vpop.f32.mrf.mxu0
  %v4098 = vadd.f32 %v3957, %v4097
  %4099 = vdwg.mxu0
  %4100 = vst [vmem:[%s140] sm:$0xff] %v4047
  %4101 = vst [vmem:[%s140 + $0x8] sm:$0xff] %v4049
  %4102 = vst [vmem:[%s154] sm:$0xff] %v4054
  %4103 = vst [vmem:[%s154 + $0x8] sm:$0xff] %v4056
  %4104 = vst [vmem:[%s168] sm:$0xff] %v4061
  %4105 = vst [vmem:[%s168 + $0x8] sm:$0xff] %v4063
  %4106 = vst [vmem:[%s182] sm:$0xff] %v4068
  %4107 = vst [vmem:[%s182 + $0x8] sm:$0xff] %v4070
  %4108 = vst [vmem:[%s196] sm:$0xff] %v4075
  %4109 = vst [vmem:[%s196 + $0x8] sm:$0xff] %v4077
  %4110 = vst [vmem:[%s210] sm:$0xff] %v4082
  %4111 = vst [vmem:[%s210 + $0x8] sm:$0xff] %v4084
  %4112 = vst [vmem:[%s224] sm:$0xff] %v4089
  %4113 = vst [vmem:[%s224 + $0x8] sm:$0xff] %v4091
  %4114 = vst [vmem:[%s238] sm:$0xff] %v4096
  %4115 = vst [vmem:[%s238 + $0x8] sm:$0xff] %v4098
  // Predicated region
  $region26: #{ss_forward.1} parent=0 // pred_check
    _
  $region27: #{ss_forward.1} parent=0 // pred_check_branch
    %4117 = sbr.rel (0) target = $region29
  $region28: #{ss_forward.1} parent=0 // pred_region
    _
  $region29: #{ss_forward.1} parent=0 // pred_fallthru
    _
  // Predicated region
  $region30: #{ss_forward.1} parent=0 // pred_check
    _
  $region31: #{ss_forward.1} parent=0 // pred_check_branch
    %4119 = sbr.rel (0) target = $region33
  $region32: #{ss_forward.1} parent=0 // pred_region
    _
  $region33: #{ss_forward.1} parent=0 // pred_fallthru
    _

</llo_original>
